<compile_context>
chip_gen: v7x
topology: tpu7x:2x2x1
jax: 0.10.0
libtpu: 0.0.40
codegen_flags: <defaults>
</compile_context>

<pallas_src>
import math

import jax
import jax.numpy as jnp
from jax.experimental import pallas as pl
from jax.experimental.pallas import tpu as pltpu

_LRELU_SLOPE = 0.2
_FLRELU_SCALE = 2.0 ** 0.5          # FusedLeakyReLU output gain
_INV_SQRT2 = 1.0 / (2.0 ** 0.5)     # residual merge scale


def _round_up(v, m):
    return (v + m - 1) // m * m


def _shift_flat(v, k):
    """result[q, :] = v[q + k, :] (zeros past the end); k is a small static int."""
    if k == 0:
        return v
    n, c = v.shape
    return jnp.concatenate([v[k:, :], jnp.zeros((k, c), v.dtype)], axis=0)


def _make_conv_kernel(skip_mode):
    """Fused EqualConv2d(3x3, pad=1) + FusedLeakyReLU (+ optional fused residual path).

    skip_mode: None       -> out = lrelu(conv(x)+b) * sqrt(2)
               'conv'     -> out = (lrelu(conv(x)+b)*sqrt(2) + x_skip @ Wskip) / sqrt(2)
               'identity' -> out = (lrelu(conv(x)+b)*sqrt(2) + x_skip) / sqrt(2)
    """

    def kernel(xbody_ref, xtop_ref, xbot_ref, w_ref, b_ref, *rest):
        if skip_mode == "conv":
            xskip_ref, ws_ref, out_ref, xpad_ref = rest
        elif skip_mode == "identity":
            xskip_ref, out_ref, xpad_ref = rest
            ws_ref = None
        else:
            out_ref, xpad_ref = rest
            xskip_ref = ws_ref = None

        i = pl.program_id(1)
        n_tiles = pl.num_programs(1)
        tile_h, w_out, cout = out_ref.shape[1], out_ref.shape[2], out_ref.shape[3]
        wp, cin = xpad_ref.shape[1], xpad_ref.shape[2]
        dt = xpad_ref.dtype

        # ---- assemble the zero-padded input row-slab in VMEM (in-kernel padding;
        #      no wrapper-side jnp.pad HBM pass).  Halo rows arrive as clamped 1-row
        #      blocks and are overwritten with zeros at the image borders. -----------
        xpad_ref[1:1 + tile_h, 1:1 + w_out, :] = xbody_ref[0]
        xpad_ref[0:1, 1:1 + w_out, :] = xtop_ref[0]            # row above the slab
        xpad_ref[1 + tile_h:2 + tile_h, 1:1 + w_out, :] = xbot_ref[0]   # row below
        # left pad column + right pad column(s) up to the 8-aligned scratch width
        xpad_ref[:, 0:1, :] = jnp.zeros((tile_h + 2, 1, cin), dt)
        xpad_ref[:, 1 + w_out:wp, :] = jnp.zeros((tile_h + 2, wp - w_out - 1, cin), dt)

        @pl.when(i == 0)                                       # top image border
        def _():
            xpad_ref[0:1, :, :] = jnp.zeros((1, wp, cin), dt)

        @pl.when(i == n_tiles - 1)                             # bottom image border
        def _():
            xpad_ref[1 + tile_h:2 + tile_h, :, :] = jnp.zeros((1, wp, cin), dt)

        # ---- 3x3 conv as 9 MXU matmuls on padded-width row bands -------------------
        # out_wide[r*wp + j, co] = sum_{dy,dx} xpad[r+dy, j+dx, :] @ W[dy,dx];
        # band(dy) is a cheap leading-dim slice, the dx shift is applied once to the
        # already-reduced per-dx partials (no strided per-tap input copies).
        nflat = tile_h * wp
        parts = [None, None, None]
        for dy in range(3):
            band = xpad_ref[dy:dy + tile_h, :, :].reshape(nflat, cin)
            for dx in range(3):
                contrib = jnp.dot(band, w_ref[3 * dy + dx],
                                  preferred_element_type=jnp.float32)
                parts[dx] = contrib if parts[dx] is None else parts[dx] + contrib
        acc = parts[0] + _shift_flat(parts[1], 1) + _shift_flat(parts[2], 2)

        # ---- FusedLeakyReLU: bias + leaky_relu(0.2) + sqrt(2) gain (f32) ------------
        acc = acc + b_ref[...].astype(jnp.float32)
        acc = jnp.where(acc >= 0.0, acc, _LRELU_SLOPE * acc) * _FLRELU_SCALE
        y = acc.reshape(tile_h, wp, cout)[:, :w_out, :]        # drop pad/garbage cols

        # ---- fused residual path (rides the already-busy MXU / VPU) -----------------
        if skip_mode == "conv":
            xs = xskip_ref[0].reshape(tile_h * w_out, xskip_ref.shape[3])
            sk = jnp.dot(xs, ws_ref[...], preferred_element_type=jnp.float32)
            y = (y + sk.reshape(tile_h, w_out, cout)) * _INV_SQRT2
        elif skip_mode == "identity":
            y = (y + xskip_ref[0].astype(jnp.float32)) * _INV_SQRT2

        out_ref[0] = y.astype(out_ref.dtype)

    return kernel


def _conv3x3_lrelu(x, w9, bias, *, tile_h, out_dtype, x_skip=None, ws=None,
                   identity_skip=False):
    """x: (B,H,W,Cin) channels-last; w9: (9,Cin,Cout) scale-folded; bias: (1,Cout) f32.
    Optional fused skip: x_skip (B,H,W,Cs) with 1x1 weight ws (Cs,Cout) or identity."""
    bsz, h, w, cin = x.shape
    cout = w9.shape[-1]
    assert h % tile_h == 0, "H must be divisible by tile_h"  # TODO(synk): ragged tiles
    n_tiles = h // tile_h
    wp = _round_up(w + 2, 8)          # 8-aligned padded width -> free flat reshapes

    if ws is not None:
        skip_mode = "conv"
    elif identity_skip:
        skip_mode = "identity"
    else:
        skip_mode = None

    inputs = [x, x, x, w9, bias]
    in_specs = [
        # body rows of the slab (auto-pipelined, lane-dense channels-last)
        pl.BlockSpec((1, tile_h, w, cin), lambda bi, ti: (bi, ti, 0, 0)),
        # 1-row top / bottom halos, clamped at the image border (zeroed in-kernel)
        pl.BlockSpec((1, 1, w, cin),
                     lambda bi, ti: (bi, jnp.maximum(ti * tile_h - 1, 0), 0, 0)),
        pl.BlockSpec((1, 1, w, cin),
                     lambda bi, ti: (bi, jnp.minimum((ti + 1) * tile_h, h - 1), 0, 0)),
        # weights + bias stay VMEM-resident across the whole grid
        pl.BlockSpec((9, cin, cout), lambda bi, ti: (0, 0, 0)),
        pl.BlockSpec((1, cout), lambda bi, ti: (0, 0)),
    ]
    if skip_mode is not None:
        inputs.append(x_skip)
        in_specs.append(
            pl.BlockSpec((1, tile_h, w, x_skip.shape[-1]),
                         lambda bi, ti: (bi, ti, 0, 0)))
    if skip_mode == "conv":
        inputs.append(ws)
        in_specs.append(pl.BlockSpec(ws.shape, lambda bi, ti: (0, 0)))

    return pl.pallas_call(
        _make_conv_kernel(skip_mode),
        out_shape=jax.ShapeDtypeStruct((bsz, h, w, cout), out_dtype),
        grid_spec=pltpu.PrefetchScalarGridSpec(
            num_scalar_prefetch=0,
            grid=(bsz, n_tiles),
            in_specs=in_specs,
            out_specs=pl.BlockSpec((1, tile_h, w, cout),
                                   lambda bi, ti: (bi, ti, 0, 0)),
            scratch_shapes=[pltpu.VMEM((tile_h + 2, wp, cin), x.dtype)],
        ),
        compiler_params=pltpu.CompilerParams(
            dimension_semantics=("parallel", "parallel"),
            vmem_limit_bytes=48 * 1024 * 1024,
        ),
    )(*inputs)


def resblock_pallas(x_nchw, conv1_w, conv1_b, conv2_w, conv2_b, skip_w,
                    *, tile_h=None, compute_dtype=jnp.bfloat16):
    """ResBlock forward (downsample=False).

    x_nchw : (B, Cin, H, W)                       PyTorch NCHW input (f32)
    conv1_w: (Cout, Cin, 3, 3), conv1_b: (Cout,)  EqualConv2d weight + FusedLeakyReLU bias
    conv2_w: (Cout, Cout, 3, 3), conv2_b: (Cout,)
    skip_w : (Cout, Cin, 1, 1) or None            1x1 skip (None => identity, Cin==Cout)
    Returns (B, Cout, H, W) float32.
    """
    bsz, cin, h, w = x_nchw.shape
    cout = conv1_w.shape[0]
    if tile_h is None:
        tile_h = next((t for t in (32, 16, 8, 4, 2, 1) if h % t == 0), 1)

    # EqualConv2d: fold the 1/sqrt(fan_in) equalized-lr scale into the weights once
    # (f32), reorient to matmul layout, then cast to the MXU compute dtype.
    w1 = (jnp.transpose(conv1_w, (2, 3, 1, 0)).astype(jnp.float32)
          * (1.0 / math.sqrt(cin * 9))).reshape(9, cin, cout).astype(compute_dtype)
    w2 = (jnp.transpose(conv2_w, (2, 3, 1, 0)).astype(jnp.float32)
          * (1.0 / math.sqrt(cout * 9))).reshape(9, cout, cout).astype(compute_dtype)
    b1 = conv1_b.reshape(1, cout).astype(jnp.float32)
    b2 = conv2_b.reshape(1, cout).astype(jnp.float32)

    # channels-last so channels sit on the lane axis inside the kernels
    x = jnp.transpose(x_nchw, (0, 2, 3, 1)).astype(compute_dtype)

    # conv1 + FusedLeakyReLU
    y1 = _conv3x3_lrelu(x, w1, b1, tile_h=tile_h, out_dtype=compute_dtype)

    # conv2 + FusedLeakyReLU + (1x1 skip | identity) + residual merge, one kernel
    if skip_w is None:
        assert cin == cout, "identity skip requires Cin == Cout"
        out = _conv3x3_lrelu(y1, w2, b2, tile_h=tile_h, out_dtype=jnp.float32,
                             x_skip=x, identity_skip=True)
    else:
        ws = (jnp.transpose(skip_w[:, :, 0, 0]).astype(jnp.float32)
              * (1.0 / math.sqrt(cin))).astype(compute_dtype)
        out = _conv3x3_lrelu(y1, w2, b2, tile_h=tile_h, out_dtype=jnp.float32,
                             x_skip=x, ws=ws)

    return jnp.transpose(out, (0, 3, 1, 2))   # back to NCHW (f32)


def resblock_ref(x, conv1_w, conv1_b, conv2_w, conv2_b, skip_w):
    """Pure-JAX/XLA reference mirroring the PyTorch module semantics (NCHW, f32)."""
    def equal_conv(v, wt, pad):
        fan_in = wt.shape[1] * wt.shape[2] * wt.shape[3]
        return jax.lax.conv_general_dilated(
            v, wt * (1.0 / math.sqrt(fan_in)),
            window_strides=(1, 1), padding=[(pad, pad), (pad, pad)],
            dimension_numbers=("NCHW", "OIHW", "NCHW"),
            precision=jax.lax.Precision.HIGHEST)

    def fused_lrelu(v, bias):
        v = v + bias[None, :, None, None]
        return jnp.where(v >= 0.0, v, _LRELU_SLOPE * v) * _FLRELU_SCALE

    out = fused_lrelu(equal_conv(x, conv1_w, 1), conv1_b)
    out = fused_lrelu(equal_conv(out, conv2_w, 1), conv2_b)
    skip = x if skip_w is None else equal_conv(x, skip_w, 0)
    return (out + skip) * _INV_SQRT2


if __name__ == "__main__":
    # Small shapes consistent with the module: in_channel=4 -> out_channel=8, 16x16
    # spatial, downsample=False.  tile_h=8 -> 2 row-slabs per image, exercising both
    # halo edges and an interior boundary.
    B, CIN, COUT, H, W = 2, 4, 8, 16, 16

    key = jax.random.PRNGKey(0)
    kx, k1, kb1, k2, kb2, ks = jax.random.split(key, 6)
    x = jax.random.normal(kx, (B, CIN, H, W), dtype=jnp.float32)
    conv1_w = jax.random.normal(k1, (COUT, CIN, 3, 3), dtype=jnp.float32)
    conv1_b = 0.1 * jax.random.normal(kb1, (COUT,), dtype=jnp.float32)
    conv2_w = jax.random.normal(k2, (COUT, COUT, 3, 3), dtype=jnp.float32)
    conv2_b = 0.1 * jax.random.normal(kb2, (COUT,), dtype=jnp.float32)
    skip_w = jax.random.normal(ks, (COUT, CIN, 1, 1), dtype=jnp.float32)

    ref = resblock_ref(x, conv1_w, conv1_b, conv2_w, conv2_b, skip_w)

    # f32 path (tight check against the XLA reference)
    out = resblock_pallas(x, conv1_w, conv1_b, conv2_w, conv2_b, skip_w,
                          tile_h=8, compute_dtype=jnp.float32)
    jax.block_until_ready(out)
    assert out.shape == ref.shape == (B, COUT, H, W)
    err = float(jnp.max(jnp.abs(out - ref)))
    assert err < 5e-3, f"f32 max abs err = {err}"

    # bf16 path (MXU-rate dtype on v6e/v7x); looser tolerance vs the f32 reference
    out_bf16 = resblock_pallas(x, conv1_w, conv1_b, conv2_w, conv2_b, skip_w,
                               tile_h=8, compute_dtype=jnp.bfloat16)
    jax.block_until_ready(out_bf16)
    err_bf16 = float(jnp.max(jnp.abs(out_bf16 - ref)))
    assert err_bf16 < 1e-1, f"bf16 max abs err = {err_bf16}"

    # identity-skip variant (in_channel == out_channel -> skip is a fused add)
    x_id = jax.random.normal(kx, (B, COUT, H, W), dtype=jnp.float32)
    convA_w = jax.random.normal(k1, (COUT, COUT, 3, 3), dtype=jnp.float32)
    ref_id = resblock_ref(x_id, convA_w, conv1_b, conv2_w, conv2_b, None)
    out_id = resblock_pallas(x_id, convA_w, conv1_b, conv2_w, conv2_b, None,
                             tile_h=8, compute_dtype=jnp.float32)
    jax.block_until_ready(out_id)
    err_id = float(jnp.max(jnp.abs(out_id - ref_id)))
    assert err_id < 5e-3, f"identity-skip max abs err = {err_id}"

    print("KERNEL_OK")
</pallas_src>

<mosaic_0001>
module attributes {stable_mosaic.version = 11 : i64} {
  func.func @kernel(%arg0: i32, %arg1: i32, %arg2: memref<1x8x16x4xf32, #tpu.memory_space<vmem>>, %arg3: memref<1x1x16x4xf32, #tpu.memory_space<vmem>>, %arg4: memref<1x1x16x4xf32, #tpu.memory_space<vmem>>, %arg5: memref<9x4x8xf32, #tpu.memory_space<vmem>>, %arg6: memref<1x8xf32, #tpu.memory_space<vmem>>, %arg7: memref<1x8x16x8xf32, #tpu.memory_space<vmem>>, %arg8: memref<10x24x4xf32, #tpu.memory_space<vmem>>) attributes {dimension_semantics = [#tpu.dimension_semantics<parallel>, #tpu.dimension_semantics<parallel>], iteration_bounds = array<i64: 2, 2>, scalar_prefetch = 0 : i64, scratch_operands = 1 : i64, tpu.core_type = #tpu.core_type<tc>, window_params = [{transform_indices = @transform_0, window_bounds = array<i64: 1, 8, 16, 4>}, {transform_indices = @transform_1, window_bounds = array<i64: 1, 1, 16, 4>}, {transform_indices = @transform_2, window_bounds = array<i64: 1, 1, 16, 4>}, {pipeline_mode = #tpu.pipeline_mode<synchronous>, transform_indices = @transform_3, window_bounds = array<i64: 9, 4, 8>}, {pipeline_mode = #tpu.pipeline_mode<synchronous>, transform_indices = @transform_4, window_bounds = array<i64: 1, 8>}, {transform_indices = @transform_5, window_bounds = array<i64: 1, 8, 16, 8>}]} {
    %c0 = arith.constant 0 : index
    %c0_0 = arith.constant 0 : index
    %c0_1 = arith.constant 0 : index
    %c0_2 = arith.constant 0 : index
    %0 = vector.load %arg2[%c0, %c0_0, %c0_1, %c0_2] : memref<1x8x16x4xf32, #tpu.memory_space<vmem>>, vector<1x8x16x4xf32>
    %1 = vector.shape_cast %0 : vector<1x8x16x4xf32> to vector<8x16x4xf32>
    %c1 = arith.constant 1 : index
    %c1_3 = arith.constant 1 : index
    %c0_4 = arith.constant 0 : index
    %2 = vector.load %arg8[%c1, %c1_3, %c0_4] : memref<10x24x4xf32, #tpu.memory_space<vmem>>, vector<8x16x4xf32>
    tpu.vector_store %arg8[%c1, %c1_3, %c0_4], %1 {strides = array<i32>} : memref<10x24x4xf32, #tpu.memory_space<vmem>>, vector<8x16x4xf32>,
    %c0_5 = arith.constant 0 : index
    %c0_6 = arith.constant 0 : index
    %c0_7 = arith.constant 0 : index
    %c0_8 = arith.constant 0 : index
    %3 = vector.load %arg3[%c0_5, %c0_6, %c0_7, %c0_8] : memref<1x1x16x4xf32, #tpu.memory_space<vmem>>, vector<1x1x16x4xf32>
    %4 = vector.shape_cast %3 : vector<1x1x16x4xf32> to vector<1x16x4xf32>
    %c0_9 = arith.constant 0 : index
    %c1_10 = arith.constant 1 : index
    %c0_11 = arith.constant 0 : index
    %5 = vector.load %arg8[%c0_9, %c1_10, %c0_11] : memref<10x24x4xf32, #tpu.memory_space<vmem>>, vector<1x16x4xf32>
    tpu.vector_store %arg8[%c0_9, %c1_10, %c0_11], %4 {strides = array<i32>} : memref<10x24x4xf32, #tpu.memory_space<vmem>>, vector<1x16x4xf32>,
    %c0_12 = arith.constant 0 : index
    %c0_13 = arith.constant 0 : index
    %c0_14 = arith.constant 0 : index
    %c0_15 = arith.constant 0 : index
    %6 = vector.load %arg4[%c0_12, %c0_13, %c0_14, %c0_15] : memref<1x1x16x4xf32, #tpu.memory_space<vmem>>, vector<1x1x16x4xf32>
    %7 = vector.shape_cast %6 : vector<1x1x16x4xf32> to vector<1x16x4xf32>
    %c9 = arith.constant 9 : index
    %c1_16 = arith.constant 1 : index
    %c0_17 = arith.constant 0 : index
    %8 = vector.load %arg8[%c9, %c1_16, %c0_17] : memref<10x24x4xf32, #tpu.memory_space<vmem>>, vector<1x16x4xf32>
    tpu.vector_store %arg8[%c9, %c1_16, %c0_17], %7 {strides = array<i32>} : memref<10x24x4xf32, #tpu.memory_space<vmem>>, vector<1x16x4xf32>,
    %cst = arith.constant 0.000000e+00 : f32
    %9 = vector.broadcast %cst : f32 to vector<10x1x4xf32>
    %c0_18 = arith.constant 0 : index
    %c0_19 = arith.constant 0 : index
    %c0_20 = arith.constant 0 : index
    %10 = vector.load %arg8[%c0_18, %c0_19, %c0_20] : memref<10x24x4xf32, #tpu.memory_space<vmem>>, vector<10x1x4xf32>
    tpu.vector_store %arg8[%c0_18, %c0_19, %c0_20], %9 {strides = array<i32>} : memref<10x24x4xf32, #tpu.memory_space<vmem>>, vector<10x1x4xf32>,
    %cst_21 = arith.constant 0.000000e+00 : f32
    %11 = vector.broadcast %cst_21 : f32 to vector<10x7x4xf32>
    %c0_22 = arith.constant 0 : index
    %c17 = arith.constant 17 : index
    %c0_23 = arith.constant 0 : index
    %12 = vector.load %arg8[%c0_22, %c17, %c0_23] : memref<10x24x4xf32, #tpu.memory_space<vmem>>, vector<10x7x4xf32>
    tpu.vector_store %arg8[%c0_22, %c17, %c0_23], %11 {strides = array<i32>} : memref<10x24x4xf32, #tpu.memory_space<vmem>>, vector<10x7x4xf32>,
    %c0_i32 = arith.constant 0 : i32
    %13 = arith.cmpi eq, %arg1, %c0_i32 : i32
    %14 = arith.extui %13 : i1 to i32
    %c0_i32_24 = arith.constant 0 : i32
    %15 = arith.cmpi ne, %14, %c0_i32_24 : i32
    scf.if %15 {
      %cst_75 = arith.constant 0.000000e+00 : f32
      %81 = vector.broadcast %cst_75 : f32 to vector<1x24x4xf32>
      %c0_76 = arith.constant 0 : index
      %c0_77 = arith.constant 0 : index
      %c0_78 = arith.constant 0 : index
      %82 = vector.load %arg8[%c0_76, %c0_77, %c0_78] : memref<10x24x4xf32, #tpu.memory_space<vmem>>, vector<1x24x4xf32>
      tpu.vector_store %arg8[%c0_76, %c0_77, %c0_78], %81 {strides = array<i32>} : memref<10x24x4xf32, #tpu.memory_space<vmem>>, vector<1x24x4xf32>,
    } else {
    }
    %c1_i32 = arith.constant 1 : i32
    %16 = arith.cmpi eq, %arg1, %c1_i32 : i32
    %17 = arith.extui %16 : i1 to i32
    %c0_i32_25 = arith.constant 0 : i32
    %18 = arith.cmpi ne, %17, %c0_i32_25 : i32
    scf.if %18 {
      %cst_75 = arith.constant 0.000000e+00 : f32
      %81 = vector.broadcast %cst_75 : f32 to vector<1x24x4xf32>
      %c9_76 = arith.constant 9 : index
      %c0_77 = arith.constant 0 : index
      %c0_78 = arith.constant 0 : index
      %82 = vector.load %arg8[%c9_76, %c0_77, %c0_78] : memref<10x24x4xf32, #tpu.memory_space<vmem>>, vector<1x24x4xf32>
      tpu.vector_store %arg8[%c9_76, %c0_77, %c0_78], %81 {strides = array<i32>} : memref<10x24x4xf32, #tpu.memory_space<vmem>>, vector<1x24x4xf32>,
    } else {
    }
    %c0_26 = arith.constant 0 : index
    %c0_27 = arith.constant 0 : index
    %c0_28 = arith.constant 0 : index
    %19 = vector.load %arg8[%c0_26, %c0_27, %c0_28] : memref<10x24x4xf32, #tpu.memory_space<vmem>>, vector<8x24x4xf32>
    %20 = vector.shape_cast %19 : vector<8x24x4xf32> to vector<192x4xf32>
    %c0_29 = arith.constant 0 : index
    %c0_30 = arith.constant 0 : index
    %c0_31 = arith.constant 0 : index
    %21 = vector.load %arg5[%c0_29, %c0_30, %c0_31] : memref<9x4x8xf32, #tpu.memory_space<vmem>>, vector<1x4x8xf32>
    %22 = vector.shape_cast %21 : vector<1x4x8xf32> to vector<4x8xf32>
    %cst_32 = arith.constant dense<0.000000e+00> : vector<192x8xf32>
    %23 = tpu.matmul %20, %22, %cst_32 {dimension_numbers = #tpu.dot_dimension_numbers<[1], [0], [0], [1], [0, 0, 1, 1], [], []>} : vector<192x4xf32>, vector<4x8xf32>, vector<192x8xf32> -> vector<192x8xf32>
    %c1_33 = arith.constant 1 : index
    %c0_34 = arith.constant 0 : index
    %c0_35 = arith.constant 0 : index
    %24 = vector.load %arg5[%c1_33, %c0_34, %c0_35] : memref<9x4x8xf32, #tpu.memory_space<vmem>>, vector<1x4x8xf32>
    %25 = vector.shape_cast %24 : vector<1x4x8xf32> to vector<4x8xf32>
    %cst_36 = arith.constant dense<0.000000e+00> : vector<192x8xf32>
    %26 = tpu.matmul %20, %25, %cst_36 {dimension_numbers = #tpu.dot_dimension_numbers<[1], [0], [0], [1], [0, 0, 1, 1], [], []>} : vector<192x4xf32>, vector<4x8xf32>, vector<192x8xf32> -> vector<192x8xf32>
    %c2 = arith.constant 2 : index
    %c0_37 = arith.constant 0 : index
    %c0_38 = arith.constant 0 : index
    %27 = vector.load %arg5[%c2, %c0_37, %c0_38] : memref<9x4x8xf32, #tpu.memory_space<vmem>>, vector<1x4x8xf32>
    %28 = vector.shape_cast %27 : vector<1x4x8xf32> to vector<4x8xf32>
    %cst_39 = arith.constant dense<0.000000e+00> : vector<192x8xf32>
    %29 = tpu.matmul %20, %28, %cst_39 {dimension_numbers = #tpu.dot_dimension_numbers<[1], [0], [0], [1], [0, 0, 1, 1], [], []>} : vector<192x4xf32>, vector<4x8xf32>, vector<192x8xf32> -> vector<192x8xf32>
    %c1_40 = arith.constant 1 : index
    %c0_41 = arith.constant 0 : index
    %c0_42 = arith.constant 0 : index
    %30 = vector.load %arg8[%c1_40, %c0_41, %c0_42] : memref<10x24x4xf32, #tpu.memory_space<vmem>>, vector<8x24x4xf32>
    %31 = vector.shape_cast %30 : vector<8x24x4xf32> to vector<192x4xf32>
    %c3 = arith.constant 3 : index
    %c0_43 = arith.constant 0 : index
    %c0_44 = arith.constant 0 : index
    %32 = vector.load %arg5[%c3, %c0_43, %c0_44] : memref<9x4x8xf32, #tpu.memory_space<vmem>>, vector<1x4x8xf32>
    %33 = vector.shape_cast %32 : vector<1x4x8xf32> to vector<4x8xf32>
    %cst_45 = arith.constant dense<0.000000e+00> : vector<192x8xf32>
    %34 = tpu.matmul %31, %33, %cst_45 {dimension_numbers = #tpu.dot_dimension_numbers<[1], [0], [0], [1], [0, 0, 1, 1], [], []>} : vector<192x4xf32>, vector<4x8xf32>, vector<192x8xf32> -> vector<192x8xf32>
    %35 = arith.addf %23, %34 : vector<192x8xf32>
    %c4 = arith.constant 4 : index
    %c0_46 = arith.constant 0 : index
    %c0_47 = arith.constant 0 : index
    %36 = vector.load %arg5[%c4, %c0_46, %c0_47] : memref<9x4x8xf32, #tpu.memory_space<vmem>>, vector<1x4x8xf32>
    %37 = vector.shape_cast %36 : vector<1x4x8xf32> to vector<4x8xf32>
    %cst_48 = arith.constant dense<0.000000e+00> : vector<192x8xf32>
    %38 = tpu.matmul %31, %37, %cst_48 {dimension_numbers = #tpu.dot_dimension_numbers<[1], [0], [0], [1], [0, 0, 1, 1], [], []>} : vector<192x4xf32>, vector<4x8xf32>, vector<192x8xf32> -> vector<192x8xf32>
    %39 = arith.addf %26, %38 : vector<192x8xf32>
    %c5 = arith.constant 5 : index
    %c0_49 = arith.constant 0 : index
    %c0_50 = arith.constant 0 : index
    %40 = vector.load %arg5[%c5, %c0_49, %c0_50] : memref<9x4x8xf32, #tpu.memory_space<vmem>>, vector<1x4x8xf32>
    %41 = vector.shape_cast %40 : vector<1x4x8xf32> to vector<4x8xf32>
    %cst_51 = arith.constant dense<0.000000e+00> : vector<192x8xf32>
    %42 = tpu.matmul %31, %41, %cst_51 {dimension_numbers = #tpu.dot_dimension_numbers<[1], [0], [0], [1], [0, 0, 1, 1], [], []>} : vector<192x4xf32>, vector<4x8xf32>, vector<192x8xf32> -> vector<192x8xf32>
    %43 = arith.addf %29, %42 : vector<192x8xf32>
    %c2_52 = arith.constant 2 : index
    %c0_53 = arith.constant 0 : index
    %c0_54 = arith.constant 0 : index
    %44 = vector.load %arg8[%c2_52, %c0_53, %c0_54] : memref<10x24x4xf32, #tpu.memory_space<vmem>>, vector<8x24x4xf32>
    %45 = vector.shape_cast %44 : vector<8x24x4xf32> to vector<192x4xf32>
    %c6 = arith.constant 6 : index
    %c0_55 = arith.constant 0 : index
    %c0_56 = arith.constant 0 : index
    %46 = vector.load %arg5[%c6, %c0_55, %c0_56] : memref<9x4x8xf32, #tpu.memory_space<vmem>>, vector<1x4x8xf32>
    %47 = vector.shape_cast %46 : vector<1x4x8xf32> to vector<4x8xf32>
    %cst_57 = arith.constant dense<0.000000e+00> : vector<192x8xf32>
    %48 = tpu.matmul %45, %47, %cst_57 {dimension_numbers = #tpu.dot_dimension_numbers<[1], [0], [0], [1], [0, 0, 1, 1], [], []>} : vector<192x4xf32>, vector<4x8xf32>, vector<192x8xf32> -> vector<192x8xf32>
    %49 = arith.addf %35, %48 : vector<192x8xf32>
    %c7 = arith.constant 7 : index
    %c0_58 = arith.constant 0 : index
    %c0_59 = arith.constant 0 : index
    %50 = vector.load %arg5[%c7, %c0_58, %c0_59] : memref<9x4x8xf32, #tpu.memory_space<vmem>>, vector<1x4x8xf32>
    %51 = vector.shape_cast %50 : vector<1x4x8xf32> to vector<4x8xf32>
    %cst_60 = arith.constant dense<0.000000e+00> : vector<192x8xf32>
    %52 = tpu.matmul %45, %51, %cst_60 {dimension_numbers = #tpu.dot_dimension_numbers<[1], [0], [0], [1], [0, 0, 1, 1], [], []>} : vector<192x4xf32>, vector<4x8xf32>, vector<192x8xf32> -> vector<192x8xf32>
    %53 = arith.addf %39, %52 : vector<192x8xf32>
    %c8 = arith.constant 8 : index
    %c0_61 = arith.constant 0 : index
    %c0_62 = arith.constant 0 : index
    %54 = vector.load %arg5[%c8, %c0_61, %c0_62] : memref<9x4x8xf32, #tpu.memory_space<vmem>>, vector<1x4x8xf32>
    %55 = vector.shape_cast %54 : vector<1x4x8xf32> to vector<4x8xf32>
    %cst_63 = arith.constant dense<0.000000e+00> : vector<192x8xf32>
    %56 = tpu.matmul %45, %55, %cst_63 {dimension_numbers = #tpu.dot_dimension_numbers<[1], [0], [0], [1], [0, 0, 1, 1], [], []>} : vector<192x4xf32>, vector<4x8xf32>, vector<192x8xf32> -> vector<192x8xf32>
    %57 = arith.addf %43, %56 : vector<192x8xf32>
    %58 = vector.extract_strided_slice %53 {offsets = [1, 0], sizes = [191, 8], strides = [1, 1]} : vector<192x8xf32> to vector<191x8xf32>
    %cst_64 = arith.constant 0.000000e+00 : f32
    %59 = vector.broadcast %cst_64 : f32 to vector<1x8xf32>
    %60 = tpu.concatenate %58, %59 in 0 : vector<191x8xf32>, vector<1x8xf32> -> vector<192x8xf32>
    %61 = arith.addf %49, %60 : vector<192x8xf32>
    %62 = vector.extract_strided_slice %57 {offsets = [2, 0], sizes = [190, 8], strides = [1, 1]} : vector<192x8xf32> to vector<190x8xf32>
    %cst_65 = arith.constant 0.000000e+00 : f32
    %63 = vector.broadcast %cst_65 : f32 to vector<2x8xf32>
    %64 = tpu.concatenate %62, %63 in 0 : vector<190x8xf32>, vector<2x8xf32> -> vector<192x8xf32>
    %65 = arith.addf %61, %64 : vector<192x8xf32>
    %c0_66 = arith.constant 0 : index
    %c0_67 = arith.constant 0 : index
    %66 = vector.load %arg6[%c0_66, %c0_67] : memref<1x8xf32, #tpu.memory_space<vmem>>, vector<1x8xf32>
    %67 = vector.broadcast %66 : vector<1x8xf32> to vector<192x8xf32>
    %68 = arith.addf %65, %67 : vector<192x8xf32>
    %cst_68 = arith.constant 0.000000e+00 : f32
    %69 = vector.broadcast %cst_68 : f32 to vector<192x8xf32>
    %70 = arith.cmpf oge, %68, %69 : vector<192x8xf32>
    %cst_69 = arith.constant 2.000000e-01 : f32
    %71 = vector.broadcast %cst_69 : f32 to vector<192x8xf32>
    %72 = arith.mulf %71, %68 : vector<192x8xf32>
    %73 = arith.select %70, %68, %72 : vector<192x8xi1>, vector<192x8xf32>
    %cst_70 = arith.constant 1.41421354 : f32
    %74 = vector.broadcast %cst_70 : f32 to vector<192x8xf32>
    %75 = arith.mulf %73, %74 : vector<192x8xf32>
    %76 = vector.shape_cast %75 : vector<192x8xf32> to vector<8x24x8xf32>
    %77 = vector.extract_strided_slice %76 {offsets = [0, 0, 0], sizes = [8, 16, 8], strides = [1, 1, 1]} : vector<8x24x8xf32> to vector<8x16x8xf32>
    %c0_71 = arith.constant 0 : index
    %c0_72 = arith.constant 0 : index
    %c0_73 = arith.constant 0 : index
    %c0_74 = arith.constant 0 : index
    %78 = vector.load %arg7[%c0_71, %c0_72, %c0_73, %c0_74] : memref<1x8x16x8xf32, #tpu.memory_space<vmem>>, vector<1x8x16x8xf32>
    %79 = vector.shape_cast %78 : vector<1x8x16x8xf32> to vector<8x16x8xf32>
    %80 = vector.shape_cast %77 : vector<8x16x8xf32> to vector<1x8x16x8xf32>
    tpu.vector_store %arg7[%c0_71, %c0_72, %c0_73, %c0_74], %80 {strides = array<i32>} : memref<1x8x16x8xf32, #tpu.memory_space<vmem>>, vector<1x8x16x8xf32>,
    return
  }
  func.func @transform_0(%arg0: i32, %arg1: i32) -> (i32, i32, i32, i32) {
    %c0_i32 = arith.constant 0 : i32
    %c0_i32_0 = arith.constant 0 : i32
    %c0_i32_1 = arith.constant 0 : i32
    return %arg0, %arg1, %c0_i32, %c0_i32_0 : i32, i32, i32, i32
  }
  func.func @transform_1(%arg0: i32, %arg1: i32) -> (i32, i32, i32, i32) {
    %c8_i32 = arith.constant 8 : i32
    %0 = arith.muli %arg1, %c8_i32 : i32
    %c1_i32 = arith.constant 1 : i32
    %1 = arith.subi %0, %c1_i32 : i32
    %c0_i32 = arith.constant 0 : i32
    %2 = arith.maxsi %1, %c0_i32 : i32
    %c0_i32_0 = arith.constant 0 : i32
    %c0_i32_1 = arith.constant 0 : i32
    %c0_i32_2 = arith.constant 0 : i32
    return %arg0, %2, %c0_i32_0, %c0_i32_1 : i32, i32, i32, i32
  }
  func.func @transform_2(%arg0: i32, %arg1: i32) -> (i32, i32, i32, i32) {
    %c1_i32 = arith.constant 1 : i32
    %0 = arith.addi %arg1, %c1_i32 : i32
    %c8_i32 = arith.constant 8 : i32
    %1 = arith.muli %0, %c8_i32 : i32
    %c15_i32 = arith.constant 15 : i32
    %2 = arith.minsi %1, %c15_i32 : i32
    %c0_i32 = arith.constant 0 : i32
    %c0_i32_0 = arith.constant 0 : i32
    %c0_i32_1 = arith.constant 0 : i32
    return %arg0, %2, %c0_i32, %c0_i32_0 : i32, i32, i32, i32
  }
  func.func @transform_3(%arg0: i32, %arg1: i32) -> (i32, i32, i32) {
    %c0_i32 = arith.constant 0 : i32
    %c0_i32_0 = arith.constant 0 : i32
    %c0_i32_1 = arith.constant 0 : i32
    %c0_i32_2 = arith.constant 0 : i32
    return %c0_i32, %c0_i32_0, %c0_i32_1 : i32, i32, i32
  }
  func.func @transform_4(%arg0: i32, %arg1: i32) -> (i32, i32) {
    %c0_i32 = arith.constant 0 : i32
    %c0_i32_0 = arith.constant 0 : i32
    %c0_i32_1 = arith.constant 0 : i32
    return %c0_i32, %c0_i32_0 : i32, i32
  }
  func.func @transform_5(%arg0: i32, %arg1: i32) -> (i32, i32, i32, i32) {
    %c0_i32 = arith.constant 0 : i32
    %c0_i32_0 = arith.constant 0 : i32
    %c0_i32_1 = arith.constant 0 : i32
    return %arg0, %arg1, %c0_i32, %c0_i32_0 : i32, i32, i32, i32
  }
}

</mosaic_0001>

<llo_original>
// kernel: tpu_custom_call.1
$region0: #{tpu_custom_call.1}
  #allocation0 [shape = 'u32[]', space=smem, size = 0x4, offset = 0x4, fixed_abs, tag = 'smem constant byte address 0x4 - core index']
  #allocation1 [shape = 'u32[144,128]{1,0:T(1,128)}', space=vmem, size = 0x12000, scoped, tag = 'internal scratch']
  #allocation2 [shape = 'f32[10,24,4]{2,1,0:T(8,128)}', space=vmem, size = 0x1e000, scoped, tag = 'scratch operand']
  %s0 = inlined_call_operand.vmem [shape: f32[2,16,16,4], index: 0, kind: input, shape index: {}]
  %s1 = inlined_call_operand.vmem [shape: f32[2,16,16,4], index: 1, kind: input, shape index: {}]
  %s2 = inlined_call_operand.vmem [shape: f32[2,16,16,4], index: 2, kind: input, shape index: {}]
  %s3 = inlined_call_operand.vmem [shape: f32[9,4,8], index: 3, kind: input, shape index: {}]
  %s4 = inlined_call_operand.vmem [shape: f32[1,8], index: 4, kind: input, shape index: {}]
  %s5 = inlined_call_operand.vmem [shape: f32[2,16,16,8], index: 5, kind: output, shape index: {}]
  %s6 = sld [smem:[#allocation0]]
  $region61: #{tpu_custom_call.1} parent=0
    _
  %s8 = ssub.s32 1, %s6
  %s9 = scalar_select 0, %s8, %s6
  loop: start=0, step=1, limit=6
  $region2: #{tpu_custom_call.1} parent=0 // loop_pre_header
    _
  $region3: #{tpu_custom_call.1} parent=0 // loop_header
    %s11 = sphi 0, %s15
    %p12 = scmp.ge.s32.totalorder %s11, 6
    %s18 = sphi 0, %s30
    %s19 = sphi 0, %s26
    %s20 = sphi 0, %s18
    %s21 = sphi 0, %s19
    %s22 = sphi 0, %s20
    %s23 = sphi 0, %s21
    %s35 = sphi 0, %s37
    %s38 = sphi 0, %s35
    %s39 = sphi 0, %s38
    %s55 = sphi 0, %s39
    %s71 = sphi 0, %s73
    %s74 = sphi 0, %s71
    %s75 = sphi 0, %s74
    %s91 = sphi 0, %s75
    %s107 = sphi 0, %s109
    %s110 = sphi 0, %s107
    %s111 = sphi 0, %s110
    %s127 = sphi 0, %s111
    %s131 = sphi 0, %s131
    %s133 = sphi 0, %s131
    %s134 = sphi 0, %s133
    %s148 = sphi 0, %s134
    %s152 = sphi 0, %s152
    %s154 = sphi 0, %s152
    %s155 = sphi 0, %s154
    %s169 = sphi 0, %s155
    %s177 = sphi 0, %s179
    %s180 = sphi 0, %s177
    %s181 = sphi 0, %s180
    %s197 = sphi 0, %s181
  $region4: #{tpu_custom_call.1} parent=0 // loop_header_branch
    %14 = sbr.rel (%p12) target = $region8
  $region5: #{tpu_custom_call.1} parent=0 // loop_body
    %s16 = ssub.s32 %s11, 1
    %s17 = ssub.s32 %s11, 2
    %s24 = sadd.s32 1, %s19
    %p25 = scmp.ge.s32.totalorder %s24, 2
    %s26 = scalar_select %p25, 0, %s24
    %s27 = sadd.s32 1, %s18
    %s28 = scalar_select %p25, %s27, %s18
    %p29 = scmp.ge.s32.totalorder %s28, 2
    %s30 = scalar_select %p29, 0, %s28
    %s31 = ssub.s32 %s18, %s30
    %s32 = ssub.s32 %s19, %s26
    %s33 = sor.u32 %s31, %s32
    %p34 = scmp.eq.s32.totalorder %s33, 0
    %s36 = sadd.s32 %s35, 1
    %s37 = scalar_select %p34, %s35, %s36
    %p40 = pneg %p34
    %p41 = scmp.eq.s32.totalorder %s11, 3
    %p42 = por %p40, %p41
    %p43 = scmp.ne.s32.totalorder %s35, %s38
    %p44 = scmp.eq.s32.totalorder %s11, 0
    %p45 = por %p43, %p44
    %p46 = scmp.ne.s32.totalorder %s35, %s38
    %p47 = scmp.eq.s32.totalorder %s16, 3
    %p48 = por %p46, %p47
    %p49 = scmp.ne.s32.totalorder %s38, %s39
    %p50 = scmp.eq.s32.totalorder %s16, 0
    %p51 = por %p49, %p50
    %p52 = scmp.ne.s32.totalorder %s38, %s39
    %p53 = scmp.eq.s32.totalorder %s17, 3
    %p54 = por %p52, %p53
    %p56 = scmp.ne.s32.totalorder %s39, %s55
    %p57 = scmp.eq.s32.totalorder %s17, 0
    %p58 = por %p56, %p57
    %s59 = smul.u32 %s19, 8
    %s60 = ssub.s32 %s59, 1
    %p61 = scmp.gt.s32.totalorder %s60, 0
    %s62 = scalar_select %p61, %s60, 0
    %s63 = smul.u32 %s26, 8
    %s64 = ssub.s32 %s63, 1
    %p65 = scmp.gt.s32.totalorder %s64, 0
    %s66 = scalar_select %p65, %s64, 0
    %s67 = ssub.s32 %s18, %s30
    %s68 = ssub.s32 %s62, %s66
    %s69 = sor.u32 %s67, %s68
    %p70 = scmp.eq.s32.totalorder %s69, 0
    %s72 = sadd.s32 %s71, 1
    %s73 = scalar_select %p70, %s71, %s72
    %p76 = pneg %p70
    %p77 = scmp.eq.s32.totalorder %s11, 3
    %p78 = por %p76, %p77
    %p79 = scmp.ne.s32.totalorder %s71, %s74
    %p80 = scmp.eq.s32.totalorder %s11, 0
    %p81 = por %p79, %p80
    %p82 = scmp.ne.s32.totalorder %s71, %s74
    %p83 = scmp.eq.s32.totalorder %s16, 3
    %p84 = por %p82, %p83
    %p85 = scmp.ne.s32.totalorder %s74, %s75
    %p86 = scmp.eq.s32.totalorder %s16, 0
    %p87 = por %p85, %p86
    %p88 = scmp.ne.s32.totalorder %s74, %s75
    %p89 = scmp.eq.s32.totalorder %s17, 3
    %p90 = por %p88, %p89
    %p92 = scmp.ne.s32.totalorder %s75, %s91
    %p93 = scmp.eq.s32.totalorder %s17, 0
    %p94 = por %p92, %p93
    %s95 = sadd.s32 %s19, 1
    %s96 = smul.u32 %s95, 8
    %p97 = scmp.lt.s32.totalorder %s96, 15
    %s98 = scalar_select %p97, %s96, 15
    %s99 = sadd.s32 %s26, 1
    %s100 = smul.u32 %s99, 8
    %p101 = scmp.lt.s32.totalorder %s100, 15
    %s102 = scalar_select %p101, %s100, 15
    %s103 = ssub.s32 %s18, %s30
    %s104 = ssub.s32 %s98, %s102
    %s105 = sor.u32 %s103, %s104
    %p106 = scmp.eq.s32.totalorder %s105, 0
    %s108 = sadd.s32 %s107, 1
    %s109 = scalar_select %p106, %s107, %s108
    %p112 = pneg %p106
    %p113 = scmp.eq.s32.totalorder %s11, 3
    %p114 = por %p112, %p113
    %p115 = scmp.ne.s32.totalorder %s107, %s110
    %p116 = scmp.eq.s32.totalorder %s11, 0
    %p117 = por %p115, %p116
    %p118 = scmp.ne.s32.totalorder %s107, %s110
    %p119 = scmp.eq.s32.totalorder %s16, 3
    %p120 = por %p118, %p119
    %p121 = scmp.ne.s32.totalorder %s110, %s111
    %p122 = scmp.eq.s32.totalorder %s16, 0
    %p123 = por %p121, %p122
    %p124 = scmp.ne.s32.totalorder %s110, %s111
    %p125 = scmp.eq.s32.totalorder %s17, 3
    %p126 = por %p124, %p125
    %p128 = scmp.ne.s32.totalorder %s111, %s127
    %p129 = scmp.eq.s32.totalorder %s17, 0
    %p130 = por %p128, %p129
    %s132 = sadd.s32 %s131, 1
    %p135 = scmp.eq.s32.totalorder %s11, 3
    %p136 = scmp.ne.s32.totalorder %s131, %s133
    %p137 = scmp.eq.s32.totalorder %s11, 0
    %p138 = por %p136, %p137
    %p139 = scmp.ne.s32.totalorder %s131, %s133
    %p140 = scmp.eq.s32.totalorder %s16, 3
    %p141 = por %p139, %p140
    %p142 = scmp.ne.s32.totalorder %s133, %s134
    %p143 = scmp.eq.s32.totalorder %s16, 0
    %p144 = por %p142, %p143
    %p145 = scmp.ne.s32.totalorder %s133, %s134
    %p146 = scmp.eq.s32.totalorder %s17, 3
    %p147 = por %p145, %p146
    %p149 = scmp.ne.s32.totalorder %s134, %s148
    %p150 = scmp.eq.s32.totalorder %s17, 0
    %p151 = por %p149, %p150
    %s153 = sadd.s32 %s152, 1
    %p156 = scmp.eq.s32.totalorder %s11, 3
    %p157 = scmp.ne.s32.totalorder %s152, %s154
    %p158 = scmp.eq.s32.totalorder %s11, 0
    %p159 = por %p157, %p158
    %p160 = scmp.ne.s32.totalorder %s152, %s154
    %p161 = scmp.eq.s32.totalorder %s16, 3
    %p162 = por %p160, %p161
    %p163 = scmp.ne.s32.totalorder %s154, %s155
    %p164 = scmp.eq.s32.totalorder %s16, 0
    %p165 = por %p163, %p164
    %p166 = scmp.ne.s32.totalorder %s154, %s155
    %p167 = scmp.eq.s32.totalorder %s17, 3
    %p168 = por %p166, %p167
    %p170 = scmp.ne.s32.totalorder %s155, %s169
    %p171 = scmp.eq.s32.totalorder %s17, 0
    %p172 = por %p170, %p171
    %s173 = ssub.s32 %s18, %s30
    %s174 = ssub.s32 %s19, %s26
    %s175 = sor.u32 %s173, %s174
    %p176 = scmp.eq.s32.totalorder %s175, 0
    %s178 = sadd.s32 %s177, 1
    %s179 = scalar_select %p176, %s177, %s178
    %p182 = pneg %p176
    %p183 = scmp.eq.s32.totalorder %s11, 3
    %p184 = por %p182, %p183
    %p185 = scmp.ne.s32.totalorder %s177, %s180
    %p186 = scmp.eq.s32.totalorder %s11, 0
    %p187 = por %p185, %p186
    %p188 = scmp.ne.s32.totalorder %s177, %s180
    %p189 = scmp.eq.s32.totalorder %s16, 3
    %p190 = por %p188, %p189
    %p191 = scmp.ne.s32.totalorder %s180, %s181
    %p192 = scmp.eq.s32.totalorder %s16, 0
    %p193 = por %p191, %p192
    %p194 = scmp.ne.s32.totalorder %s180, %s181
    %p195 = scmp.eq.s32.totalorder %s17, 3
    %p196 = por %p194, %p195
    %p198 = scmp.ne.s32.totalorder %s181, %s197
    %p199 = scmp.eq.s32.totalorder %s17, 0
    %p200 = por %p198, %p199
    %p201 = scmp.le.s32.totalorder 1, %s11
    %p202 = scmp.lt.s32.totalorder %s11, 5
    %p203 = pnand %p201, %p202
    %p204 = pneg %p203
    // Predicated region
    $region9: #{tpu_custom_call.1} parent=5 // pred_check
      _
    $region10: #{tpu_custom_call.1} parent=5 // pred_check_branch
      %206 = sbr.rel (%p203) target = $region12
    $region11: #{tpu_custom_call.1} parent=5 // pred_region
      %s207 = ssub.s32 %s11, 1
      // Predicated region
      $region13: #{tpu_custom_call.1} parent=11 // pred_check
        %p208 = pneg %p144
      $region14: #{tpu_custom_call.1} parent=11 // pred_check_branch
        %210 = sbr.rel (%p208) target = $region16
      $region15: #{tpu_custom_call.1} parent=11 // pred_region
        _
      $region16: #{tpu_custom_call.1} parent=11 // pred_fallthru
        _
      // Predicated region
      $region17: #{tpu_custom_call.1} parent=11 // pred_check
        %p211 = pneg %p165
      $region18: #{tpu_custom_call.1} parent=11 // pred_check_branch
        %213 = sbr.rel (%p211) target = $region20
      $region19: #{tpu_custom_call.1} parent=11 // pred_region
        _
      $region20: #{tpu_custom_call.1} parent=11 // pred_fallthru
        _
    $region12: #{tpu_custom_call.1} parent=5 // pred_fallthru
      _
    %p214 = scmp.lt.s32.totalorder %s11, 4
    // Predicated region
    $region21: #{tpu_custom_call.1} parent=5 // pred_check
      %p215 = pneg %p214
    $region22: #{tpu_custom_call.1} parent=5 // pred_check_branch
      %217 = sbr.rel (%p215) target = $region24
    $region23: #{tpu_custom_call.1} parent=5 // pred_region
      // Predicated region
      $region25: #{tpu_custom_call.1} parent=23 // pred_check
        %p218 = pneg %p45
      $region26: #{tpu_custom_call.1} parent=23 // pred_check_branch
        %220 = sbr.rel (%p218) target = $region28
      $region27: #{tpu_custom_call.1} parent=23 // pred_region
        %s221 = smul.u32 8, %s19
        %p222 = scmp.lt.s32.totalorder %s18, 1
        %s223 = scalar_select %p222, %s18, 1
        %p224 = scmp.lt.s32.totalorder %s221, 15
        %s225 = scalar_select %p224, %s221, 15
        %s226 = smul.addr %s225, 2
        %s227 = smul.addr %s223, 32
        %s228 = sadd.s32 %s226, %s227
        %s229 = smul.addr %s228, 8
        %s230 = scalar_lea.vmem %s0, %s229
        %s231 = smul.u32 8, %s19
      $region28: #{tpu_custom_call.1} parent=23 // pred_fallthru
        _
      // Predicated region
      $region29: #{tpu_custom_call.1} parent=23 // pred_check
        %p232 = pneg %p81
      $region30: #{tpu_custom_call.1} parent=23 // pred_check_branch
        %234 = sbr.rel (%p232) target = $region32
      $region31: #{tpu_custom_call.1} parent=23 // pred_region
        %s235 = smul.u32 %s19, 8
        %s236 = ssub.s32 %s235, 1
        %p237 = scmp.gt.s32.totalorder %s236, 0
        %s238 = scalar_select %p237, %s236, 0
        %p239 = scmp.lt.s32.totalorder %s18, 1
        %s240 = scalar_select %p239, %s18, 1
        %p241 = scmp.lt.s32.totalorder %s238, 15
        %s242 = scalar_select %p241, %s238, 15
        %s243 = smul.addr %s242, 2
        %s244 = smul.addr %s240, 32
        %s245 = sadd.s32 %s243, %s244
        %s246 = smul.addr %s245, 8
        %s247 = scalar_lea.vmem %s1, %s246
        %s248 = smul.u32 %s19, 8
        %s249 = ssub.s32 %s248, 1
        %p250 = scmp.gt.s32.totalorder %s249, 0
        %s251 = scalar_select %p250, %s249, 0
      $region32: #{tpu_custom_call.1} parent=23 // pred_fallthru
        _
      // Predicated region
      $region33: #{tpu_custom_call.1} parent=23 // pred_check
        %p252 = pneg %p117
      $region34: #{tpu_custom_call.1} parent=23 // pred_check_branch
        %254 = sbr.rel (%p252) target = $region36
      $region35: #{tpu_custom_call.1} parent=23 // pred_region
        %s255 = sadd.s32 %s19, 1
        %s256 = smul.u32 %s255, 8
        %p257 = scmp.lt.s32.totalorder %s256, 15
        %s258 = scalar_select %p257, %s256, 15
        %p259 = scmp.lt.s32.totalorder %s18, 1
        %s260 = scalar_select %p259, %s18, 1
        %p261 = scmp.lt.s32.totalorder %s258, 15
        %s262 = scalar_select %p261, %s258, 15
        %s263 = smul.addr %s262, 2
        %s264 = smul.addr %s260, 32
        %s265 = sadd.s32 %s263, %s264
        %s266 = smul.addr %s265, 8
        %s267 = scalar_lea.vmem %s2, %s266
        %s268 = sadd.s32 %s19, 1
        %s269 = smul.u32 %s268, 8
        %p270 = scmp.lt.s32.totalorder %s269, 15
        %s271 = scalar_select %p270, %s269, 15
      $region36: #{tpu_custom_call.1} parent=23 // pred_fallthru
        _
    $region24: #{tpu_custom_call.1} parent=5 // pred_fallthru
      _
    %p272 = scmp.le.s32.totalorder 1, %s11
    %p273 = scmp.lt.s32.totalorder %s11, 5
    %p274 = pnand %p272, %p273
    %p275 = pneg %p274
    // Predicated region
    $region37: #{tpu_custom_call.1} parent=5 // pred_check
      _
    $region38: #{tpu_custom_call.1} parent=5 // pred_check_branch
      %277 = sbr.rel (%p274) target = $region40
    $region39: #{tpu_custom_call.1} parent=5 // pred_region
      %s278 = ssub.s32 %s11, 1
      %s279 = smul.u32 8, %s21
      %p280 = scmp.lt.s32.totalorder %s20, 1
      %s281 = scalar_select %p280, %s20, 1
      %p282 = scmp.lt.s32.totalorder %s279, 15
      %s283 = scalar_select %p282, %s279, 15
      %s284 = smul.addr %s283, 2
      %s285 = smul.addr %s281, 32
      %s286 = sadd.s32 %s284, %s285
      %s287 = smul.addr %s286, 8
      %s288 = scalar_lea.vmem %s0, %s287
      %p289 = pneg %p51
      %p290 = pneg %p48
      %s291 = smul.u32 %s21, 8
      %s292 = ssub.s32 %s291, 1
      %p293 = scmp.gt.s32.totalorder %s292, 0
      %s294 = scalar_select %p293, %s292, 0
      %p295 = scmp.lt.s32.totalorder %s20, 1
      %s296 = scalar_select %p295, %s20, 1
      %p297 = scmp.lt.s32.totalorder %s294, 15
      %s298 = scalar_select %p297, %s294, 15
      %s299 = smul.addr %s298, 2
      %s300 = smul.addr %s296, 32
      %s301 = sadd.s32 %s299, %s300
      %s302 = smul.addr %s301, 8
      %s303 = scalar_lea.vmem %s1, %s302
      %p304 = pneg %p87
      %p305 = pneg %p84
      %s306 = sadd.s32 %s21, 1
      %s307 = smul.u32 %s306, 8
      %p308 = scmp.lt.s32.totalorder %s307, 15
      %s309 = scalar_select %p308, %s307, 15
      %p310 = scmp.lt.s32.totalorder %s20, 1
      %s311 = scalar_select %p310, %s20, 1
      %p312 = scmp.lt.s32.totalorder %s309, 15
      %s313 = scalar_select %p312, %s309, 15
      %s314 = smul.addr %s313, 2
      %s315 = smul.addr %s311, 32
      %s316 = sadd.s32 %s314, %s315
      %s317 = smul.addr %s316, 8
      %s318 = scalar_lea.vmem %s2, %s317
      %p319 = pneg %p123
      %p320 = pneg %p120
      %p321 = pneg %p144
      %p322 = pneg %p141
      %p323 = pneg %p165
      %p324 = pneg %p162
      %p325 = pneg %p193
      %p326 = pneg %p190
      %s327 = smul.u32 8, %s21
      %p328 = scmp.lt.s32.totalorder %s20, 1
      %s329 = scalar_select %p328, %s20, 1
      %p330 = scmp.lt.s32.totalorder %s327, 15
      %s331 = scalar_select %p330, %s327, 15
      %s332 = smul.addr %s331, 2
      %s333 = smul.addr %s329, 32
      %s334 = sadd.s32 %s332, %s333
      %s335 = smul.addr %s334, 8
      %s336 = scalar_lea.vmem %s5, %s335
      %s337 = smul.u32 8, %s21
      %p338 = scmp.lt.s32.totalorder %s20, 1
      %s339 = scalar_select %p338, %s20, 1
      %p340 = scmp.lt.s32.totalorder %s337, 15
      %s341 = scalar_select %p340, %s337, 15
      %s342 = smul.addr %s341, 2
      %s343 = smul.addr %s339, 32
      %s344 = sadd.s32 %s342, %s343
      %s345 = smul.addr %s344, 8
      %s346 = scalar_lea.vmem %s0, %s345
      %s347 = smul.u32 8, %s21
      %s348 = smul.u32 %s21, 8
      %s349 = ssub.s32 %s348, 1
      %p350 = scmp.gt.s32.totalorder %s349, 0
      %s351 = scalar_select %p350, %s349, 0
      %p352 = scmp.lt.s32.totalorder %s20, 1
      %s353 = scalar_select %p352, %s20, 1
      %p354 = scmp.lt.s32.totalorder %s351, 15
      %s355 = scalar_select %p354, %s351, 15
      %s356 = smul.addr %s355, 2
      %s357 = smul.addr %s353, 32
      %s358 = sadd.s32 %s356, %s357
      %s359 = smul.addr %s358, 8
      %s360 = scalar_lea.vmem %s1, %s359
      %s361 = smul.u32 %s21, 8
      %s362 = ssub.s32 %s361, 1
      %p363 = scmp.gt.s32.totalorder %s362, 0
      %s364 = scalar_select %p363, %s362, 0
      %s365 = sadd.s32 %s21, 1
      %s366 = smul.u32 %s365, 8
      %p367 = scmp.lt.s32.totalorder %s366, 15
      %s368 = scalar_select %p367, %s366, 15
      %p369 = scmp.lt.s32.totalorder %s20, 1
      %s370 = scalar_select %p369, %s20, 1
      %p371 = scmp.lt.s32.totalorder %s368, 15
      %s372 = scalar_select %p371, %s368, 15
      %s373 = smul.addr %s372, 2
      %s374 = smul.addr %s370, 32
      %s375 = sadd.s32 %s373, %s374
      %s376 = smul.addr %s375, 8
      %s377 = scalar_lea.vmem %s2, %s376
      %s378 = sadd.s32 %s21, 1
      %s379 = smul.u32 %s378, 8
      %p380 = scmp.lt.s32.totalorder %s379, 15
      %s381 = scalar_select %p380, %s379, 15
      %s382 = smul.u32 8, %s21
      %p383 = scmp.lt.s32.totalorder %s20, 1
      %s384 = scalar_select %p383, %s20, 1
      %p385 = scmp.lt.s32.totalorder %s382, 15
      %s386 = scalar_select %p385, %s382, 15
      %s387 = smul.addr %s386, 2
      %s388 = smul.addr %s384, 32
      %s389 = sadd.s32 %s387, %s388
      %s390 = smul.addr %s389, 8
      %s391 = scalar_lea.vmem %s5, %s390
      %s392 = smul.u32 8, %s21
      %v393 = vld [vmem:[%s346] sm:$0xff]
      %v394 = vld [vmem:[%s346 + $0x8] sm:$0xff]
      %v395 = vld [vmem:[%s346 + $0x10] sm:$0xff]
      %v396 = vld [vmem:[%s346 + $0x18] sm:$0xff]
      %v397 = vld [vmem:[%s346 + $0x20] sm:$0xff]
      %v398 = vld [vmem:[%s346 + $0x28] sm:$0xff]
      %v399 = vld [vmem:[%s346 + $0x30] sm:$0xff]
      %v400 = vld [vmem:[%s346 + $0x38] sm:$0xff]
      %v401 = vld [vmem:[%s346 + $0x40] sm:$0xff]
      %v402 = vld [vmem:[%s346 + $0x48] sm:$0xff]
      %v403 = vld [vmem:[%s346 + $0x50] sm:$0xff]
      %v404 = vld [vmem:[%s346 + $0x58] sm:$0xff]
      %v405 = vld [vmem:[%s346 + $0x60] sm:$0xff]
      %v406 = vld [vmem:[%s346 + $0x68] sm:$0xff]
      %v407 = vld [vmem:[%s346 + $0x70] sm:$0xff]
      %v408 = vld [vmem:[%s346 + $0x78] sm:$0xff]
      %s409 = scalar_lea.vmem [#allocation2], 24
      %vm410 = vcmask 31744
      %411 = vst.msk [vmem:[%s409 + $0x1] sm:$0xff] %vm410, %v393
      %412 = vst.msk [vmem:[%s409 + $0x9] sm:$0xff] %vm410, %v394
      %413 = vst.msk [vmem:[%s409 + $0x19] sm:$0xff] %vm410, %v395
      %414 = vst.msk [vmem:[%s409 + $0x21] sm:$0xff] %vm410, %v396
      %415 = vst.msk [vmem:[%s409 + $0x31] sm:$0xff] %vm410, %v397
      %416 = vst.msk [vmem:[%s409 + $0x39] sm:$0xff] %vm410, %v398
      %417 = vst.msk [vmem:[%s409 + $0x49] sm:$0xff] %vm410, %v399
      %418 = vst.msk [vmem:[%s409 + $0x51] sm:$0xff] %vm410, %v400
      %419 = vst.msk [vmem:[%s409 + $0x61] sm:$0xff] %vm410, %v401
      %420 = vst.msk [vmem:[%s409 + $0x69] sm:$0xff] %vm410, %v402
      %421 = vst.msk [vmem:[%s409 + $0x79] sm:$0xff] %vm410, %v403
      %422 = vst.msk [vmem:[%s409 + $0x81] sm:$0xff] %vm410, %v404
      %423 = vst.msk [vmem:[%s409 + $0x91] sm:$0xff] %vm410, %v405
      %424 = vst.msk [vmem:[%s409 + $0x99] sm:$0xff] %vm410, %v406
      %425 = vst.msk [vmem:[%s409 + $0xa9] sm:$0xff] %vm410, %v407
      %426 = vst.msk [vmem:[%s409 + $0xb1] sm:$0xff] %vm410, %v408
      %v427 = vld [vmem:[%s360] sm:$0xff]
      %v428 = vld [vmem:[%s360 + $0x8] sm:$0xff]
      %429 = vst.msk [vmem:[#allocation2 + $0x1] sm:$0xff] %vm410, %v427
      %430 = vst.msk [vmem:[#allocation2 + $0x9] sm:$0xff] %vm410, %v428
      %v431 = vld [vmem:[%s377] sm:$0xff]
      %v432 = vld [vmem:[%s377 + $0x8] sm:$0xff]
      %s433 = scalar_lea.vmem [#allocation2], 216
      %434 = vst.msk [vmem:[%s433 + $0x1] sm:$0xff] %vm410, %v431
      %435 = vst.msk [vmem:[%s433 + $0x9] sm:$0xff] %vm410, %v432
      %vm436 = vcmask 24576
      %437 = vst.msk [vmem:[#allocation2] sm:$0x1] %vm436, 0.0
      %438 = vst.msk [vmem:[#allocation2 + $0x18] sm:$0x1] %vm436, 0.0
      %439 = vst.msk [vmem:[#allocation2 + $0x30] sm:$0x1] %vm436, 0.0
      %440 = vst.msk [vmem:[#allocation2 + $0x48] sm:$0x1] %vm436, 0.0
      %441 = vst.msk [vmem:[#allocation2 + $0x60] sm:$0x1] %vm436, 0.0
      %442 = vst.msk [vmem:[#allocation2 + $0x78] sm:$0x1] %vm436, 0.0
      %443 = vst.msk [vmem:[#allocation2 + $0x90] sm:$0x1] %vm436, 0.0
      %444 = vst.msk [vmem:[#allocation2 + $0xa8] sm:$0x1] %vm436, 0.0
      %445 = vst.msk [vmem:[#allocation2 + $0xc0] sm:$0x1] %vm436, 0.0
      %446 = vst.msk [vmem:[#allocation2 + $0xd8] sm:$0x1] %vm436, 0.0
      %vm447 = vcmask 30720
      %448 = vst.msk [vmem:[#allocation2 + $0x11] sm:$0x7f] %vm447, 0.0
      %449 = vst.msk [vmem:[#allocation2 + $0x29] sm:$0x7f] %vm447, 0.0
      %450 = vst.msk [vmem:[#allocation2 + $0x41] sm:$0x7f] %vm447, 0.0
      %451 = vst.msk [vmem:[#allocation2 + $0x59] sm:$0x7f] %vm447, 0.0
      %452 = vst.msk [vmem:[#allocation2 + $0x71] sm:$0x7f] %vm447, 0.0
      %453 = vst.msk [vmem:[#allocation2 + $0x89] sm:$0x7f] %vm447, 0.0
      %454 = vst.msk [vmem:[#allocation2 + $0xa1] sm:$0x7f] %vm447, 0.0
      %455 = vst.msk [vmem:[#allocation2 + $0xb9] sm:$0x7f] %vm447, 0.0
      %456 = vst.msk [vmem:[#allocation2 + $0xd1] sm:$0x7f] %vm447, 0.0
      %457 = vst.msk [vmem:[#allocation2 + $0xe9] sm:$0x7f] %vm447, 0.0
      %p458 = scmp.eq.s32.totalorder %s21, 0
      // Predicated region
      $region41: #{tpu_custom_call.1} parent=39 // pred_check
        %p459 = pneg %p458
      $region42: #{tpu_custom_call.1} parent=39 // pred_check_branch
        %461 = sbr.rel (%p459) target = $region44
      $region43: #{tpu_custom_call.1} parent=39 // pred_region
        %462 = vst.msk [vmem:[#allocation2] sm:$0xff] %vm410, 0.0
        %463 = vst.msk [vmem:[#allocation2 + $0x8] sm:$0xff] %vm410, 0.0
        %464 = vst.msk [vmem:[#allocation2 + $0x10] sm:$0xff] %vm410, 0.0
      $region44: #{tpu_custom_call.1} parent=39 // pred_fallthru
        _
      %p465 = scmp.eq.s32.totalorder %s21, 1
      // Predicated region
      $region45: #{tpu_custom_call.1} parent=39 // pred_check
        %p466 = pneg %p465
      $region46: #{tpu_custom_call.1} parent=39 // pred_check_branch
        %468 = sbr.rel (%p466) target = $region48
      $region47: #{tpu_custom_call.1} parent=39 // pred_region
        %469 = vst.msk [vmem:[%s433] sm:$0xff] %vm410, 0.0
        %470 = vst.msk [vmem:[%s433 + $0x8] sm:$0xff] %vm410, 0.0
        %471 = vst.msk [vmem:[%s433 + $0x10] sm:$0xff] %vm410, 0.0
      $region48: #{tpu_custom_call.1} parent=39 // pred_fallthru
        _
      %v472 = vld [vmem:[#allocation2] sm:$0xff]
      %v473 = vld [vmem:[#allocation2 + $0x8] sm:$0xff]
      %v474 = vld [vmem:[#allocation2 + $0x10] sm:$0xff]
      %v475 = vld [vmem:[#allocation2 + $0x18] sm:$0xff]
      %v476 = vld [vmem:[#allocation2 + $0x20] sm:$0xff]
      %v477 = vld [vmem:[#allocation2 + $0x28] sm:$0xff]
      %v478 = vld [vmem:[#allocation2 + $0x30] sm:$0xff]
      %v479 = vld [vmem:[#allocation2 + $0x38] sm:$0xff]
      %v480 = vld [vmem:[#allocation2 + $0x40] sm:$0xff]
      %v481 = vld [vmem:[#allocation2 + $0x48] sm:$0xff]
      %v482 = vld [vmem:[#allocation2 + $0x50] sm:$0xff]
      %v483 = vld [vmem:[#allocation2 + $0x58] sm:$0xff]
      %v484 = vld [vmem:[#allocation2 + $0x60] sm:$0xff]
      %v485 = vld [vmem:[#allocation2 + $0x68] sm:$0xff]
      %v486 = vld [vmem:[#allocation2 + $0x70] sm:$0xff]
      %v487 = vld [vmem:[#allocation2 + $0x78] sm:$0xff]
      %v488 = vld [vmem:[#allocation2 + $0x80] sm:$0xff]
      %v489 = vld [vmem:[#allocation2 + $0x88] sm:$0xff]
      %v490 = vld [vmem:[#allocation2 + $0x90] sm:$0xff]
      %v491 = vld [vmem:[#allocation2 + $0x98] sm:$0xff]
      %v492 = vld [vmem:[#allocation2 + $0xa0] sm:$0xff]
      %v493 = vld [vmem:[#allocation2 + $0xa8] sm:$0xff]
      %v494 = vld [vmem:[#allocation2 + $0xb0] sm:$0xff]
      %v495 = vld [vmem:[#allocation2 + $0xb8] sm:$0xff]
      %v496 = vld [vmem:[%s3] sm:$0xf]
      %s497 = scalar_lea.vmem %s3, 4
      %v498 = vld [vmem:[%s497] sm:$0xf]
      %s499 = scalar_lea.vmem %s3, 8
      %v500 = vld [vmem:[%s499] sm:$0xf]
      %v501 = vld [vmem:[%s409] sm:$0xff]
      %v502 = vld [vmem:[%s409 + $0x8] sm:$0xff]
      %v503 = vld [vmem:[%s409 + $0x10] sm:$0xff]
      %v504 = vld [vmem:[%s409 + $0x18] sm:$0xff]
      %v505 = vld [vmem:[%s409 + $0x20] sm:$0xff]
      %v506 = vld [vmem:[%s409 + $0x28] sm:$0xff]
      %v507 = vld [vmem:[%s409 + $0x30] sm:$0xff]
      %v508 = vld [vmem:[%s409 + $0x38] sm:$0xff]
      %v509 = vld [vmem:[%s409 + $0x40] sm:$0xff]
      %v510 = vld [vmem:[%s409 + $0x48] sm:$0xff]
      %v511 = vld [vmem:[%s409 + $0x50] sm:$0xff]
      %v512 = vld [vmem:[%s409 + $0x58] sm:$0xff]
      %v513 = vld [vmem:[%s409 + $0x60] sm:$0xff]
      %v514 = vld [vmem:[%s409 + $0x68] sm:$0xff]
      %v515 = vld [vmem:[%s409 + $0x70] sm:$0xff]
      %v516 = vld [vmem:[%s409 + $0x78] sm:$0xff]
      %v517 = vld [vmem:[%s409 + $0x80] sm:$0xff]
      %v518 = vld [vmem:[%s409 + $0x88] sm:$0xff]
      %v519 = vld [vmem:[%s409 + $0x90] sm:$0xff]
      %v520 = vld [vmem:[%s409 + $0x98] sm:$0xff]
      %v521 = vld [vmem:[%s409 + $0xa0] sm:$0xff]
      %v522 = vld [vmem:[%s409 + $0xa8] sm:$0xff]
      %v523 = vld [vmem:[%s409 + $0xb0] sm:$0xff]
      %v524 = vld [vmem:[%s409 + $0xb8] sm:$0xff]
      %s525 = scalar_lea.vmem %s3, 12
      %v526 = vld [vmem:[%s525] sm:$0xf]
      %v528 = vsel %vm410, %v501, 0
      %v531 = vsel %vm410, %v502, 0
      %v534 = vsel %vm410, %v503, 0
      %v537 = vsel %vm410, %v504, 0
      %v540 = vsel %vm410, %v505, 0
      %v543 = vsel %vm410, %v506, 0
      %v546 = vsel %vm410, %v507, 0
      %v549 = vsel %vm410, %v508, 0
      %v552 = vsel %vm410, %v509, 0
      %v555 = vsel %vm410, %v510, 0
      %v558 = vsel %vm410, %v511, 0
      %v561 = vsel %vm410, %v512, 0
      %v564 = vsel %vm410, %v513, 0
      %v567 = vsel %vm410, %v514, 0
      %v570 = vsel %vm410, %v515, 0
      %v573 = vsel %vm410, %v516, 0
      %v576 = vsel %vm410, %v517, 0
      %v579 = vsel %vm410, %v518, 0
      %v582 = vsel %vm410, %v519, 0
      %v585 = vsel %vm410, %v520, 0
      %v588 = vsel %vm410, %v521, 0
      %v591 = vsel %vm410, %v522, 0
      %v594 = vsel %vm410, %v523, 0
      %v597 = vsel %vm410, %v524, 0
      %vm599 = vcmask 1043456
      %v601 = vsel %vm599, %v526, 0
      %603 = vmatprep.subr.mxu0 0.0
      %604 = vmatpush1.msra.mxu0 %v601
      %605 = vmatprep.subr.mxu0 0.0
      %606 = vmatpush1.msra.mxu0 0.0
      %607 = vmatprep.subr.mxu0 0.0
      %608 = vmatpush1.msra.mxu0 0.0
      %609 = vmatprep.subr.mxu0 0.0
      %610 = vmatpush1.msra.mxu0 0.0
      %611 = vmatprep.subr.mxu0 0.0
      %612 = vmatpush1.msra.mxu0 0.0
      %613 = vmatprep.subr.mxu0 0.0
      %614 = vmatpush1.msra.mxu0 0.0
      %615 = vmatprep.subr.mxu0 0.0
      %616 = vmatpush1.msra.mxu0 0.0
      %617 = vmatprep.subr.mxu0 0.0
      %618 = vmatpush1.msra.mxu0 0.0
      %619 = vmatprep.subr.mxu0 0.0
      %620 = vmatpush1.msra.mxu0 0.0
      %621 = vmatprep.subr.mxu0 0.0
      %622 = vmatpush1.msra.mxu0 0.0
      %623 = vmatprep.subr.mxu0 0.0
      %624 = vmatpush1.msra.mxu0 0.0
      %625 = vmatprep.subr.mxu0 0.0
      %626 = vmatpush1.msra.mxu0 0.0
      %627 = vmatprep.subr.mxu0 0.0
      %628 = vmatpush1.msra.mxu0 0.0
      %629 = vmatprep.subr.mxu0 0.0
      %630 = vmatpush1.msra.mxu0 0.0
      %631 = vmatprep.subr.mxu0 0.0
      %632 = vmatpush1.msra.mxu0 0.0
      %633 = vmatprep.subr.mxu0 0.0
      %634 = vmatpush1.msra.mxu0 0.0
      %635 = vmatprep.subr.mxu0 0.0
      %636 = vmatpush1.msra.mxu0 0.0
      %637 = vmatprep.subr.mxu0 0.0
      %638 = vmatpush1.msra.mxu0 0.0
      %639 = vmatprep.subr.mxu0 0.0
      %640 = vmatpush1.msra.mxu0 0.0
      %641 = vmatprep.subr.mxu0 0.0
      %642 = vmatpush1.msra.mxu0 0.0
      %643 = vmatprep.subr.mxu0 0.0
      %644 = vmatpush1.msra.mxu0 0.0
      %645 = vmatprep.subr.mxu0 0.0
      %646 = vmatpush1.msra.mxu0 0.0
      %647 = vmatprep.subr.mxu0 0.0
      %648 = vmatpush1.msra.mxu0 0.0
      %649 = vmatprep.subr.mxu0 0.0
      %650 = vmatpush1.msra.mxu0 0.0
      %651 = vmatprep.subr.mxu0 0.0
      %652 = vmatpush1.msra.mxu0 0.0
      %653 = vmatprep.subr.mxu0 0.0
      %654 = vmatpush1.msra.mxu0 0.0
      %655 = vmatprep.subr.mxu0 0.0
      %656 = vmatpush1.msra.mxu0 0.0
      %657 = vmatprep.subr.mxu0 0.0
      %658 = vmatpush1.msra.mxu0 0.0
      %659 = vmatprep.subr.mxu0 0.0
      %660 = vmatpush1.msra.mxu0 0.0
      %661 = vmatprep.subr.mxu0 0.0
      %662 = vmatpush1.msra.mxu0 0.0
      %663 = vmatprep.subr.mxu0 0.0
      %664 = vmatpush1.msra.mxu0 0.0
      %665 = vmatprep.subr.mxu0 0.0
      %666 = vmatpush1.msra.mxu0 0.0
      %667 = vmatprep.mubr.f32.mxu0 0.0
      %668 = vmatmul.mubr.f32.gmra.mrb[0].mxu0 %v528
      %v669 = vpop.f32.mrb[0].mxu0
      %v670 = vadd.f32 0.0, %v669
      %v671 = vpop.f32.mrb[0].mxu0
      %672 = vmatprep.mubr.f32.mxu0 0.0
      %673 = vmatmul.mubr.f32.gmra.mrb[0].mxu0 %v531
      %v674 = vpop.f32.mrb[0].mxu0
      %v675 = vadd.f32 0.0, %v674
      %v676 = vpop.f32.mrb[0].mxu0
      %677 = vmatprep.mubr.f32.mxu0 0.0
      %678 = vmatmul.mubr.f32.gmra.mrb[0].mxu0 %v534
      %v679 = vpop.f32.mrb[0].mxu0
      %v680 = vpop.f32.mrb[0].mxu0
      %681 = vmatprep.mubr.f32.mxu0 0.0
      %682 = vmatmul.mubr.f32.gmra.mrb[0].mxu0 %v537
      %v683 = vpop.f32.mrb[0].mxu0
      %v684 = vadd.f32 0.0, %v683
      %v685 = vpop.f32.mrb[0].mxu0
      %686 = vmatprep.mubr.f32.mxu0 0.0
      %687 = vmatmul.mubr.f32.gmra.mrb[0].mxu0 %v540
      %v688 = vpop.f32.mrb[0].mxu0
      %v689 = vadd.f32 0.0, %v688
      %v690 = vpop.f32.mrb[0].mxu0
      %691 = vmatprep.mubr.f32.mxu0 0.0
      %692 = vmatmul.mubr.f32.gmra.mrb[0].mxu0 %v543
      %v693 = vpop.f32.mrb[0].mxu0
      %v694 = vpop.f32.mrb[0].mxu0
      %695 = vmatprep.mubr.f32.mxu0 0.0
      %696 = vmatmul.mubr.f32.gmra.mrb[0].mxu0 %v546
      %v697 = vpop.f32.mrb[0].mxu0
      %v698 = vadd.f32 0.0, %v697
      %v699 = vpop.f32.mrb[0].mxu0
      %700 = vmatprep.mubr.f32.mxu0 0.0
      %701 = vmatmul.mubr.f32.gmra.mrb[0].mxu0 %v549
      %v702 = vpop.f32.mrb[0].mxu0
      %v703 = vadd.f32 0.0, %v702
      %v704 = vpop.f32.mrb[0].mxu0
      %705 = vmatprep.mubr.f32.mxu0 0.0
      %706 = vmatmul.mubr.f32.gmra.mrb[0].mxu0 %v552
      %v707 = vpop.f32.mrb[0].mxu0
      %v708 = vpop.f32.mrb[0].mxu0
      %709 = vmatprep.mubr.f32.mxu0 0.0
      %710 = vmatmul.mubr.f32.gmra.mrb[0].mxu0 %v555
      %v711 = vpop.f32.mrb[0].mxu0
      %v712 = vadd.f32 0.0, %v711
      %v713 = vpop.f32.mrb[0].mxu0
      %714 = vmatprep.mubr.f32.mxu0 0.0
      %715 = vmatmul.mubr.f32.gmra.mrb[0].mxu0 %v558
      %v716 = vpop.f32.mrb[0].mxu0
      %v717 = vadd.f32 0.0, %v716
      %v718 = vpop.f32.mrb[0].mxu0
      %719 = vmatprep.mubr.f32.mxu0 0.0
      %720 = vmatmul.mubr.f32.gmra.mrb[0].mxu0 %v561
      %v721 = vpop.f32.mrb[0].mxu0
      %v722 = vpop.f32.mrb[0].mxu0
      %723 = vmatprep.mubr.f32.mxu0 0.0
      %724 = vmatmul.mubr.f32.gmra.mrb[0].mxu0 %v564
      %v725 = vpop.f32.mrb[0].mxu0
      %v726 = vadd.f32 0.0, %v725
      %v727 = vpop.f32.mrb[0].mxu0
      %728 = vmatprep.mubr.f32.mxu0 0.0
      %729 = vmatmul.mubr.f32.gmra.mrb[0].mxu0 %v567
      %v730 = vpop.f32.mrb[0].mxu0
      %v731 = vadd.f32 0.0, %v730
      %v732 = vpop.f32.mrb[0].mxu0
      %733 = vmatprep.mubr.f32.mxu0 0.0
      %734 = vmatmul.mubr.f32.gmra.mrb[0].mxu0 %v570
      %v735 = vpop.f32.mrb[0].mxu0
      %v736 = vpop.f32.mrb[0].mxu0
      %737 = vmatprep.mubr.f32.mxu0 0.0
      %738 = vmatmul.mubr.f32.gmra.mrb[0].mxu0 %v573
      %v739 = vpop.f32.mrb[0].mxu0
      %v740 = vadd.f32 0.0, %v739
      %v741 = vpop.f32.mrb[0].mxu0
      %742 = vmatprep.mubr.f32.mxu0 0.0
      %743 = vmatmul.mubr.f32.gmra.mrb[0].mxu0 %v576
      %v744 = vpop.f32.mrb[0].mxu0
      %v745 = vadd.f32 0.0, %v744
      %v746 = vpop.f32.mrb[0].mxu0
      %747 = vmatprep.mubr.f32.mxu0 0.0
      %748 = vmatmul.mubr.f32.gmra.mrb[0].mxu0 %v579
      %v749 = vpop.f32.mrb[0].mxu0
      %v750 = vpop.f32.mrb[0].mxu0
      %751 = vmatprep.mubr.f32.mxu0 0.0
      %752 = vmatmul.mubr.f32.gmra.mrb[0].mxu0 %v582
      %v753 = vpop.f32.mrb[0].mxu0
      %v754 = vadd.f32 0.0, %v753
      %v755 = vpop.f32.mrb[0].mxu0
      %756 = vmatprep.mubr.f32.mxu0 0.0
      %757 = vmatmul.mubr.f32.gmra.mrb[0].mxu0 %v585
      %v758 = vpop.f32.mrb[0].mxu0
      %v759 = vadd.f32 0.0, %v758
      %v760 = vpop.f32.mrb[0].mxu0
      %761 = vmatprep.mubr.f32.mxu0 0.0
      %762 = vmatmul.mubr.f32.gmra.mrb[0].mxu0 %v588
      %v763 = vpop.f32.mrb[0].mxu0
      %v764 = vpop.f32.mrb[0].mxu0
      %765 = vmatprep.mubr.f32.mxu0 0.0
      %766 = vmatmul.mubr.f32.gmra.mrb[0].mxu0 %v591
      %v767 = vpop.f32.mrb[0].mxu0
      %v768 = vadd.f32 0.0, %v767
      %v769 = vpop.f32.mrb[0].mxu0
      %770 = vmatprep.mubr.f32.mxu0 0.0
      %771 = vmatmul.mubr.f32.gmra.mrb[0].mxu0 %v594
      %v772 = vpop.f32.mrb[0].mxu0
      %v773 = vadd.f32 0.0, %v772
      %v774 = vpop.f32.mrb[0].mxu0
      %775 = vmatprep.mubr.f32.mxu0 0.0
      %776 = vmatmul.mubr.f32.gmra.mrb[0].mxu0 %v597
      %v777 = vpop.f32.mrb[0].mxu0
      %v778 = vpop.f32.mrb[0].mxu0
      %779 = vdwg.mxu0
      %v781 = vsel %vm410, %v472, 0
      %v784 = vsel %vm410, %v473, 0
      %v787 = vsel %vm410, %v474, 0
      %v790 = vsel %vm410, %v475, 0
      %v793 = vsel %vm410, %v476, 0
      %v796 = vsel %vm410, %v477, 0
      %v799 = vsel %vm410, %v478, 0
      %v802 = vsel %vm410, %v479, 0
      %v805 = vsel %vm410, %v480, 0
      %v808 = vsel %vm410, %v481, 0
      %v811 = vsel %vm410, %v482, 0
      %v814 = vsel %vm410, %v483, 0
      %v817 = vsel %vm410, %v484, 0
      %v820 = vsel %vm410, %v485, 0
      %v823 = vsel %vm410, %v486, 0
      %v826 = vsel %vm410, %v487, 0
      %v829 = vsel %vm410, %v488, 0
      %v832 = vsel %vm410, %v489, 0
      %v835 = vsel %vm410, %v490, 0
      %v838 = vsel %vm410, %v491, 0
      %v841 = vsel %vm410, %v492, 0
      %v844 = vsel %vm410, %v493, 0
      %v847 = vsel %vm410, %v494, 0
      %v850 = vsel %vm410, %v495, 0
      %v853 = vsel %vm599, %v496, 0
      %855 = vmatprep.subr.mxu0 0.0
      %856 = vmatpush1.msra.mxu0 %v853
      %857 = vmatprep.subr.mxu0 0.0
      %858 = vmatpush1.msra.mxu0 0.0
      %859 = vmatprep.subr.mxu0 0.0
      %860 = vmatpush1.msra.mxu0 0.0
      %861 = vmatprep.subr.mxu0 0.0
      %862 = vmatpush1.msra.mxu0 0.0
      %863 = vmatprep.subr.mxu0 0.0
      %864 = vmatpush1.msra.mxu0 0.0
      %865 = vmatprep.subr.mxu0 0.0
      %866 = vmatpush1.msra.mxu0 0.0
      %867 = vmatprep.subr.mxu0 0.0
      %868 = vmatpush1.msra.mxu0 0.0
      %869 = vmatprep.subr.mxu0 0.0
      %870 = vmatpush1.msra.mxu0 0.0
      %871 = vmatprep.subr.mxu0 0.0
      %872 = vmatpush1.msra.mxu0 0.0
      %873 = vmatprep.subr.mxu0 0.0
      %874 = vmatpush1.msra.mxu0 0.0
      %875 = vmatprep.subr.mxu0 0.0
      %876 = vmatpush1.msra.mxu0 0.0
      %877 = vmatprep.subr.mxu0 0.0
      %878 = vmatpush1.msra.mxu0 0.0
      %879 = vmatprep.subr.mxu0 0.0
      %880 = vmatpush1.msra.mxu0 0.0
      %881 = vmatprep.subr.mxu0 0.0
      %882 = vmatpush1.msra.mxu0 0.0
      %883 = vmatprep.subr.mxu0 0.0
      %884 = vmatpush1.msra.mxu0 0.0
      %885 = vmatprep.subr.mxu0 0.0
      %886 = vmatpush1.msra.mxu0 0.0
      %887 = vmatprep.subr.mxu0 0.0
      %888 = vmatpush1.msra.mxu0 0.0
      %889 = vmatprep.subr.mxu0 0.0
      %890 = vmatpush1.msra.mxu0 0.0
      %891 = vmatprep.subr.mxu0 0.0
      %892 = vmatpush1.msra.mxu0 0.0
      %893 = vmatprep.subr.mxu0 0.0
      %894 = vmatpush1.msra.mxu0 0.0
      %895 = vmatprep.subr.mxu0 0.0
      %896 = vmatpush1.msra.mxu0 0.0
      %897 = vmatprep.subr.mxu0 0.0
      %898 = vmatpush1.msra.mxu0 0.0
      %899 = vmatprep.subr.mxu0 0.0
      %900 = vmatpush1.msra.mxu0 0.0
      %901 = vmatprep.subr.mxu0 0.0
      %902 = vmatpush1.msra.mxu0 0.0
      %903 = vmatprep.subr.mxu0 0.0
      %904 = vmatpush1.msra.mxu0 0.0
      %905 = vmatprep.subr.mxu0 0.0
      %906 = vmatpush1.msra.mxu0 0.0
      %907 = vmatprep.subr.mxu0 0.0
      %908 = vmatpush1.msra.mxu0 0.0
      %909 = vmatprep.subr.mxu0 0.0
      %910 = vmatpush1.msra.mxu0 0.0
      %911 = vmatprep.subr.mxu0 0.0
      %912 = vmatpush1.msra.mxu0 0.0
      %913 = vmatprep.subr.mxu0 0.0
      %914 = vmatpush1.msra.mxu0 0.0
      %915 = vmatprep.subr.mxu0 0.0
      %916 = vmatpush1.msra.mxu0 0.0
      %917 = vmatprep.subr.mxu0 0.0
      %918 = vmatpush1.msra.mxu0 0.0
      %919 = vmatprep.mubr.f32.mxu0 0.0
      %920 = vmatmul.mubr.f32.gmra.mrb[0].mxu0 %v781
      %v921 = vpop.f32.mrb[0].mxu0
      %v922 = vadd.f32 %v670, %v921
      %v923 = vpop.f32.mrb[0].mxu0
      %924 = vmatprep.mubr.f32.mxu0 0.0
      %925 = vmatmul.mubr.f32.gmra.mrb[0].mxu0 %v784
      %v926 = vpop.f32.mrb[0].mxu0
      %v927 = vadd.f32 %v675, %v926
      %v928 = vpop.f32.mrb[0].mxu0
      %929 = vmatprep.mubr.f32.mxu0 0.0
      %930 = vmatmul.mubr.f32.gmra.mrb[0].mxu0 %v787
      %v931 = vpop.f32.mrb[0].mxu0
      %v932 = vpop.f32.mrb[0].mxu0
      %933 = vmatprep.mubr.f32.mxu0 0.0
      %934 = vmatmul.mubr.f32.gmra.mrb[0].mxu0 %v790
      %v935 = vpop.f32.mrb[0].mxu0
      %v936 = vadd.f32 %v684, %v935
      %v937 = vpop.f32.mrb[0].mxu0
      %938 = vmatprep.mubr.f32.mxu0 0.0
      %939 = vmatmul.mubr.f32.gmra.mrb[0].mxu0 %v793
      %v940 = vpop.f32.mrb[0].mxu0
      %v941 = vadd.f32 %v689, %v940
      %v942 = vpop.f32.mrb[0].mxu0
      %943 = vmatprep.mubr.f32.mxu0 0.0
      %944 = vmatmul.mubr.f32.gmra.mrb[0].mxu0 %v796
      %v945 = vpop.f32.mrb[0].mxu0
      %v946 = vpop.f32.mrb[0].mxu0
      %947 = vmatprep.mubr.f32.mxu0 0.0
      %948 = vmatmul.mubr.f32.gmra.mrb[0].mxu0 %v799
      %v949 = vpop.f32.mrb[0].mxu0
      %v950 = vadd.f32 %v698, %v949
      %v951 = vpop.f32.mrb[0].mxu0
      %952 = vmatprep.mubr.f32.mxu0 0.0
      %953 = vmatmul.mubr.f32.gmra.mrb[0].mxu0 %v802
      %v954 = vpop.f32.mrb[0].mxu0
      %v955 = vadd.f32 %v703, %v954
      %v956 = vpop.f32.mrb[0].mxu0
      %957 = vmatprep.mubr.f32.mxu0 0.0
      %958 = vmatmul.mubr.f32.gmra.mrb[0].mxu0 %v805
      %v959 = vpop.f32.mrb[0].mxu0
      %v960 = vpop.f32.mrb[0].mxu0
      %961 = vmatprep.mubr.f32.mxu0 0.0
      %962 = vmatmul.mubr.f32.gmra.mrb[0].mxu0 %v808
      %v963 = vpop.f32.mrb[0].mxu0
      %v964 = vadd.f32 %v712, %v963
      %v965 = vpop.f32.mrb[0].mxu0
      %966 = vmatprep.mubr.f32.mxu0 0.0
      %967 = vmatmul.mubr.f32.gmra.mrb[0].mxu0 %v811
      %v968 = vpop.f32.mrb[0].mxu0
      %v969 = vadd.f32 %v717, %v968
      %v970 = vpop.f32.mrb[0].mxu0
      %971 = vmatprep.mubr.f32.mxu0 0.0
      %972 = vmatmul.mubr.f32.gmra.mrb[0].mxu0 %v814
      %v973 = vpop.f32.mrb[0].mxu0
      %v974 = vpop.f32.mrb[0].mxu0
      %975 = vmatprep.mubr.f32.mxu0 0.0
      %976 = vmatmul.mubr.f32.gmra.mrb[0].mxu0 %v817
      %v977 = vpop.f32.mrb[0].mxu0
      %v978 = vadd.f32 %v726, %v977
      %v979 = vpop.f32.mrb[0].mxu0
      %980 = vmatprep.mubr.f32.mxu0 0.0
      %981 = vmatmul.mubr.f32.gmra.mrb[0].mxu0 %v820
      %v982 = vpop.f32.mrb[0].mxu0
      %v983 = vadd.f32 %v731, %v982
      %v984 = vpop.f32.mrb[0].mxu0
      %985 = vmatprep.mubr.f32.mxu0 0.0
      %986 = vmatmul.mubr.f32.gmra.mrb[0].mxu0 %v823
      %v987 = vpop.f32.mrb[0].mxu0
      %v988 = vpop.f32.mrb[0].mxu0
      %989 = vmatprep.mubr.f32.mxu0 0.0
      %990 = vmatmul.mubr.f32.gmra.mrb[0].mxu0 %v826
      %v991 = vpop.f32.mrb[0].mxu0
      %v992 = vadd.f32 %v740, %v991
      %v993 = vpop.f32.mrb[0].mxu0
      %994 = vmatprep.mubr.f32.mxu0 0.0
      %995 = vmatmul.mubr.f32.gmra.mrb[0].mxu0 %v829
      %v996 = vpop.f32.mrb[0].mxu0
      %v997 = vadd.f32 %v745, %v996
      %v998 = vpop.f32.mrb[0].mxu0
      %999 = vmatprep.mubr.f32.mxu0 0.0
      %1000 = vmatmul.mubr.f32.gmra.mrb[0].mxu0 %v832
      %v1001 = vpop.f32.mrb[0].mxu0
      %v1002 = vpop.f32.mrb[0].mxu0
      %1003 = vmatprep.mubr.f32.mxu0 0.0
      %1004 = vmatmul.mubr.f32.gmra.mrb[0].mxu0 %v835
      %v1005 = vpop.f32.mrb[0].mxu0
      %v1006 = vadd.f32 %v754, %v1005
      %v1007 = vpop.f32.mrb[0].mxu0
      %1008 = vmatprep.mubr.f32.mxu0 0.0
      %1009 = vmatmul.mubr.f32.gmra.mrb[0].mxu0 %v838
      %v1010 = vpop.f32.mrb[0].mxu0
      %v1011 = vadd.f32 %v759, %v1010
      %v1012 = vpop.f32.mrb[0].mxu0
      %1013 = vmatprep.mubr.f32.mxu0 0.0
      %1014 = vmatmul.mubr.f32.gmra.mrb[0].mxu0 %v841
      %v1015 = vpop.f32.mrb[0].mxu0
      %v1016 = vpop.f32.mrb[0].mxu0
      %1017 = vmatprep.mubr.f32.mxu0 0.0
      %1018 = vmatmul.mubr.f32.gmra.mrb[0].mxu0 %v844
      %v1019 = vpop.f32.mrb[0].mxu0
      %v1020 = vadd.f32 %v768, %v1019
      %v1021 = vpop.f32.mrb[0].mxu0
      %1022 = vmatprep.mubr.f32.mxu0 0.0
      %1023 = vmatmul.mubr.f32.gmra.mrb[0].mxu0 %v847
      %v1024 = vpop.f32.mrb[0].mxu0
      %v1025 = vadd.f32 %v773, %v1024
      %v1026 = vpop.f32.mrb[0].mxu0
      %1027 = vmatprep.mubr.f32.mxu0 0.0
      %1028 = vmatmul.mubr.f32.gmra.mrb[0].mxu0 %v850
      %v1029 = vpop.f32.mrb[0].mxu0
      %v1030 = vpop.f32.mrb[0].mxu0
      %1031 = vdwg.mxu0
      %s1032 = scalar_lea.vmem %s3, 16
      %v1033 = vld [vmem:[%s1032] sm:$0xf]
      %v1035 = vsel %vm599, %v1033, 0
      %1037 = vmatprep.subr.mxu0 0.0
      %1038 = vmatpush1.msra.mxu0 %v1035
      %1039 = vmatprep.subr.mxu0 0.0
      %1040 = vmatpush1.msra.mxu0 0.0
      %1041 = vmatprep.subr.mxu0 0.0
      %1042 = vmatpush1.msra.mxu0 0.0
      %1043 = vmatprep.subr.mxu0 0.0
      %1044 = vmatpush1.msra.mxu0 0.0
      %1045 = vmatprep.subr.mxu0 0.0
      %1046 = vmatpush1.msra.mxu0 0.0
      %1047 = vmatprep.subr.mxu0 0.0
      %1048 = vmatpush1.msra.mxu0 0.0
      %1049 = vmatprep.subr.mxu0 0.0
      %1050 = vmatpush1.msra.mxu0 0.0
      %1051 = vmatprep.subr.mxu0 0.0
      %1052 = vmatpush1.msra.mxu0 0.0
      %1053 = vmatprep.subr.mxu0 0.0
      %1054 = vmatpush1.msra.mxu0 0.0
      %1055 = vmatprep.subr.mxu0 0.0
      %1056 = vmatpush1.msra.mxu0 0.0
      %1057 = vmatprep.subr.mxu0 0.0
      %1058 = vmatpush1.msra.mxu0 0.0
      %1059 = vmatprep.subr.mxu0 0.0
      %1060 = vmatpush1.msra.mxu0 0.0
      %1061 = vmatprep.subr.mxu0 0.0
      %1062 = vmatpush1.msra.mxu0 0.0
      %1063 = vmatprep.subr.mxu0 0.0
      %1064 = vmatpush1.msra.mxu0 0.0
      %1065 = vmatprep.subr.mxu0 0.0
      %1066 = vmatpush1.msra.mxu0 0.0
      %1067 = vmatprep.subr.mxu0 0.0
      %1068 = vmatpush1.msra.mxu0 0.0
      %1069 = vmatprep.subr.mxu0 0.0
      %1070 = vmatpush1.msra.mxu0 0.0
      %1071 = vmatprep.subr.mxu0 0.0
      %1072 = vmatpush1.msra.mxu0 0.0
      %1073 = vmatprep.subr.mxu0 0.0
      %1074 = vmatpush1.msra.mxu0 0.0
      %1075 = vmatprep.subr.mxu0 0.0
      %1076 = vmatpush1.msra.mxu0 0.0
      %1077 = vmatprep.subr.mxu0 0.0
      %1078 = vmatpush1.msra.mxu0 0.0
      %1079 = vmatprep.subr.mxu0 0.0
      %1080 = vmatpush1.msra.mxu0 0.0
      %1081 = vmatprep.subr.mxu0 0.0
      %1082 = vmatpush1.msra.mxu0 0.0
      %1083 = vmatprep.subr.mxu0 0.0
      %1084 = vmatpush1.msra.mxu0 0.0
      %1085 = vmatprep.subr.mxu0 0.0
      %1086 = vmatpush1.msra.mxu0 0.0
      %1087 = vmatprep.subr.mxu0 0.0
      %1088 = vmatpush1.msra.mxu0 0.0
      %1089 = vmatprep.subr.mxu0 0.0
      %1090 = vmatpush1.msra.mxu0 0.0
      %1091 = vmatprep.subr.mxu0 0.0
      %1092 = vmatpush1.msra.mxu0 0.0
      %1093 = vmatprep.subr.mxu0 0.0
      %1094 = vmatpush1.msra.mxu0 0.0
      %1095 = vmatprep.subr.mxu0 0.0
      %1096 = vmatpush1.msra.mxu0 0.0
      %1097 = vmatprep.subr.mxu0 0.0
      %1098 = vmatpush1.msra.mxu0 0.0
      %1099 = vmatprep.subr.mxu0 0.0
      %1100 = vmatpush1.msra.mxu0 0.0
      %1101 = vmatprep.mubr.f32.mxu0 0.0
      %1102 = vmatmul.mubr.f32.gmra.mrb[0].mxu0 %v528
      %v1103 = vpop.f32.mrb[0].mxu0
      %v1104 = vadd.f32 0.0, %v1103
      %v1105 = vpop.f32.mrb[0].mxu0
      %1106 = vmatprep.mubr.f32.mxu0 0.0
      %1107 = vmatmul.mubr.f32.gmra.mrb[0].mxu0 %v531
      %v1108 = vpop.f32.mrb[0].mxu0
      %v1109 = vadd.f32 0.0, %v1108
      %v1110 = vpop.f32.mrb[0].mxu0
      %1111 = vmatprep.mubr.f32.mxu0 0.0
      %1112 = vmatmul.mubr.f32.gmra.mrb[0].mxu0 %v534
      %v1113 = vpop.f32.mrb[0].mxu0
      %v1114 = vadd.f32 0.0, %v1113
      %v1115 = vpop.f32.mrb[0].mxu0
      %1116 = vmatprep.mubr.f32.mxu0 0.0
      %1117 = vmatmul.mubr.f32.gmra.mrb[0].mxu0 %v537
      %v1118 = vpop.f32.mrb[0].mxu0
      %v1119 = vadd.f32 0.0, %v1118
      %v1120 = vpop.f32.mrb[0].mxu0
      %1121 = vmatprep.mubr.f32.mxu0 0.0
      %1122 = vmatmul.mubr.f32.gmra.mrb[0].mxu0 %v540
      %v1123 = vpop.f32.mrb[0].mxu0
      %v1124 = vadd.f32 0.0, %v1123
      %v1125 = vpop.f32.mrb[0].mxu0
      %1126 = vmatprep.mubr.f32.mxu0 0.0
      %1127 = vmatmul.mubr.f32.gmra.mrb[0].mxu0 %v543
      %v1128 = vpop.f32.mrb[0].mxu0
      %v1129 = vadd.f32 0.0, %v1128
      %v1130 = vpop.f32.mrb[0].mxu0
      %1131 = vmatprep.mubr.f32.mxu0 0.0
      %1132 = vmatmul.mubr.f32.gmra.mrb[0].mxu0 %v546
      %v1133 = vpop.f32.mrb[0].mxu0
      %v1134 = vadd.f32 0.0, %v1133
      %v1135 = vpop.f32.mrb[0].mxu0
      %1136 = vmatprep.mubr.f32.mxu0 0.0
      %1137 = vmatmul.mubr.f32.gmra.mrb[0].mxu0 %v549
      %v1138 = vpop.f32.mrb[0].mxu0
      %v1139 = vadd.f32 0.0, %v1138
      %v1140 = vpop.f32.mrb[0].mxu0
      %1141 = vmatprep.mubr.f32.mxu0 0.0
      %1142 = vmatmul.mubr.f32.gmra.mrb[0].mxu0 %v552
      %v1143 = vpop.f32.mrb[0].mxu0
      %v1144 = vadd.f32 0.0, %v1143
      %v1145 = vpop.f32.mrb[0].mxu0
      %1146 = vmatprep.mubr.f32.mxu0 0.0
      %1147 = vmatmul.mubr.f32.gmra.mrb[0].mxu0 %v555
      %v1148 = vpop.f32.mrb[0].mxu0
      %v1149 = vadd.f32 0.0, %v1148
      %v1150 = vpop.f32.mrb[0].mxu0
      %1151 = vmatprep.mubr.f32.mxu0 0.0
      %1152 = vmatmul.mubr.f32.gmra.mrb[0].mxu0 %v558
      %v1153 = vpop.f32.mrb[0].mxu0
      %v1154 = vadd.f32 0.0, %v1153
      %v1155 = vpop.f32.mrb[0].mxu0
      %1156 = vmatprep.mubr.f32.mxu0 0.0
      %1157 = vmatmul.mubr.f32.gmra.mrb[0].mxu0 %v561
      %v1158 = vpop.f32.mrb[0].mxu0
      %v1159 = vadd.f32 0.0, %v1158
      %v1160 = vpop.f32.mrb[0].mxu0
      %1161 = vmatprep.mubr.f32.mxu0 0.0
      %1162 = vmatmul.mubr.f32.gmra.mrb[0].mxu0 %v564
      %v1163 = vpop.f32.mrb[0].mxu0
      %v1164 = vadd.f32 0.0, %v1163
      %v1165 = vpop.f32.mrb[0].mxu0
      %1166 = vmatprep.mubr.f32.mxu0 0.0
      %1167 = vmatmul.mubr.f32.gmra.mrb[0].mxu0 %v567
      %v1168 = vpop.f32.mrb[0].mxu0
      %v1169 = vadd.f32 0.0, %v1168
      %v1170 = vpop.f32.mrb[0].mxu0
      %1171 = vmatprep.mubr.f32.mxu0 0.0
      %1172 = vmatmul.mubr.f32.gmra.mrb[0].mxu0 %v570
      %v1173 = vpop.f32.mrb[0].mxu0
      %v1174 = vadd.f32 0.0, %v1173
      %v1175 = vpop.f32.mrb[0].mxu0
      %1176 = vmatprep.mubr.f32.mxu0 0.0
      %1177 = vmatmul.mubr.f32.gmra.mrb[0].mxu0 %v573
      %v1178 = vpop.f32.mrb[0].mxu0
      %v1179 = vadd.f32 0.0, %v1178
      %v1180 = vpop.f32.mrb[0].mxu0
      %1181 = vmatprep.mubr.f32.mxu0 0.0
      %1182 = vmatmul.mubr.f32.gmra.mrb[0].mxu0 %v576
      %v1183 = vpop.f32.mrb[0].mxu0
      %v1184 = vadd.f32 0.0, %v1183
      %v1185 = vpop.f32.mrb[0].mxu0
      %1186 = vmatprep.mubr.f32.mxu0 0.0
      %1187 = vmatmul.mubr.f32.gmra.mrb[0].mxu0 %v579
      %v1188 = vpop.f32.mrb[0].mxu0
      %v1189 = vadd.f32 0.0, %v1188
      %v1190 = vpop.f32.mrb[0].mxu0
      %1191 = vmatprep.mubr.f32.mxu0 0.0
      %1192 = vmatmul.mubr.f32.gmra.mrb[0].mxu0 %v582
      %v1193 = vpop.f32.mrb[0].mxu0
      %v1194 = vadd.f32 0.0, %v1193
      %v1195 = vpop.f32.mrb[0].mxu0
      %1196 = vmatprep.mubr.f32.mxu0 0.0
      %1197 = vmatmul.mubr.f32.gmra.mrb[0].mxu0 %v585
      %v1198 = vpop.f32.mrb[0].mxu0
      %v1199 = vadd.f32 0.0, %v1198
      %v1200 = vpop.f32.mrb[0].mxu0
      %1201 = vmatprep.mubr.f32.mxu0 0.0
      %1202 = vmatmul.mubr.f32.gmra.mrb[0].mxu0 %v588
      %v1203 = vpop.f32.mrb[0].mxu0
      %v1204 = vadd.f32 0.0, %v1203
      %v1205 = vpop.f32.mrb[0].mxu0
      %1206 = vmatprep.mubr.f32.mxu0 0.0
      %1207 = vmatmul.mubr.f32.gmra.mrb[0].mxu0 %v591
      %v1208 = vpop.f32.mrb[0].mxu0
      %v1209 = vadd.f32 0.0, %v1208
      %v1210 = vpop.f32.mrb[0].mxu0
      %1211 = vmatprep.mubr.f32.mxu0 0.0
      %1212 = vmatmul.mubr.f32.gmra.mrb[0].mxu0 %v594
      %v1213 = vpop.f32.mrb[0].mxu0
      %v1214 = vadd.f32 0.0, %v1213
      %v1215 = vpop.f32.mrb[0].mxu0
      %1216 = vmatprep.mubr.f32.mxu0 0.0
      %1217 = vmatmul.mubr.f32.gmra.mrb[0].mxu0 %v597
      %v1218 = vpop.f32.mrb[0].mxu0
      %v1219 = vadd.f32 0.0, %v1218
      %v1220 = vpop.f32.mrb[0].mxu0
      %1221 = vdwg.mxu0
      %v1223 = vsel %vm599, %v498, 0
      %1225 = vmatprep.subr.mxu0 0.0
      %1226 = vmatpush1.msra.mxu0 %v1223
      %1227 = vmatprep.subr.mxu0 0.0
      %1228 = vmatpush1.msra.mxu0 0.0
      %1229 = vmatprep.subr.mxu0 0.0
      %1230 = vmatpush1.msra.mxu0 0.0
      %1231 = vmatprep.subr.mxu0 0.0
      %1232 = vmatpush1.msra.mxu0 0.0
      %1233 = vmatprep.subr.mxu0 0.0
      %1234 = vmatpush1.msra.mxu0 0.0
      %1235 = vmatprep.subr.mxu0 0.0
      %1236 = vmatpush1.msra.mxu0 0.0
      %1237 = vmatprep.subr.mxu0 0.0
      %1238 = vmatpush1.msra.mxu0 0.0
      %1239 = vmatprep.subr.mxu0 0.0
      %1240 = vmatpush1.msra.mxu0 0.0
      %1241 = vmatprep.subr.mxu0 0.0
      %1242 = vmatpush1.msra.mxu0 0.0
      %1243 = vmatprep.subr.mxu0 0.0
      %1244 = vmatpush1.msra.mxu0 0.0
      %1245 = vmatprep.subr.mxu0 0.0
      %1246 = vmatpush1.msra.mxu0 0.0
      %1247 = vmatprep.subr.mxu0 0.0
      %1248 = vmatpush1.msra.mxu0 0.0
      %1249 = vmatprep.subr.mxu0 0.0
      %1250 = vmatpush1.msra.mxu0 0.0
      %1251 = vmatprep.subr.mxu0 0.0
      %1252 = vmatpush1.msra.mxu0 0.0
      %1253 = vmatprep.subr.mxu0 0.0
      %1254 = vmatpush1.msra.mxu0 0.0
      %1255 = vmatprep.subr.mxu0 0.0
      %1256 = vmatpush1.msra.mxu0 0.0
      %1257 = vmatprep.subr.mxu0 0.0
      %1258 = vmatpush1.msra.mxu0 0.0
      %1259 = vmatprep.subr.mxu0 0.0
      %1260 = vmatpush1.msra.mxu0 0.0
      %1261 = vmatprep.subr.mxu0 0.0
      %1262 = vmatpush1.msra.mxu0 0.0
      %1263 = vmatprep.subr.mxu0 0.0
      %1264 = vmatpush1.msra.mxu0 0.0
      %1265 = vmatprep.subr.mxu0 0.0
      %1266 = vmatpush1.msra.mxu0 0.0
      %1267 = vmatprep.subr.mxu0 0.0
      %1268 = vmatpush1.msra.mxu0 0.0
      %1269 = vmatprep.subr.mxu0 0.0
      %1270 = vmatpush1.msra.mxu0 0.0
      %1271 = vmatprep.subr.mxu0 0.0
      %1272 = vmatpush1.msra.mxu0 0.0
      %1273 = vmatprep.subr.mxu0 0.0
      %1274 = vmatpush1.msra.mxu0 0.0
      %1275 = vmatprep.subr.mxu0 0.0
      %1276 = vmatpush1.msra.mxu0 0.0
      %1277 = vmatprep.subr.mxu0 0.0
      %1278 = vmatpush1.msra.mxu0 0.0
      %1279 = vmatprep.subr.mxu0 0.0
      %1280 = vmatpush1.msra.mxu0 0.0
      %1281 = vmatprep.subr.mxu0 0.0
      %1282 = vmatpush1.msra.mxu0 0.0
      %1283 = vmatprep.subr.mxu0 0.0
      %1284 = vmatpush1.msra.mxu0 0.0
      %1285 = vmatprep.subr.mxu0 0.0
      %1286 = vmatpush1.msra.mxu0 0.0
      %1287 = vmatprep.subr.mxu0 0.0
      %1288 = vmatpush1.msra.mxu0 0.0
      %1289 = vmatprep.mubr.f32.mxu0 0.0
      %1290 = vmatmul.mubr.f32.gmra.mrb[0].mxu0 %v781
      %v1291 = vpop.f32.mrb[0].mxu0
      %v1292 = vadd.f32 %v1104, %v1291
      %v1293 = vpop.f32.mrb[0].mxu0
      %1294 = vmatprep.mubr.f32.mxu0 0.0
      %1295 = vmatmul.mubr.f32.gmra.mrb[0].mxu0 %v784
      %v1296 = vpop.f32.mrb[0].mxu0
      %v1297 = vadd.f32 %v1109, %v1296
      %v1298 = vpop.f32.mrb[0].mxu0
      %1299 = vmatprep.mubr.f32.mxu0 0.0
      %1300 = vmatmul.mubr.f32.gmra.mrb[0].mxu0 %v787
      %v1301 = vpop.f32.mrb[0].mxu0
      %v1302 = vadd.f32 %v1114, %v1301
      %v1303 = vpop.f32.mrb[0].mxu0
      %1304 = vmatprep.mubr.f32.mxu0 0.0
      %1305 = vmatmul.mubr.f32.gmra.mrb[0].mxu0 %v790
      %v1306 = vpop.f32.mrb[0].mxu0
      %v1307 = vadd.f32 %v1119, %v1306
      %v1308 = vpop.f32.mrb[0].mxu0
      %1309 = vmatprep.mubr.f32.mxu0 0.0
      %1310 = vmatmul.mubr.f32.gmra.mrb[0].mxu0 %v793
      %v1311 = vpop.f32.mrb[0].mxu0
      %v1312 = vadd.f32 %v1124, %v1311
      %v1313 = vpop.f32.mrb[0].mxu0
      %1314 = vmatprep.mubr.f32.mxu0 0.0
      %1315 = vmatmul.mubr.f32.gmra.mrb[0].mxu0 %v796
      %v1316 = vpop.f32.mrb[0].mxu0
      %v1317 = vadd.f32 %v1129, %v1316
      %v1318 = vpop.f32.mrb[0].mxu0
      %1319 = vmatprep.mubr.f32.mxu0 0.0
      %1320 = vmatmul.mubr.f32.gmra.mrb[0].mxu0 %v799
      %v1321 = vpop.f32.mrb[0].mxu0
      %v1322 = vadd.f32 %v1134, %v1321
      %v1323 = vpop.f32.mrb[0].mxu0
      %1324 = vmatprep.mubr.f32.mxu0 0.0
      %1325 = vmatmul.mubr.f32.gmra.mrb[0].mxu0 %v802
      %v1326 = vpop.f32.mrb[0].mxu0
      %v1327 = vadd.f32 %v1139, %v1326
      %v1328 = vpop.f32.mrb[0].mxu0
      %1329 = vmatprep.mubr.f32.mxu0 0.0
      %1330 = vmatmul.mubr.f32.gmra.mrb[0].mxu0 %v805
      %v1331 = vpop.f32.mrb[0].mxu0
      %v1332 = vadd.f32 %v1144, %v1331
      %v1333 = vpop.f32.mrb[0].mxu0
      %1334 = vmatprep.mubr.f32.mxu0 0.0
      %1335 = vmatmul.mubr.f32.gmra.mrb[0].mxu0 %v808
      %v1336 = vpop.f32.mrb[0].mxu0
      %v1337 = vadd.f32 %v1149, %v1336
      %v1338 = vpop.f32.mrb[0].mxu0
      %1339 = vmatprep.mubr.f32.mxu0 0.0
      %1340 = vmatmul.mubr.f32.gmra.mrb[0].mxu0 %v811
      %v1341 = vpop.f32.mrb[0].mxu0
      %v1342 = vadd.f32 %v1154, %v1341
      %v1343 = vpop.f32.mrb[0].mxu0
      %1344 = vmatprep.mubr.f32.mxu0 0.0
      %1345 = vmatmul.mubr.f32.gmra.mrb[0].mxu0 %v814
      %v1346 = vpop.f32.mrb[0].mxu0
      %v1347 = vadd.f32 %v1159, %v1346
      %v1348 = vpop.f32.mrb[0].mxu0
      %1349 = vmatprep.mubr.f32.mxu0 0.0
      %1350 = vmatmul.mubr.f32.gmra.mrb[0].mxu0 %v817
      %v1351 = vpop.f32.mrb[0].mxu0
      %v1352 = vadd.f32 %v1164, %v1351
      %v1353 = vpop.f32.mrb[0].mxu0
      %1354 = vmatprep.mubr.f32.mxu0 0.0
      %1355 = vmatmul.mubr.f32.gmra.mrb[0].mxu0 %v820
      %v1356 = vpop.f32.mrb[0].mxu0
      %v1357 = vadd.f32 %v1169, %v1356
      %v1358 = vpop.f32.mrb[0].mxu0
      %1359 = vmatprep.mubr.f32.mxu0 0.0
      %1360 = vmatmul.mubr.f32.gmra.mrb[0].mxu0 %v823
      %v1361 = vpop.f32.mrb[0].mxu0
      %v1362 = vadd.f32 %v1174, %v1361
      %v1363 = vpop.f32.mrb[0].mxu0
      %1364 = vmatprep.mubr.f32.mxu0 0.0
      %1365 = vmatmul.mubr.f32.gmra.mrb[0].mxu0 %v826
      %v1366 = vpop.f32.mrb[0].mxu0
      %v1367 = vadd.f32 %v1179, %v1366
      %v1368 = vpop.f32.mrb[0].mxu0
      %1369 = vmatprep.mubr.f32.mxu0 0.0
      %1370 = vmatmul.mubr.f32.gmra.mrb[0].mxu0 %v829
      %v1371 = vpop.f32.mrb[0].mxu0
      %v1372 = vadd.f32 %v1184, %v1371
      %v1373 = vpop.f32.mrb[0].mxu0
      %1374 = vmatprep.mubr.f32.mxu0 0.0
      %1375 = vmatmul.mubr.f32.gmra.mrb[0].mxu0 %v832
      %v1376 = vpop.f32.mrb[0].mxu0
      %v1377 = vadd.f32 %v1189, %v1376
      %v1378 = vpop.f32.mrb[0].mxu0
      %1379 = vmatprep.mubr.f32.mxu0 0.0
      %1380 = vmatmul.mubr.f32.gmra.mrb[0].mxu0 %v835
      %v1381 = vpop.f32.mrb[0].mxu0
      %v1382 = vadd.f32 %v1194, %v1381
      %v1383 = vpop.f32.mrb[0].mxu0
      %1384 = vmatprep.mubr.f32.mxu0 0.0
      %1385 = vmatmul.mubr.f32.gmra.mrb[0].mxu0 %v838
      %v1386 = vpop.f32.mrb[0].mxu0
      %v1387 = vadd.f32 %v1199, %v1386
      %v1388 = vpop.f32.mrb[0].mxu0
      %1389 = vmatprep.mubr.f32.mxu0 0.0
      %1390 = vmatmul.mubr.f32.gmra.mrb[0].mxu0 %v841
      %v1391 = vpop.f32.mrb[0].mxu0
      %v1392 = vadd.f32 %v1204, %v1391
      %v1393 = vpop.f32.mrb[0].mxu0
      %1394 = vmatprep.mubr.f32.mxu0 0.0
      %1395 = vmatmul.mubr.f32.gmra.mrb[0].mxu0 %v844
      %v1396 = vpop.f32.mrb[0].mxu0
      %v1397 = vadd.f32 %v1209, %v1396
      %v1398 = vpop.f32.mrb[0].mxu0
      %1399 = vmatprep.mubr.f32.mxu0 0.0
      %1400 = vmatmul.mubr.f32.gmra.mrb[0].mxu0 %v847
      %v1401 = vpop.f32.mrb[0].mxu0
      %v1402 = vadd.f32 %v1214, %v1401
      %v1403 = vpop.f32.mrb[0].mxu0
      %1404 = vmatprep.mubr.f32.mxu0 0.0
      %1405 = vmatmul.mubr.f32.gmra.mrb[0].mxu0 %v850
      %v1406 = vpop.f32.mrb[0].mxu0
      %v1407 = vadd.f32 %v1219, %v1406
      %v1408 = vpop.f32.mrb[0].mxu0
      %1409 = vdwg.mxu0
      %s1410 = scalar_lea.vmem %s3, 20
      %v1411 = vld [vmem:[%s1410] sm:$0xf]
      %v1413 = vsel %vm599, %v1411, 0
      %1415 = vmatprep.subr.mxu0 0.0
      %1416 = vmatpush1.msra.mxu0 %v1413
      %1417 = vmatprep.subr.mxu0 0.0
      %1418 = vmatpush1.msra.mxu0 0.0
      %1419 = vmatprep.subr.mxu0 0.0
      %1420 = vmatpush1.msra.mxu0 0.0
      %1421 = vmatprep.subr.mxu0 0.0
      %1422 = vmatpush1.msra.mxu0 0.0
      %1423 = vmatprep.subr.mxu0 0.0
      %1424 = vmatpush1.msra.mxu0 0.0
      %1425 = vmatprep.subr.mxu0 0.0
      %1426 = vmatpush1.msra.mxu0 0.0
      %1427 = vmatprep.subr.mxu0 0.0
      %1428 = vmatpush1.msra.mxu0 0.0
      %1429 = vmatprep.subr.mxu0 0.0
      %1430 = vmatpush1.msra.mxu0 0.0
      %1431 = vmatprep.subr.mxu0 0.0
      %1432 = vmatpush1.msra.mxu0 0.0
      %1433 = vmatprep.subr.mxu0 0.0
      %1434 = vmatpush1.msra.mxu0 0.0
      %1435 = vmatprep.subr.mxu0 0.0
      %1436 = vmatpush1.msra.mxu0 0.0
      %1437 = vmatprep.subr.mxu0 0.0
      %1438 = vmatpush1.msra.mxu0 0.0
      %1439 = vmatprep.subr.mxu0 0.0
      %1440 = vmatpush1.msra.mxu0 0.0
      %1441 = vmatprep.subr.mxu0 0.0
      %1442 = vmatpush1.msra.mxu0 0.0
      %1443 = vmatprep.subr.mxu0 0.0
      %1444 = vmatpush1.msra.mxu0 0.0
      %1445 = vmatprep.subr.mxu0 0.0
      %1446 = vmatpush1.msra.mxu0 0.0
      %1447 = vmatprep.subr.mxu0 0.0
      %1448 = vmatpush1.msra.mxu0 0.0
      %1449 = vmatprep.subr.mxu0 0.0
      %1450 = vmatpush1.msra.mxu0 0.0
      %1451 = vmatprep.subr.mxu0 0.0
      %1452 = vmatpush1.msra.mxu0 0.0
      %1453 = vmatprep.subr.mxu0 0.0
      %1454 = vmatpush1.msra.mxu0 0.0
      %1455 = vmatprep.subr.mxu0 0.0
      %1456 = vmatpush1.msra.mxu0 0.0
      %1457 = vmatprep.subr.mxu0 0.0
      %1458 = vmatpush1.msra.mxu0 0.0
      %1459 = vmatprep.subr.mxu0 0.0
      %1460 = vmatpush1.msra.mxu0 0.0
      %1461 = vmatprep.subr.mxu0 0.0
      %1462 = vmatpush1.msra.mxu0 0.0
      %1463 = vmatprep.subr.mxu0 0.0
      %1464 = vmatpush1.msra.mxu0 0.0
      %1465 = vmatprep.subr.mxu0 0.0
      %1466 = vmatpush1.msra.mxu0 0.0
      %1467 = vmatprep.subr.mxu0 0.0
      %1468 = vmatpush1.msra.mxu0 0.0
      %1469 = vmatprep.subr.mxu0 0.0
      %1470 = vmatpush1.msra.mxu0 0.0
      %1471 = vmatprep.subr.mxu0 0.0
      %1472 = vmatpush1.msra.mxu0 0.0
      %1473 = vmatprep.subr.mxu0 0.0
      %1474 = vmatpush1.msra.mxu0 0.0
      %1475 = vmatprep.subr.mxu0 0.0
      %1476 = vmatpush1.msra.mxu0 0.0
      %1477 = vmatprep.subr.mxu0 0.0
      %1478 = vmatpush1.msra.mxu0 0.0
      %1479 = vmatprep.mubr.f32.mxu0 0.0
      %1480 = vmatmul.mubr.f32.gmra.mrb[0].mxu0 %v528
      %v1481 = vpop.f32.mrb[0].mxu0
      %v1482 = vadd.f32 0.0, %v1481
      %v1483 = vpop.f32.mrb[0].mxu0
      %1484 = vmatprep.mubr.f32.mxu0 0.0
      %1485 = vmatmul.mubr.f32.gmra.mrb[0].mxu0 %v531
      %v1486 = vpop.f32.mrb[0].mxu0
      %v1487 = vadd.f32 0.0, %v1486
      %v1488 = vpop.f32.mrb[0].mxu0
      %1489 = vmatprep.mubr.f32.mxu0 0.0
      %1490 = vmatmul.mubr.f32.gmra.mrb[0].mxu0 %v534
      %v1491 = vpop.f32.mrb[0].mxu0
      %v1492 = vadd.f32 0.0, %v1491
      %v1493 = vpop.f32.mrb[0].mxu0
      %1494 = vmatprep.mubr.f32.mxu0 0.0
      %1495 = vmatmul.mubr.f32.gmra.mrb[0].mxu0 %v537
      %v1496 = vpop.f32.mrb[0].mxu0
      %v1497 = vadd.f32 0.0, %v1496
      %v1498 = vpop.f32.mrb[0].mxu0
      %1499 = vmatprep.mubr.f32.mxu0 0.0
      %1500 = vmatmul.mubr.f32.gmra.mrb[0].mxu0 %v540
      %v1501 = vpop.f32.mrb[0].mxu0
      %v1502 = vadd.f32 0.0, %v1501
      %v1503 = vpop.f32.mrb[0].mxu0
      %1504 = vmatprep.mubr.f32.mxu0 0.0
      %1505 = vmatmul.mubr.f32.gmra.mrb[0].mxu0 %v543
      %v1506 = vpop.f32.mrb[0].mxu0
      %v1507 = vadd.f32 0.0, %v1506
      %v1508 = vpop.f32.mrb[0].mxu0
      %1509 = vmatprep.mubr.f32.mxu0 0.0
      %1510 = vmatmul.mubr.f32.gmra.mrb[0].mxu0 %v546
      %v1511 = vpop.f32.mrb[0].mxu0
      %v1512 = vadd.f32 0.0, %v1511
      %v1513 = vpop.f32.mrb[0].mxu0
      %1514 = vmatprep.mubr.f32.mxu0 0.0
      %1515 = vmatmul.mubr.f32.gmra.mrb[0].mxu0 %v549
      %v1516 = vpop.f32.mrb[0].mxu0
      %v1517 = vadd.f32 0.0, %v1516
      %v1518 = vpop.f32.mrb[0].mxu0
      %1519 = vmatprep.mubr.f32.mxu0 0.0
      %1520 = vmatmul.mubr.f32.gmra.mrb[0].mxu0 %v552
      %v1521 = vpop.f32.mrb[0].mxu0
      %v1522 = vadd.f32 0.0, %v1521
      %v1523 = vpop.f32.mrb[0].mxu0
      %1524 = vmatprep.mubr.f32.mxu0 0.0
      %1525 = vmatmul.mubr.f32.gmra.mrb[0].mxu0 %v555
      %v1526 = vpop.f32.mrb[0].mxu0
      %v1527 = vadd.f32 0.0, %v1526
      %v1528 = vpop.f32.mrb[0].mxu0
      %1529 = vmatprep.mubr.f32.mxu0 0.0
      %1530 = vmatmul.mubr.f32.gmra.mrb[0].mxu0 %v558
      %v1531 = vpop.f32.mrb[0].mxu0
      %v1532 = vadd.f32 0.0, %v1531
      %v1533 = vpop.f32.mrb[0].mxu0
      %1534 = vmatprep.mubr.f32.mxu0 0.0
      %1535 = vmatmul.mubr.f32.gmra.mrb[0].mxu0 %v561
      %v1536 = vpop.f32.mrb[0].mxu0
      %v1537 = vadd.f32 0.0, %v1536
      %v1538 = vpop.f32.mrb[0].mxu0
      %1539 = vmatprep.mubr.f32.mxu0 0.0
      %1540 = vmatmul.mubr.f32.gmra.mrb[0].mxu0 %v564
      %v1541 = vpop.f32.mrb[0].mxu0
      %v1542 = vadd.f32 0.0, %v1541
      %v1543 = vpop.f32.mrb[0].mxu0
      %1544 = vmatprep.mubr.f32.mxu0 0.0
      %1545 = vmatmul.mubr.f32.gmra.mrb[0].mxu0 %v567
      %v1546 = vpop.f32.mrb[0].mxu0
      %v1547 = vadd.f32 0.0, %v1546
      %v1548 = vpop.f32.mrb[0].mxu0
      %1549 = vmatprep.mubr.f32.mxu0 0.0
      %1550 = vmatmul.mubr.f32.gmra.mrb[0].mxu0 %v570
      %v1551 = vpop.f32.mrb[0].mxu0
      %v1552 = vadd.f32 0.0, %v1551
      %v1553 = vpop.f32.mrb[0].mxu0
      %1554 = vmatprep.mubr.f32.mxu0 0.0
      %1555 = vmatmul.mubr.f32.gmra.mrb[0].mxu0 %v573
      %v1556 = vpop.f32.mrb[0].mxu0
      %v1557 = vadd.f32 0.0, %v1556
      %v1558 = vpop.f32.mrb[0].mxu0
      %1559 = vmatprep.mubr.f32.mxu0 0.0
      %1560 = vmatmul.mubr.f32.gmra.mrb[0].mxu0 %v576
      %v1561 = vpop.f32.mrb[0].mxu0
      %v1562 = vadd.f32 0.0, %v1561
      %v1563 = vpop.f32.mrb[0].mxu0
      %1564 = vmatprep.mubr.f32.mxu0 0.0
      %1565 = vmatmul.mubr.f32.gmra.mrb[0].mxu0 %v579
      %v1566 = vpop.f32.mrb[0].mxu0
      %v1567 = vadd.f32 0.0, %v1566
      %v1568 = vpop.f32.mrb[0].mxu0
      %1569 = vmatprep.mubr.f32.mxu0 0.0
      %1570 = vmatmul.mubr.f32.gmra.mrb[0].mxu0 %v582
      %v1571 = vpop.f32.mrb[0].mxu0
      %v1572 = vadd.f32 0.0, %v1571
      %v1573 = vpop.f32.mrb[0].mxu0
      %1574 = vmatprep.mubr.f32.mxu0 0.0
      %1575 = vmatmul.mubr.f32.gmra.mrb[0].mxu0 %v585
      %v1576 = vpop.f32.mrb[0].mxu0
      %v1577 = vadd.f32 0.0, %v1576
      %v1578 = vpop.f32.mrb[0].mxu0
      %1579 = vmatprep.mubr.f32.mxu0 0.0
      %1580 = vmatmul.mubr.f32.gmra.mrb[0].mxu0 %v588
      %v1581 = vpop.f32.mrb[0].mxu0
      %v1582 = vadd.f32 0.0, %v1581
      %v1583 = vpop.f32.mrb[0].mxu0
      %1584 = vmatprep.mubr.f32.mxu0 0.0
      %1585 = vmatmul.mubr.f32.gmra.mrb[0].mxu0 %v591
      %v1586 = vpop.f32.mrb[0].mxu0
      %v1587 = vadd.f32 0.0, %v1586
      %v1588 = vpop.f32.mrb[0].mxu0
      %1589 = vmatprep.mubr.f32.mxu0 0.0
      %1590 = vmatmul.mubr.f32.gmra.mrb[0].mxu0 %v594
      %v1591 = vpop.f32.mrb[0].mxu0
      %v1592 = vadd.f32 0.0, %v1591
      %v1593 = vpop.f32.mrb[0].mxu0
      %1594 = vmatprep.mubr.f32.mxu0 0.0
      %1595 = vmatmul.mubr.f32.gmra.mrb[0].mxu0 %v597
      %v1596 = vpop.f32.mrb[0].mxu0
      %v1597 = vadd.f32 0.0, %v1596
      %v1598 = vpop.f32.mrb[0].mxu0
      %1599 = vdwg.mxu0
      %v1601 = vsel %vm599, %v500, 0
      %1603 = vmatprep.subr.mxu0 0.0
      %1604 = vmatpush1.msra.mxu0 %v1601
      %1605 = vmatprep.subr.mxu0 0.0
      %1606 = vmatpush1.msra.mxu0 0.0
      %1607 = vmatprep.subr.mxu0 0.0
      %1608 = vmatpush1.msra.mxu0 0.0
      %1609 = vmatprep.subr.mxu0 0.0
      %1610 = vmatpush1.msra.mxu0 0.0
      %1611 = vmatprep.subr.mxu0 0.0
      %1612 = vmatpush1.msra.mxu0 0.0
      %1613 = vmatprep.subr.mxu0 0.0
      %1614 = vmatpush1.msra.mxu0 0.0
      %1615 = vmatprep.subr.mxu0 0.0
      %1616 = vmatpush1.msra.mxu0 0.0
      %1617 = vmatprep.subr.mxu0 0.0
      %1618 = vmatpush1.msra.mxu0 0.0
      %1619 = vmatprep.subr.mxu0 0.0
      %1620 = vmatpush1.msra.mxu0 0.0
      %1621 = vmatprep.subr.mxu0 0.0
      %1622 = vmatpush1.msra.mxu0 0.0
      %1623 = vmatprep.subr.mxu0 0.0
      %1624 = vmatpush1.msra.mxu0 0.0
      %1625 = vmatprep.subr.mxu0 0.0
      %1626 = vmatpush1.msra.mxu0 0.0
      %1627 = vmatprep.subr.mxu0 0.0
      %1628 = vmatpush1.msra.mxu0 0.0
      %1629 = vmatprep.subr.mxu0 0.0
      %1630 = vmatpush1.msra.mxu0 0.0
      %1631 = vmatprep.subr.mxu0 0.0
      %1632 = vmatpush1.msra.mxu0 0.0
      %1633 = vmatprep.subr.mxu0 0.0
      %1634 = vmatpush1.msra.mxu0 0.0
      %1635 = vmatprep.subr.mxu0 0.0
      %1636 = vmatpush1.msra.mxu0 0.0
      %1637 = vmatprep.subr.mxu0 0.0
      %1638 = vmatpush1.msra.mxu0 0.0
      %1639 = vmatprep.subr.mxu0 0.0
      %1640 = vmatpush1.msra.mxu0 0.0
      %1641 = vmatprep.subr.mxu0 0.0
      %1642 = vmatpush1.msra.mxu0 0.0
      %1643 = vmatprep.subr.mxu0 0.0
      %1644 = vmatpush1.msra.mxu0 0.0
      %1645 = vmatprep.subr.mxu0 0.0
      %1646 = vmatpush1.msra.mxu0 0.0
      %1647 = vmatprep.subr.mxu0 0.0
      %1648 = vmatpush1.msra.mxu0 0.0
      %1649 = vmatprep.subr.mxu0 0.0
      %1650 = vmatpush1.msra.mxu0 0.0
      %1651 = vmatprep.subr.mxu0 0.0
      %1652 = vmatpush1.msra.mxu0 0.0
      %1653 = vmatprep.subr.mxu0 0.0
      %1654 = vmatpush1.msra.mxu0 0.0
      %1655 = vmatprep.subr.mxu0 0.0
      %1656 = vmatpush1.msra.mxu0 0.0
      %1657 = vmatprep.subr.mxu0 0.0
      %1658 = vmatpush1.msra.mxu0 0.0
      %1659 = vmatprep.subr.mxu0 0.0
      %1660 = vmatpush1.msra.mxu0 0.0
      %1661 = vmatprep.subr.mxu0 0.0
      %1662 = vmatpush1.msra.mxu0 0.0
      %1663 = vmatprep.subr.mxu0 0.0
      %1664 = vmatpush1.msra.mxu0 0.0
      %1665 = vmatprep.subr.mxu0 0.0
      %1666 = vmatpush1.msra.mxu0 0.0
      %1667 = vmatprep.mubr.f32.mxu0 0.0
      %1668 = vmatmul.mubr.f32.gmra.mrb[0].mxu0 %v781
      %v1669 = vpop.f32.mrb[0].mxu0
      %v1670 = vadd.f32 %v1482, %v1669
      %v1671 = vpop.f32.mrb[0].mxu0
      %1672 = vmatprep.mubr.f32.mxu0 0.0
      %1673 = vmatmul.mubr.f32.gmra.mrb[0].mxu0 %v784
      %v1674 = vpop.f32.mrb[0].mxu0
      %v1675 = vadd.f32 %v1487, %v1674
      %v1676 = vpop.f32.mrb[0].mxu0
      %1677 = vmatprep.mubr.f32.mxu0 0.0
      %1678 = vmatmul.mubr.f32.gmra.mrb[0].mxu0 %v787
      %v1679 = vpop.f32.mrb[0].mxu0
      %v1680 = vadd.f32 %v1492, %v1679
      %v1681 = vpop.f32.mrb[0].mxu0
      %1682 = vmatprep.mubr.f32.mxu0 0.0
      %1683 = vmatmul.mubr.f32.gmra.mrb[0].mxu0 %v790
      %v1684 = vpop.f32.mrb[0].mxu0
      %v1685 = vadd.f32 %v1497, %v1684
      %v1686 = vpop.f32.mrb[0].mxu0
      %1687 = vmatprep.mubr.f32.mxu0 0.0
      %1688 = vmatmul.mubr.f32.gmra.mrb[0].mxu0 %v793
      %v1689 = vpop.f32.mrb[0].mxu0
      %v1690 = vadd.f32 %v1502, %v1689
      %v1691 = vpop.f32.mrb[0].mxu0
      %1692 = vmatprep.mubr.f32.mxu0 0.0
      %1693 = vmatmul.mubr.f32.gmra.mrb[0].mxu0 %v796
      %v1694 = vpop.f32.mrb[0].mxu0
      %v1695 = vadd.f32 %v1507, %v1694
      %v1696 = vpop.f32.mrb[0].mxu0
      %1697 = vmatprep.mubr.f32.mxu0 0.0
      %1698 = vmatmul.mubr.f32.gmra.mrb[0].mxu0 %v799
      %v1699 = vpop.f32.mrb[0].mxu0
      %v1700 = vadd.f32 %v1512, %v1699
      %v1701 = vpop.f32.mrb[0].mxu0
      %1702 = vmatprep.mubr.f32.mxu0 0.0
      %1703 = vmatmul.mubr.f32.gmra.mrb[0].mxu0 %v802
      %v1704 = vpop.f32.mrb[0].mxu0
      %v1705 = vadd.f32 %v1517, %v1704
      %v1706 = vpop.f32.mrb[0].mxu0
      %1707 = vmatprep.mubr.f32.mxu0 0.0
      %1708 = vmatmul.mubr.f32.gmra.mrb[0].mxu0 %v805
      %v1709 = vpop.f32.mrb[0].mxu0
      %v1710 = vadd.f32 %v1522, %v1709
      %v1711 = vpop.f32.mrb[0].mxu0
      %1712 = vmatprep.mubr.f32.mxu0 0.0
      %1713 = vmatmul.mubr.f32.gmra.mrb[0].mxu0 %v808
      %v1714 = vpop.f32.mrb[0].mxu0
      %v1715 = vadd.f32 %v1527, %v1714
      %v1716 = vpop.f32.mrb[0].mxu0
      %1717 = vmatprep.mubr.f32.mxu0 0.0
      %1718 = vmatmul.mubr.f32.gmra.mrb[0].mxu0 %v811
      %v1719 = vpop.f32.mrb[0].mxu0
      %v1720 = vadd.f32 %v1532, %v1719
      %v1721 = vpop.f32.mrb[0].mxu0
      %1722 = vmatprep.mubr.f32.mxu0 0.0
      %1723 = vmatmul.mubr.f32.gmra.mrb[0].mxu0 %v814
      %v1724 = vpop.f32.mrb[0].mxu0
      %v1725 = vadd.f32 %v1537, %v1724
      %v1726 = vpop.f32.mrb[0].mxu0
      %1727 = vmatprep.mubr.f32.mxu0 0.0
      %1728 = vmatmul.mubr.f32.gmra.mrb[0].mxu0 %v817
      %v1729 = vpop.f32.mrb[0].mxu0
      %v1730 = vadd.f32 %v1542, %v1729
      %v1731 = vpop.f32.mrb[0].mxu0
      %1732 = vmatprep.mubr.f32.mxu0 0.0
      %1733 = vmatmul.mubr.f32.gmra.mrb[0].mxu0 %v820
      %v1734 = vpop.f32.mrb[0].mxu0
      %v1735 = vadd.f32 %v1547, %v1734
      %v1736 = vpop.f32.mrb[0].mxu0
      %1737 = vmatprep.mubr.f32.mxu0 0.0
      %1738 = vmatmul.mubr.f32.gmra.mrb[0].mxu0 %v823
      %v1739 = vpop.f32.mrb[0].mxu0
      %v1740 = vadd.f32 %v1552, %v1739
      %v1741 = vpop.f32.mrb[0].mxu0
      %1742 = vmatprep.mubr.f32.mxu0 0.0
      %1743 = vmatmul.mubr.f32.gmra.mrb[0].mxu0 %v826
      %v1744 = vpop.f32.mrb[0].mxu0
      %v1745 = vadd.f32 %v1557, %v1744
      %v1746 = vpop.f32.mrb[0].mxu0
      %1747 = vmatprep.mubr.f32.mxu0 0.0
      %1748 = vmatmul.mubr.f32.gmra.mrb[0].mxu0 %v829
      %v1749 = vpop.f32.mrb[0].mxu0
      %v1750 = vadd.f32 %v1562, %v1749
      %v1751 = vpop.f32.mrb[0].mxu0
      %1752 = vmatprep.mubr.f32.mxu0 0.0
      %1753 = vmatmul.mubr.f32.gmra.mrb[0].mxu0 %v832
      %v1754 = vpop.f32.mrb[0].mxu0
      %v1755 = vadd.f32 %v1567, %v1754
      %v1756 = vpop.f32.mrb[0].mxu0
      %1757 = vmatprep.mubr.f32.mxu0 0.0
      %1758 = vmatmul.mubr.f32.gmra.mrb[0].mxu0 %v835
      %v1759 = vpop.f32.mrb[0].mxu0
      %v1760 = vadd.f32 %v1572, %v1759
      %v1761 = vpop.f32.mrb[0].mxu0
      %1762 = vmatprep.mubr.f32.mxu0 0.0
      %1763 = vmatmul.mubr.f32.gmra.mrb[0].mxu0 %v838
      %v1764 = vpop.f32.mrb[0].mxu0
      %v1765 = vadd.f32 %v1577, %v1764
      %v1766 = vpop.f32.mrb[0].mxu0
      %1767 = vmatprep.mubr.f32.mxu0 0.0
      %1768 = vmatmul.mubr.f32.gmra.mrb[0].mxu0 %v841
      %v1769 = vpop.f32.mrb[0].mxu0
      %v1770 = vadd.f32 %v1582, %v1769
      %v1771 = vpop.f32.mrb[0].mxu0
      %1772 = vmatprep.mubr.f32.mxu0 0.0
      %1773 = vmatmul.mubr.f32.gmra.mrb[0].mxu0 %v844
      %v1774 = vpop.f32.mrb[0].mxu0
      %v1775 = vadd.f32 %v1587, %v1774
      %v1776 = vpop.f32.mrb[0].mxu0
      %1777 = vmatprep.mubr.f32.mxu0 0.0
      %1778 = vmatmul.mubr.f32.gmra.mrb[0].mxu0 %v847
      %v1779 = vpop.f32.mrb[0].mxu0
      %v1780 = vadd.f32 %v1592, %v1779
      %v1781 = vpop.f32.mrb[0].mxu0
      %1782 = vmatprep.mubr.f32.mxu0 0.0
      %1783 = vmatmul.mubr.f32.gmra.mrb[0].mxu0 %v850
      %v1784 = vpop.f32.mrb[0].mxu0
      %v1785 = vadd.f32 %v1597, %v1784
      %v1786 = vpop.f32.mrb[0].mxu0
      %1787 = vdwg.mxu0
      %s1788 = scalar_lea.vmem [#allocation2], 48
      %v1789 = vld [vmem:[%s1788] sm:$0xff]
      %v1790 = vld [vmem:[%s1788 + $0x8] sm:$0xff]
      %v1791 = vld [vmem:[%s1788 + $0x10] sm:$0xff]
      %v1792 = vld [vmem:[%s1788 + $0x18] sm:$0xff]
      %v1793 = vld [vmem:[%s1788 + $0x20] sm:$0xff]
      %v1794 = vld [vmem:[%s1788 + $0x28] sm:$0xff]
      %v1795 = vld [vmem:[%s1788 + $0x30] sm:$0xff]
      %v1796 = vld [vmem:[%s1788 + $0x38] sm:$0xff]
      %v1797 = vld [vmem:[%s1788 + $0x40] sm:$0xff]
      %v1798 = vld [vmem:[%s1788 + $0x48] sm:$0xff]
      %v1799 = vld [vmem:[%s1788 + $0x50] sm:$0xff]
      %v1800 = vld [vmem:[%s1788 + $0x58] sm:$0xff]
      %v1801 = vld [vmem:[%s1788 + $0x60] sm:$0xff]
      %v1802 = vld [vmem:[%s1788 + $0x68] sm:$0xff]
      %v1803 = vld [vmem:[%s1788 + $0x70] sm:$0xff]
      %v1804 = vld [vmem:[%s1788 + $0x78] sm:$0xff]
      %v1805 = vld [vmem:[%s1788 + $0x80] sm:$0xff]
      %v1806 = vld [vmem:[%s1788 + $0x88] sm:$0xff]
      %v1807 = vld [vmem:[%s1788 + $0x90] sm:$0xff]
      %v1808 = vld [vmem:[%s1788 + $0x98] sm:$0xff]
      %v1809 = vld [vmem:[%s1788 + $0xa0] sm:$0xff]
      %v1810 = vld [vmem:[%s1788 + $0xa8] sm:$0xff]
      %v1811 = vld [vmem:[%s1788 + $0xb0] sm:$0xff]
      %v1812 = vld [vmem:[%s1788 + $0xb8] sm:$0xff]
      %s1813 = scalar_lea.vmem %s3, 24
      %v1814 = vld [vmem:[%s1813] sm:$0xf]
      %v1816 = vsel %vm410, %v1789, 0
      %v1819 = vsel %vm410, %v1790, 0
      %v1822 = vsel %vm410, %v1791, 0
      %v1825 = vsel %vm410, %v1792, 0
      %v1828 = vsel %vm410, %v1793, 0
      %v1831 = vsel %vm410, %v1794, 0
      %v1834 = vsel %vm410, %v1795, 0
      %v1837 = vsel %vm410, %v1796, 0
      %v1840 = vsel %vm410, %v1797, 0
      %v1843 = vsel %vm410, %v1798, 0
      %v1846 = vsel %vm410, %v1799, 0
      %v1849 = vsel %vm410, %v1800, 0
      %v1852 = vsel %vm410, %v1801, 0
      %v1855 = vsel %vm410, %v1802, 0
      %v1858 = vsel %vm410, %v1803, 0
      %v1861 = vsel %vm410, %v1804, 0
      %v1864 = vsel %vm410, %v1805, 0
      %v1867 = vsel %vm410, %v1806, 0
      %v1870 = vsel %vm410, %v1807, 0
      %v1873 = vsel %vm410, %v1808, 0
      %v1876 = vsel %vm410, %v1809, 0
      %v1879 = vsel %vm410, %v1810, 0
      %v1882 = vsel %vm410, %v1811, 0
      %v1885 = vsel %vm410, %v1812, 0
      %v1888 = vsel %vm599, %v1814, 0
      %1890 = vmatprep.subr.mxu0 0.0
      %1891 = vmatpush1.msra.mxu0 %v1888
      %1892 = vmatprep.subr.mxu0 0.0
      %1893 = vmatpush1.msra.mxu0 0.0
      %1894 = vmatprep.subr.mxu0 0.0
      %1895 = vmatpush1.msra.mxu0 0.0
      %1896 = vmatprep.subr.mxu0 0.0
      %1897 = vmatpush1.msra.mxu0 0.0
      %1898 = vmatprep.subr.mxu0 0.0
      %1899 = vmatpush1.msra.mxu0 0.0
      %1900 = vmatprep.subr.mxu0 0.0
      %1901 = vmatpush1.msra.mxu0 0.0
      %1902 = vmatprep.subr.mxu0 0.0
      %1903 = vmatpush1.msra.mxu0 0.0
      %1904 = vmatprep.subr.mxu0 0.0
      %1905 = vmatpush1.msra.mxu0 0.0
      %1906 = vmatprep.subr.mxu0 0.0
      %1907 = vmatpush1.msra.mxu0 0.0
      %1908 = vmatprep.subr.mxu0 0.0
      %1909 = vmatpush1.msra.mxu0 0.0
      %1910 = vmatprep.subr.mxu0 0.0
      %1911 = vmatpush1.msra.mxu0 0.0
      %1912 = vmatprep.subr.mxu0 0.0
      %1913 = vmatpush1.msra.mxu0 0.0
      %1914 = vmatprep.subr.mxu0 0.0
      %1915 = vmatpush1.msra.mxu0 0.0
      %1916 = vmatprep.subr.mxu0 0.0
      %1917 = vmatpush1.msra.mxu0 0.0
      %1918 = vmatprep.subr.mxu0 0.0
      %1919 = vmatpush1.msra.mxu0 0.0
      %1920 = vmatprep.subr.mxu0 0.0
      %1921 = vmatpush1.msra.mxu0 0.0
      %1922 = vmatprep.subr.mxu0 0.0
      %1923 = vmatpush1.msra.mxu0 0.0
      %1924 = vmatprep.subr.mxu0 0.0
      %1925 = vmatpush1.msra.mxu0 0.0
      %1926 = vmatprep.subr.mxu0 0.0
      %1927 = vmatpush1.msra.mxu0 0.0
      %1928 = vmatprep.subr.mxu0 0.0
      %1929 = vmatpush1.msra.mxu0 0.0
      %1930 = vmatprep.subr.mxu0 0.0
      %1931 = vmatpush1.msra.mxu0 0.0
      %1932 = vmatprep.subr.mxu0 0.0
      %1933 = vmatpush1.msra.mxu0 0.0
      %1934 = vmatprep.subr.mxu0 0.0
      %1935 = vmatpush1.msra.mxu0 0.0
      %1936 = vmatprep.subr.mxu0 0.0
      %1937 = vmatpush1.msra.mxu0 0.0
      %1938 = vmatprep.subr.mxu0 0.0
      %1939 = vmatpush1.msra.mxu0 0.0
      %1940 = vmatprep.subr.mxu0 0.0
      %1941 = vmatpush1.msra.mxu0 0.0
      %1942 = vmatprep.subr.mxu0 0.0
      %1943 = vmatpush1.msra.mxu0 0.0
      %1944 = vmatprep.subr.mxu0 0.0
      %1945 = vmatpush1.msra.mxu0 0.0
      %1946 = vmatprep.subr.mxu0 0.0
      %1947 = vmatpush1.msra.mxu0 0.0
      %1948 = vmatprep.subr.mxu0 0.0
      %1949 = vmatpush1.msra.mxu0 0.0
      %1950 = vmatprep.subr.mxu0 0.0
      %1951 = vmatpush1.msra.mxu0 0.0
      %1952 = vmatprep.subr.mxu0 0.0
      %1953 = vmatpush1.msra.mxu0 0.0
      %1954 = vmatprep.mubr.f32.mxu0 0.0
      %1955 = vmatmul.mubr.f32.gmra.mrb[0].mxu0 %v1816
      %v1956 = vpop.f32.mrb[0].mxu0
      %v1957 = vadd.f32 0.0, %v1956
      %v1958 = vpop.f32.mrb[0].mxu0
      %1959 = vmatprep.mubr.f32.mxu0 0.0
      %1960 = vmatmul.mubr.f32.gmra.mrb[0].mxu0 %v1819
      %v1961 = vpop.f32.mrb[0].mxu0
      %v1962 = vadd.f32 0.0, %v1961
      %v1963 = vpop.f32.mrb[0].mxu0
      %1964 = vmatprep.mubr.f32.mxu0 0.0
      %1965 = vmatmul.mubr.f32.gmra.mrb[0].mxu0 %v1822
      %v1966 = vpop.f32.mrb[0].mxu0
      %v1967 = vpop.f32.mrb[0].mxu0
      %1968 = vmatprep.mubr.f32.mxu0 0.0
      %1969 = vmatmul.mubr.f32.gmra.mrb[0].mxu0 %v1825
      %v1970 = vpop.f32.mrb[0].mxu0
      %v1971 = vadd.f32 0.0, %v1970
      %v1972 = vpop.f32.mrb[0].mxu0
      %1973 = vmatprep.mubr.f32.mxu0 0.0
      %1974 = vmatmul.mubr.f32.gmra.mrb[0].mxu0 %v1828
      %v1975 = vpop.f32.mrb[0].mxu0
      %v1976 = vadd.f32 0.0, %v1975
      %v1977 = vpop.f32.mrb[0].mxu0
      %1978 = vmatprep.mubr.f32.mxu0 0.0
      %1979 = vmatmul.mubr.f32.gmra.mrb[0].mxu0 %v1831
      %v1980 = vpop.f32.mrb[0].mxu0
      %v1981 = vpop.f32.mrb[0].mxu0
      %1982 = vmatprep.mubr.f32.mxu0 0.0
      %1983 = vmatmul.mubr.f32.gmra.mrb[0].mxu0 %v1834
      %v1984 = vpop.f32.mrb[0].mxu0
      %v1985 = vadd.f32 0.0, %v1984
      %v1986 = vpop.f32.mrb[0].mxu0
      %1987 = vmatprep.mubr.f32.mxu0 0.0
      %1988 = vmatmul.mubr.f32.gmra.mrb[0].mxu0 %v1837
      %v1989 = vpop.f32.mrb[0].mxu0
      %v1990 = vadd.f32 0.0, %v1989
      %v1991 = vpop.f32.mrb[0].mxu0
      %1992 = vmatprep.mubr.f32.mxu0 0.0
      %1993 = vmatmul.mubr.f32.gmra.mrb[0].mxu0 %v1840
      %v1994 = vpop.f32.mrb[0].mxu0
      %v1995 = vpop.f32.mrb[0].mxu0
      %1996 = vmatprep.mubr.f32.mxu0 0.0
      %1997 = vmatmul.mubr.f32.gmra.mrb[0].mxu0 %v1843
      %v1998 = vpop.f32.mrb[0].mxu0
      %v1999 = vadd.f32 0.0, %v1998
      %v2000 = vpop.f32.mrb[0].mxu0
      %2001 = vmatprep.mubr.f32.mxu0 0.0
      %2002 = vmatmul.mubr.f32.gmra.mrb[0].mxu0 %v1846
      %v2003 = vpop.f32.mrb[0].mxu0
      %v2004 = vadd.f32 0.0, %v2003
      %v2005 = vpop.f32.mrb[0].mxu0
      %2006 = vmatprep.mubr.f32.mxu0 0.0
      %2007 = vmatmul.mubr.f32.gmra.mrb[0].mxu0 %v1849
      %v2008 = vpop.f32.mrb[0].mxu0
      %v2009 = vpop.f32.mrb[0].mxu0
      %2010 = vmatprep.mubr.f32.mxu0 0.0
      %2011 = vmatmul.mubr.f32.gmra.mrb[0].mxu0 %v1852
      %v2012 = vpop.f32.mrb[0].mxu0
      %v2013 = vadd.f32 0.0, %v2012
      %v2014 = vpop.f32.mrb[0].mxu0
      %2015 = vmatprep.mubr.f32.mxu0 0.0
      %2016 = vmatmul.mubr.f32.gmra.mrb[0].mxu0 %v1855
      %v2017 = vpop.f32.mrb[0].mxu0
      %v2018 = vadd.f32 0.0, %v2017
      %v2019 = vpop.f32.mrb[0].mxu0
      %2020 = vmatprep.mubr.f32.mxu0 0.0
      %2021 = vmatmul.mubr.f32.gmra.mrb[0].mxu0 %v1858
      %v2022 = vpop.f32.mrb[0].mxu0
      %v2023 = vpop.f32.mrb[0].mxu0
      %2024 = vmatprep.mubr.f32.mxu0 0.0
      %2025 = vmatmul.mubr.f32.gmra.mrb[0].mxu0 %v1861
      %v2026 = vpop.f32.mrb[0].mxu0
      %v2027 = vadd.f32 0.0, %v2026
      %v2028 = vpop.f32.mrb[0].mxu0
      %2029 = vmatprep.mubr.f32.mxu0 0.0
      %2030 = vmatmul.mubr.f32.gmra.mrb[0].mxu0 %v1864
      %v2031 = vpop.f32.mrb[0].mxu0
      %v2032 = vadd.f32 0.0, %v2031
      %v2033 = vpop.f32.mrb[0].mxu0
      %2034 = vmatprep.mubr.f32.mxu0 0.0
      %2035 = vmatmul.mubr.f32.gmra.mrb[0].mxu0 %v1867
      %v2036 = vpop.f32.mrb[0].mxu0
      %v2037 = vpop.f32.mrb[0].mxu0
      %2038 = vmatprep.mubr.f32.mxu0 0.0
      %2039 = vmatmul.mubr.f32.gmra.mrb[0].mxu0 %v1870
      %v2040 = vpop.f32.mrb[0].mxu0
      %v2041 = vadd.f32 0.0, %v2040
      %v2042 = vpop.f32.mrb[0].mxu0
      %2043 = vmatprep.mubr.f32.mxu0 0.0
      %2044 = vmatmul.mubr.f32.gmra.mrb[0].mxu0 %v1873
      %v2045 = vpop.f32.mrb[0].mxu0
      %v2046 = vadd.f32 0.0, %v2045
      %v2047 = vpop.f32.mrb[0].mxu0
      %2048 = vmatprep.mubr.f32.mxu0 0.0
      %2049 = vmatmul.mubr.f32.gmra.mrb[0].mxu0 %v1876
      %v2050 = vpop.f32.mrb[0].mxu0
      %v2051 = vpop.f32.mrb[0].mxu0
      %2052 = vmatprep.mubr.f32.mxu0 0.0
      %2053 = vmatmul.mubr.f32.gmra.mrb[0].mxu0 %v1879
      %v2054 = vpop.f32.mrb[0].mxu0
      %v2055 = vadd.f32 0.0, %v2054
      %v2056 = vpop.f32.mrb[0].mxu0
      %2057 = vmatprep.mubr.f32.mxu0 0.0
      %2058 = vmatmul.mubr.f32.gmra.mrb[0].mxu0 %v1882
      %v2059 = vpop.f32.mrb[0].mxu0
      %v2060 = vadd.f32 0.0, %v2059
      %v2061 = vpop.f32.mrb[0].mxu0
      %2062 = vmatprep.mubr.f32.mxu0 0.0
      %2063 = vmatmul.mubr.f32.gmra.mrb[0].mxu0 %v1885
      %v2064 = vpop.f32.mrb[0].mxu0
      %v2065 = vpop.f32.mrb[0].mxu0
      %2066 = vdwg.mxu0
      %v2067 = vadd.f32 %v922, %v1957
      %v2068 = vadd.f32 %v927, %v1962
      %v2069 = vadd.f32 %v936, %v1971
      %v2070 = vadd.f32 %v941, %v1976
      %v2071 = vadd.f32 %v950, %v1985
      %v2072 = vadd.f32 %v955, %v1990
      %v2073 = vadd.f32 %v964, %v1999
      %v2074 = vadd.f32 %v969, %v2004
      %v2075 = vadd.f32 %v978, %v2013
      %v2076 = vadd.f32 %v983, %v2018
      %v2077 = vadd.f32 %v992, %v2027
      %v2078 = vadd.f32 %v997, %v2032
      %v2079 = vadd.f32 %v1006, %v2041
      %v2080 = vadd.f32 %v1011, %v2046
      %v2081 = vadd.f32 %v1020, %v2055
      %v2082 = vadd.f32 %v1025, %v2060
      %s2083 = scalar_lea.vmem %s3, 28
      %v2084 = vld [vmem:[%s2083] sm:$0xf]
      %v2086 = vsel %vm599, %v2084, 0
      %2088 = vmatprep.subr.mxu0 0.0
      %2089 = vmatpush1.msra.mxu0 %v2086
      %2090 = vmatprep.subr.mxu0 0.0
      %2091 = vmatpush1.msra.mxu0 0.0
      %2092 = vmatprep.subr.mxu0 0.0
      %2093 = vmatpush1.msra.mxu0 0.0
      %2094 = vmatprep.subr.mxu0 0.0
      %2095 = vmatpush1.msra.mxu0 0.0
      %2096 = vmatprep.subr.mxu0 0.0
      %2097 = vmatpush1.msra.mxu0 0.0
      %2098 = vmatprep.subr.mxu0 0.0
      %2099 = vmatpush1.msra.mxu0 0.0
      %2100 = vmatprep.subr.mxu0 0.0
      %2101 = vmatpush1.msra.mxu0 0.0
      %2102 = vmatprep.subr.mxu0 0.0
      %2103 = vmatpush1.msra.mxu0 0.0
      %2104 = vmatprep.subr.mxu0 0.0
      %2105 = vmatpush1.msra.mxu0 0.0
      %2106 = vmatprep.subr.mxu0 0.0
      %2107 = vmatpush1.msra.mxu0 0.0
      %2108 = vmatprep.subr.mxu0 0.0
      %2109 = vmatpush1.msra.mxu0 0.0
      %2110 = vmatprep.subr.mxu0 0.0
      %2111 = vmatpush1.msra.mxu0 0.0
      %2112 = vmatprep.subr.mxu0 0.0
      %2113 = vmatpush1.msra.mxu0 0.0
      %2114 = vmatprep.subr.mxu0 0.0
      %2115 = vmatpush1.msra.mxu0 0.0
      %2116 = vmatprep.subr.mxu0 0.0
      %2117 = vmatpush1.msra.mxu0 0.0
      %2118 = vmatprep.subr.mxu0 0.0
      %2119 = vmatpush1.msra.mxu0 0.0
      %2120 = vmatprep.subr.mxu0 0.0
      %2121 = vmatpush1.msra.mxu0 0.0
      %2122 = vmatprep.subr.mxu0 0.0
      %2123 = vmatpush1.msra.mxu0 0.0
      %2124 = vmatprep.subr.mxu0 0.0
      %2125 = vmatpush1.msra.mxu0 0.0
      %2126 = vmatprep.subr.mxu0 0.0
      %2127 = vmatpush1.msra.mxu0 0.0
      %2128 = vmatprep.subr.mxu0 0.0
      %2129 = vmatpush1.msra.mxu0 0.0
      %2130 = vmatprep.subr.mxu0 0.0
      %2131 = vmatpush1.msra.mxu0 0.0
      %2132 = vmatprep.subr.mxu0 0.0
      %2133 = vmatpush1.msra.mxu0 0.0
      %2134 = vmatprep.subr.mxu0 0.0
      %2135 = vmatpush1.msra.mxu0 0.0
      %2136 = vmatprep.subr.mxu0 0.0
      %2137 = vmatpush1.msra.mxu0 0.0
      %2138 = vmatprep.subr.mxu0 0.0
      %2139 = vmatpush1.msra.mxu0 0.0
      %2140 = vmatprep.subr.mxu0 0.0
      %2141 = vmatpush1.msra.mxu0 0.0
      %2142 = vmatprep.subr.mxu0 0.0
      %2143 = vmatpush1.msra.mxu0 0.0
      %2144 = vmatprep.subr.mxu0 0.0
      %2145 = vmatpush1.msra.mxu0 0.0
      %2146 = vmatprep.subr.mxu0 0.0
      %2147 = vmatpush1.msra.mxu0 0.0
      %2148 = vmatprep.subr.mxu0 0.0
      %2149 = vmatpush1.msra.mxu0 0.0
      %2150 = vmatprep.subr.mxu0 0.0
      %2151 = vmatpush1.msra.mxu0 0.0
      %2152 = vmatprep.mubr.f32.mxu0 0.0
      %2153 = vmatmul.mubr.f32.gmra.mrb[0].mxu0 %v1816
      %v2154 = vpop.f32.mrb[0].mxu0
      %v2155 = vadd.f32 0.0, %v2154
      %v2156 = vpop.f32.mrb[0].mxu0
      %2157 = vmatprep.mubr.f32.mxu0 0.0
      %2158 = vmatmul.mubr.f32.gmra.mrb[0].mxu0 %v1819
      %v2159 = vpop.f32.mrb[0].mxu0
      %v2160 = vadd.f32 0.0, %v2159
      %v2161 = vpop.f32.mrb[0].mxu0
      %2162 = vmatprep.mubr.f32.mxu0 0.0
      %2163 = vmatmul.mubr.f32.gmra.mrb[0].mxu0 %v1822
      %v2164 = vpop.f32.mrb[0].mxu0
      %v2165 = vadd.f32 0.0, %v2164
      %v2166 = vpop.f32.mrb[0].mxu0
      %2167 = vmatprep.mubr.f32.mxu0 0.0
      %2168 = vmatmul.mubr.f32.gmra.mrb[0].mxu0 %v1825
      %v2169 = vpop.f32.mrb[0].mxu0
      %v2170 = vadd.f32 0.0, %v2169
      %v2171 = vpop.f32.mrb[0].mxu0
      %2172 = vmatprep.mubr.f32.mxu0 0.0
      %2173 = vmatmul.mubr.f32.gmra.mrb[0].mxu0 %v1828
      %v2174 = vpop.f32.mrb[0].mxu0
      %v2175 = vadd.f32 0.0, %v2174
      %v2176 = vpop.f32.mrb[0].mxu0
      %2177 = vmatprep.mubr.f32.mxu0 0.0
      %2178 = vmatmul.mubr.f32.gmra.mrb[0].mxu0 %v1831
      %v2179 = vpop.f32.mrb[0].mxu0
      %v2180 = vadd.f32 0.0, %v2179
      %v2181 = vpop.f32.mrb[0].mxu0
      %2182 = vmatprep.mubr.f32.mxu0 0.0
      %2183 = vmatmul.mubr.f32.gmra.mrb[0].mxu0 %v1834
      %v2184 = vpop.f32.mrb[0].mxu0
      %v2185 = vadd.f32 0.0, %v2184
      %v2186 = vpop.f32.mrb[0].mxu0
      %2187 = vmatprep.mubr.f32.mxu0 0.0
      %2188 = vmatmul.mubr.f32.gmra.mrb[0].mxu0 %v1837
      %v2189 = vpop.f32.mrb[0].mxu0
      %v2190 = vadd.f32 0.0, %v2189
      %v2191 = vpop.f32.mrb[0].mxu0
      %2192 = vmatprep.mubr.f32.mxu0 0.0
      %2193 = vmatmul.mubr.f32.gmra.mrb[0].mxu0 %v1840
      %v2194 = vpop.f32.mrb[0].mxu0
      %v2195 = vadd.f32 0.0, %v2194
      %v2196 = vpop.f32.mrb[0].mxu0
      %2197 = vmatprep.mubr.f32.mxu0 0.0
      %2198 = vmatmul.mubr.f32.gmra.mrb[0].mxu0 %v1843
      %v2199 = vpop.f32.mrb[0].mxu0
      %v2200 = vadd.f32 0.0, %v2199
      %v2201 = vpop.f32.mrb[0].mxu0
      %2202 = vmatprep.mubr.f32.mxu0 0.0
      %2203 = vmatmul.mubr.f32.gmra.mrb[0].mxu0 %v1846
      %v2204 = vpop.f32.mrb[0].mxu0
      %v2205 = vadd.f32 0.0, %v2204
      %v2206 = vpop.f32.mrb[0].mxu0
      %2207 = vmatprep.mubr.f32.mxu0 0.0
      %2208 = vmatmul.mubr.f32.gmra.mrb[0].mxu0 %v1849
      %v2209 = vpop.f32.mrb[0].mxu0
      %v2210 = vadd.f32 0.0, %v2209
      %v2211 = vpop.f32.mrb[0].mxu0
      %2212 = vmatprep.mubr.f32.mxu0 0.0
      %2213 = vmatmul.mubr.f32.gmra.mrb[0].mxu0 %v1852
      %v2214 = vpop.f32.mrb[0].mxu0
      %v2215 = vadd.f32 0.0, %v2214
      %v2216 = vpop.f32.mrb[0].mxu0
      %2217 = vmatprep.mubr.f32.mxu0 0.0
      %2218 = vmatmul.mubr.f32.gmra.mrb[0].mxu0 %v1855
      %v2219 = vpop.f32.mrb[0].mxu0
      %v2220 = vadd.f32 0.0, %v2219
      %v2221 = vpop.f32.mrb[0].mxu0
      %2222 = vmatprep.mubr.f32.mxu0 0.0
      %2223 = vmatmul.mubr.f32.gmra.mrb[0].mxu0 %v1858
      %v2224 = vpop.f32.mrb[0].mxu0
      %v2225 = vadd.f32 0.0, %v2224
      %v2226 = vpop.f32.mrb[0].mxu0
      %2227 = vmatprep.mubr.f32.mxu0 0.0
      %2228 = vmatmul.mubr.f32.gmra.mrb[0].mxu0 %v1861
      %v2229 = vpop.f32.mrb[0].mxu0
      %v2230 = vadd.f32 0.0, %v2229
      %v2231 = vpop.f32.mrb[0].mxu0
      %2232 = vmatprep.mubr.f32.mxu0 0.0
      %2233 = vmatmul.mubr.f32.gmra.mrb[0].mxu0 %v1864
      %v2234 = vpop.f32.mrb[0].mxu0
      %v2235 = vadd.f32 0.0, %v2234
      %v2236 = vpop.f32.mrb[0].mxu0
      %2237 = vmatprep.mubr.f32.mxu0 0.0
      %2238 = vmatmul.mubr.f32.gmra.mrb[0].mxu0 %v1867
      %v2239 = vpop.f32.mrb[0].mxu0
      %v2240 = vadd.f32 0.0, %v2239
      %v2241 = vpop.f32.mrb[0].mxu0
      %2242 = vmatprep.mubr.f32.mxu0 0.0
      %2243 = vmatmul.mubr.f32.gmra.mrb[0].mxu0 %v1870
      %v2244 = vpop.f32.mrb[0].mxu0
      %v2245 = vadd.f32 0.0, %v2244
      %v2246 = vpop.f32.mrb[0].mxu0
      %2247 = vmatprep.mubr.f32.mxu0 0.0
      %2248 = vmatmul.mubr.f32.gmra.mrb[0].mxu0 %v1873
      %v2249 = vpop.f32.mrb[0].mxu0
      %v2250 = vadd.f32 0.0, %v2249
      %v2251 = vpop.f32.mrb[0].mxu0
      %2252 = vmatprep.mubr.f32.mxu0 0.0
      %2253 = vmatmul.mubr.f32.gmra.mrb[0].mxu0 %v1876
      %v2254 = vpop.f32.mrb[0].mxu0
      %v2255 = vadd.f32 0.0, %v2254
      %v2256 = vpop.f32.mrb[0].mxu0
      %2257 = vmatprep.mubr.f32.mxu0 0.0
      %2258 = vmatmul.mubr.f32.gmra.mrb[0].mxu0 %v1879
      %v2259 = vpop.f32.mrb[0].mxu0
      %v2260 = vadd.f32 0.0, %v2259
      %v2261 = vpop.f32.mrb[0].mxu0
      %2262 = vmatprep.mubr.f32.mxu0 0.0
      %2263 = vmatmul.mubr.f32.gmra.mrb[0].mxu0 %v1882
      %v2264 = vpop.f32.mrb[0].mxu0
      %v2265 = vadd.f32 0.0, %v2264
      %v2266 = vpop.f32.mrb[0].mxu0
      %2267 = vmatprep.mubr.f32.mxu0 0.0
      %2268 = vmatmul.mubr.f32.gmra.mrb[0].mxu0 %v1885
      %v2269 = vpop.f32.mrb[0].mxu0
      %v2270 = vadd.f32 0.0, %v2269
      %v2271 = vpop.f32.mrb[0].mxu0
      %2272 = vdwg.mxu0
      %v2273 = vadd.f32 %v1292, %v2155
      %v2274 = vadd.f32 %v1297, %v2160
      %v2275 = vadd.f32 %v1302, %v2165
      %v2276 = vadd.f32 %v1307, %v2170
      %v2277 = vadd.f32 %v1312, %v2175
      %v2278 = vadd.f32 %v1317, %v2180
      %v2279 = vadd.f32 %v1322, %v2185
      %v2280 = vadd.f32 %v1327, %v2190
      %v2281 = vadd.f32 %v1332, %v2195
      %v2282 = vadd.f32 %v1337, %v2200
      %v2283 = vadd.f32 %v1342, %v2205
      %v2284 = vadd.f32 %v1347, %v2210
      %v2285 = vadd.f32 %v1352, %v2215
      %v2286 = vadd.f32 %v1357, %v2220
      %v2287 = vadd.f32 %v1362, %v2225
      %v2288 = vadd.f32 %v1367, %v2230
      %v2289 = vadd.f32 %v1372, %v2235
      %v2290 = vadd.f32 %v1377, %v2240
      %v2291 = vadd.f32 %v1382, %v2245
      %v2292 = vadd.f32 %v1387, %v2250
      %v2293 = vadd.f32 %v1392, %v2255
      %v2294 = vadd.f32 %v1397, %v2260
      %v2295 = vadd.f32 %v1402, %v2265
      %v2296 = vadd.f32 %v1407, %v2270
      %s2297 = scalar_lea.vmem %s3, 32
      %v2298 = vld [vmem:[%s2297] sm:$0xf]
      %v2300 = vsel %vm599, %v2298, 0
      %2302 = vmatprep.subr.mxu0 0.0
      %2303 = vmatpush1.msra.mxu0 %v2300
      %2304 = vmatprep.subr.mxu0 0.0
      %2305 = vmatpush1.msra.mxu0 0.0
      %2306 = vmatprep.subr.mxu0 0.0
      %2307 = vmatpush1.msra.mxu0 0.0
      %2308 = vmatprep.subr.mxu0 0.0
      %2309 = vmatpush1.msra.mxu0 0.0
      %2310 = vmatprep.subr.mxu0 0.0
      %2311 = vmatpush1.msra.mxu0 0.0
      %2312 = vmatprep.subr.mxu0 0.0
      %2313 = vmatpush1.msra.mxu0 0.0
      %2314 = vmatprep.subr.mxu0 0.0
      %2315 = vmatpush1.msra.mxu0 0.0
      %2316 = vmatprep.subr.mxu0 0.0
      %2317 = vmatpush1.msra.mxu0 0.0
      %2318 = vmatprep.subr.mxu0 0.0
      %2319 = vmatpush1.msra.mxu0 0.0
      %2320 = vmatprep.subr.mxu0 0.0
      %2321 = vmatpush1.msra.mxu0 0.0
      %2322 = vmatprep.subr.mxu0 0.0
      %2323 = vmatpush1.msra.mxu0 0.0
      %2324 = vmatprep.subr.mxu0 0.0
      %2325 = vmatpush1.msra.mxu0 0.0
      %2326 = vmatprep.subr.mxu0 0.0
      %2327 = vmatpush1.msra.mxu0 0.0
      %2328 = vmatprep.subr.mxu0 0.0
      %2329 = vmatpush1.msra.mxu0 0.0
      %2330 = vmatprep.subr.mxu0 0.0
      %2331 = vmatpush1.msra.mxu0 0.0
      %2332 = vmatprep.subr.mxu0 0.0
      %2333 = vmatpush1.msra.mxu0 0.0
      %2334 = vmatprep.subr.mxu0 0.0
      %2335 = vmatpush1.msra.mxu0 0.0
      %2336 = vmatprep.subr.mxu0 0.0
      %2337 = vmatpush1.msra.mxu0 0.0
      %2338 = vmatprep.subr.mxu0 0.0
      %2339 = vmatpush1.msra.mxu0 0.0
      %2340 = vmatprep.subr.mxu0 0.0
      %2341 = vmatpush1.msra.mxu0 0.0
      %2342 = vmatprep.subr.mxu0 0.0
      %2343 = vmatpush1.msra.mxu0 0.0
      %2344 = vmatprep.subr.mxu0 0.0
      %2345 = vmatpush1.msra.mxu0 0.0
      %2346 = vmatprep.subr.mxu0 0.0
      %2347 = vmatpush1.msra.mxu0 0.0
      %2348 = vmatprep.subr.mxu0 0.0
      %2349 = vmatpush1.msra.mxu0 0.0
      %2350 = vmatprep.subr.mxu0 0.0
      %2351 = vmatpush1.msra.mxu0 0.0
      %2352 = vmatprep.subr.mxu0 0.0
      %2353 = vmatpush1.msra.mxu0 0.0
      %2354 = vmatprep.subr.mxu0 0.0
      %2355 = vmatpush1.msra.mxu0 0.0
      %2356 = vmatprep.subr.mxu0 0.0
      %2357 = vmatpush1.msra.mxu0 0.0
      %2358 = vmatprep.subr.mxu0 0.0
      %2359 = vmatpush1.msra.mxu0 0.0
      %2360 = vmatprep.subr.mxu0 0.0
      %2361 = vmatpush1.msra.mxu0 0.0
      %2362 = vmatprep.subr.mxu0 0.0
      %2363 = vmatpush1.msra.mxu0 0.0
      %2364 = vmatprep.subr.mxu0 0.0
      %2365 = vmatpush1.msra.mxu0 0.0
      %2366 = vmatprep.mubr.f32.mxu0 0.0
      %2367 = vmatmul.mubr.f32.gmra.mrb[0].mxu0 %v1816
      %v2368 = vpop.f32.mrb[0].mxu0
      %v2369 = vadd.f32 0.0, %v2368
      %v2370 = vpop.f32.mrb[0].mxu0
      %2371 = vmatprep.mubr.f32.mxu0 0.0
      %2372 = vmatmul.mubr.f32.gmra.mrb[0].mxu0 %v1819
      %v2373 = vpop.f32.mrb[0].mxu0
      %v2374 = vadd.f32 0.0, %v2373
      %v2375 = vpop.f32.mrb[0].mxu0
      %2376 = vmatprep.mubr.f32.mxu0 0.0
      %2377 = vmatmul.mubr.f32.gmra.mrb[0].mxu0 %v1822
      %v2378 = vpop.f32.mrb[0].mxu0
      %v2379 = vadd.f32 0.0, %v2378
      %v2380 = vpop.f32.mrb[0].mxu0
      %2381 = vmatprep.mubr.f32.mxu0 0.0
      %2382 = vmatmul.mubr.f32.gmra.mrb[0].mxu0 %v1825
      %v2383 = vpop.f32.mrb[0].mxu0
      %v2384 = vadd.f32 0.0, %v2383
      %v2385 = vpop.f32.mrb[0].mxu0
      %2386 = vmatprep.mubr.f32.mxu0 0.0
      %2387 = vmatmul.mubr.f32.gmra.mrb[0].mxu0 %v1828
      %v2388 = vpop.f32.mrb[0].mxu0
      %v2389 = vadd.f32 0.0, %v2388
      %v2390 = vpop.f32.mrb[0].mxu0
      %2391 = vmatprep.mubr.f32.mxu0 0.0
      %2392 = vmatmul.mubr.f32.gmra.mrb[0].mxu0 %v1831
      %v2393 = vpop.f32.mrb[0].mxu0
      %v2394 = vadd.f32 0.0, %v2393
      %v2395 = vpop.f32.mrb[0].mxu0
      %2396 = vmatprep.mubr.f32.mxu0 0.0
      %2397 = vmatmul.mubr.f32.gmra.mrb[0].mxu0 %v1834
      %v2398 = vpop.f32.mrb[0].mxu0
      %v2399 = vadd.f32 0.0, %v2398
      %v2400 = vpop.f32.mrb[0].mxu0
      %2401 = vmatprep.mubr.f32.mxu0 0.0
      %2402 = vmatmul.mubr.f32.gmra.mrb[0].mxu0 %v1837
      %v2403 = vpop.f32.mrb[0].mxu0
      %v2404 = vadd.f32 0.0, %v2403
      %v2405 = vpop.f32.mrb[0].mxu0
      %2406 = vmatprep.mubr.f32.mxu0 0.0
      %2407 = vmatmul.mubr.f32.gmra.mrb[0].mxu0 %v1840
      %v2408 = vpop.f32.mrb[0].mxu0
      %v2409 = vadd.f32 0.0, %v2408
      %v2410 = vpop.f32.mrb[0].mxu0
      %2411 = vmatprep.mubr.f32.mxu0 0.0
      %2412 = vmatmul.mubr.f32.gmra.mrb[0].mxu0 %v1843
      %v2413 = vpop.f32.mrb[0].mxu0
      %v2414 = vadd.f32 0.0, %v2413
      %v2415 = vpop.f32.mrb[0].mxu0
      %2416 = vmatprep.mubr.f32.mxu0 0.0
      %2417 = vmatmul.mubr.f32.gmra.mrb[0].mxu0 %v1846
      %v2418 = vpop.f32.mrb[0].mxu0
      %v2419 = vadd.f32 0.0, %v2418
      %v2420 = vpop.f32.mrb[0].mxu0
      %2421 = vmatprep.mubr.f32.mxu0 0.0
      %2422 = vmatmul.mubr.f32.gmra.mrb[0].mxu0 %v1849
      %v2423 = vpop.f32.mrb[0].mxu0
      %v2424 = vadd.f32 0.0, %v2423
      %v2425 = vpop.f32.mrb[0].mxu0
      %2426 = vmatprep.mubr.f32.mxu0 0.0
      %2427 = vmatmul.mubr.f32.gmra.mrb[0].mxu0 %v1852
      %v2428 = vpop.f32.mrb[0].mxu0
      %v2429 = vadd.f32 0.0, %v2428
      %v2430 = vpop.f32.mrb[0].mxu0
      %2431 = vmatprep.mubr.f32.mxu0 0.0
      %2432 = vmatmul.mubr.f32.gmra.mrb[0].mxu0 %v1855
      %v2433 = vpop.f32.mrb[0].mxu0
      %v2434 = vadd.f32 0.0, %v2433
      %v2435 = vpop.f32.mrb[0].mxu0
      %2436 = vmatprep.mubr.f32.mxu0 0.0
      %2437 = vmatmul.mubr.f32.gmra.mrb[0].mxu0 %v1858
      %v2438 = vpop.f32.mrb[0].mxu0
      %v2439 = vadd.f32 0.0, %v2438
      %v2440 = vpop.f32.mrb[0].mxu0
      %2441 = vmatprep.mubr.f32.mxu0 0.0
      %2442 = vmatmul.mubr.f32.gmra.mrb[0].mxu0 %v1861
      %v2443 = vpop.f32.mrb[0].mxu0
      %v2444 = vadd.f32 0.0, %v2443
      %v2445 = vpop.f32.mrb[0].mxu0
      %2446 = vmatprep.mubr.f32.mxu0 0.0
      %2447 = vmatmul.mubr.f32.gmra.mrb[0].mxu0 %v1864
      %v2448 = vpop.f32.mrb[0].mxu0
      %v2449 = vadd.f32 0.0, %v2448
      %v2450 = vpop.f32.mrb[0].mxu0
      %2451 = vmatprep.mubr.f32.mxu0 0.0
      %2452 = vmatmul.mubr.f32.gmra.mrb[0].mxu0 %v1867
      %v2453 = vpop.f32.mrb[0].mxu0
      %v2454 = vadd.f32 0.0, %v2453
      %v2455 = vpop.f32.mrb[0].mxu0
      %2456 = vmatprep.mubr.f32.mxu0 0.0
      %2457 = vmatmul.mubr.f32.gmra.mrb[0].mxu0 %v1870
      %v2458 = vpop.f32.mrb[0].mxu0
      %v2459 = vadd.f32 0.0, %v2458
      %v2460 = vpop.f32.mrb[0].mxu0
      %2461 = vmatprep.mubr.f32.mxu0 0.0
      %2462 = vmatmul.mubr.f32.gmra.mrb[0].mxu0 %v1873
      %v2463 = vpop.f32.mrb[0].mxu0
      %v2464 = vadd.f32 0.0, %v2463
      %v2465 = vpop.f32.mrb[0].mxu0
      %2466 = vmatprep.mubr.f32.mxu0 0.0
      %2467 = vmatmul.mubr.f32.gmra.mrb[0].mxu0 %v1876
      %v2468 = vpop.f32.mrb[0].mxu0
      %v2469 = vadd.f32 0.0, %v2468
      %v2470 = vpop.f32.mrb[0].mxu0
      %2471 = vmatprep.mubr.f32.mxu0 0.0
      %2472 = vmatmul.mubr.f32.gmra.mrb[0].mxu0 %v1879
      %v2473 = vpop.f32.mrb[0].mxu0
      %v2474 = vadd.f32 0.0, %v2473
      %v2475 = vpop.f32.mrb[0].mxu0
      %2476 = vmatprep.mubr.f32.mxu0 0.0
      %2477 = vmatmul.mubr.f32.gmra.mrb[0].mxu0 %v1882
      %v2478 = vpop.f32.mrb[0].mxu0
      %v2479 = vadd.f32 0.0, %v2478
      %v2480 = vpop.f32.mrb[0].mxu0
      %2481 = vmatprep.mubr.f32.mxu0 0.0
      %2482 = vmatmul.mubr.f32.gmra.mrb[0].mxu0 %v1885
      %v2483 = vpop.f32.mrb[0].mxu0
      %v2484 = vadd.f32 0.0, %v2483
      %v2485 = vpop.f32.mrb[0].mxu0
      %2486 = vdwg.mxu0
      %v2487 = vadd.f32 %v1670, %v2369
      %v2488 = vadd.f32 %v1675, %v2374
      %v2489 = vadd.f32 %v1680, %v2379
      %v2490 = vadd.f32 %v1685, %v2384
      %v2491 = vadd.f32 %v1690, %v2389
      %v2492 = vadd.f32 %v1695, %v2394
      %v2493 = vadd.f32 %v1700, %v2399
      %v2494 = vadd.f32 %v1705, %v2404
      %v2495 = vadd.f32 %v1710, %v2409
      %v2496 = vadd.f32 %v1715, %v2414
      %v2497 = vadd.f32 %v1720, %v2419
      %v2498 = vadd.f32 %v1725, %v2424
      %v2499 = vadd.f32 %v1730, %v2429
      %v2500 = vadd.f32 %v1735, %v2434
      %v2501 = vadd.f32 %v1740, %v2439
      %v2502 = vadd.f32 %v1745, %v2444
      %v2503 = vadd.f32 %v1750, %v2449
      %v2504 = vadd.f32 %v1755, %v2454
      %v2505 = vadd.f32 %v1760, %v2459
      %v2506 = vadd.f32 %v1765, %v2464
      %v2507 = vadd.f32 %v1770, %v2469
      %v2508 = vadd.f32 %v1775, %v2474
      %v2509 = vadd.f32 %v1780, %v2479
      %v2510 = vadd.f32 %v1785, %v2484
      %vm2535 = vcmask 1046528
      %v2536 = vrot.slane %v2273, 1
      %v2537 = vrot.slane %v2274, 1
      %v2538 = vsel %vm2535, %v2536, %v2537
      %v2539 = vrot.slane %v2275, 1
      %v2540 = vsel %vm2535, %v2537, %v2539
      %v2541 = vrot.slane %v2276, 1
      %v2542 = vrot.slane %v2277, 1
      %v2543 = vsel %vm2535, %v2541, %v2542
      %v2544 = vrot.slane %v2278, 1
      %v2545 = vsel %vm2535, %v2542, %v2544
      %v2546 = vrot.slane %v2279, 1
      %v2547 = vrot.slane %v2280, 1
      %v2548 = vsel %vm2535, %v2546, %v2547
      %v2549 = vrot.slane %v2281, 1
      %v2550 = vsel %vm2535, %v2547, %v2549
      %v2551 = vrot.slane %v2282, 1
      %v2552 = vrot.slane %v2283, 1
      %v2553 = vsel %vm2535, %v2551, %v2552
      %v2554 = vrot.slane %v2284, 1
      %v2555 = vsel %vm2535, %v2552, %v2554
      %v2556 = vrot.slane %v2285, 1
      %v2557 = vrot.slane %v2286, 1
      %v2558 = vsel %vm2535, %v2556, %v2557
      %v2559 = vrot.slane %v2287, 1
      %v2560 = vsel %vm2535, %v2557, %v2559
      %v2561 = vrot.slane %v2288, 1
      %v2562 = vrot.slane %v2289, 1
      %v2563 = vsel %vm2535, %v2561, %v2562
      %v2564 = vrot.slane %v2290, 1
      %v2565 = vsel %vm2535, %v2562, %v2564
      %v2566 = vrot.slane %v2291, 1
      %v2567 = vrot.slane %v2292, 1
      %v2568 = vsel %vm2535, %v2566, %v2567
      %v2569 = vrot.slane %v2293, 1
      %v2570 = vsel %vm2535, %v2567, %v2569
      %v2571 = vrot.slane %v2294, 1
      %v2572 = vrot.slane %v2295, 1
      %v2573 = vsel %vm2535, %v2571, %v2572
      %v2574 = vrot.slane %v2296, 1
      %v2575 = vsel %vm2535, %v2572, %v2574
      %v2592 = vadd.f32 %v2067, %v2538
      %v2593 = vadd.f32 %v2068, %v2540
      %v2594 = vadd.f32 %v2069, %v2543
      %v2595 = vadd.f32 %v2070, %v2545
      %v2596 = vadd.f32 %v2071, %v2548
      %v2597 = vadd.f32 %v2072, %v2550
      %v2598 = vadd.f32 %v2073, %v2553
      %v2599 = vadd.f32 %v2074, %v2555
      %v2600 = vadd.f32 %v2075, %v2558
      %v2601 = vadd.f32 %v2076, %v2560
      %v2602 = vadd.f32 %v2077, %v2563
      %v2603 = vadd.f32 %v2078, %v2565
      %v2604 = vadd.f32 %v2079, %v2568
      %v2605 = vadd.f32 %v2080, %v2570
      %v2606 = vadd.f32 %v2081, %v2573
      %v2607 = vadd.f32 %v2082, %v2575
      %vm2632 = vcmask 1045504
      %v2633 = vrot.slane %v2487, 2
      %v2634 = vrot.slane %v2488, 2
      %v2635 = vsel %vm2632, %v2633, %v2634
      %v2636 = vrot.slane %v2489, 2
      %v2637 = vsel %vm2632, %v2634, %v2636
      %v2638 = vrot.slane %v2490, 2
      %v2639 = vrot.slane %v2491, 2
      %v2640 = vsel %vm2632, %v2638, %v2639
      %v2641 = vrot.slane %v2492, 2
      %v2642 = vsel %vm2632, %v2639, %v2641
      %v2643 = vrot.slane %v2493, 2
      %v2644 = vrot.slane %v2494, 2
      %v2645 = vsel %vm2632, %v2643, %v2644
      %v2646 = vrot.slane %v2495, 2
      %v2647 = vsel %vm2632, %v2644, %v2646
      %v2648 = vrot.slane %v2496, 2
      %v2649 = vrot.slane %v2497, 2
      %v2650 = vsel %vm2632, %v2648, %v2649
      %v2651 = vrot.slane %v2498, 2
      %v2652 = vsel %vm2632, %v2649, %v2651
      %v2653 = vrot.slane %v2499, 2
      %v2654 = vrot.slane %v2500, 2
      %v2655 = vsel %vm2632, %v2653, %v2654
      %v2656 = vrot.slane %v2501, 2
      %v2657 = vsel %vm2632, %v2654, %v2656
      %v2658 = vrot.slane %v2502, 2
      %v2659 = vrot.slane %v2503, 2
      %v2660 = vsel %vm2632, %v2658, %v2659
      %v2661 = vrot.slane %v2504, 2
      %v2662 = vsel %vm2632, %v2659, %v2661
      %v2663 = vrot.slane %v2505, 2
      %v2664 = vrot.slane %v2506, 2
      %v2665 = vsel %vm2632, %v2663, %v2664
      %v2666 = vrot.slane %v2507, 2
      %v2667 = vsel %vm2632, %v2664, %v2666
      %v2668 = vrot.slane %v2508, 2
      %v2669 = vrot.slane %v2509, 2
      %v2670 = vsel %vm2632, %v2668, %v2669
      %v2671 = vrot.slane %v2510, 2
      %v2672 = vsel %vm2632, %v2669, %v2671
      %v2689 = vadd.f32 %v2592, %v2635
      %v2690 = vadd.f32 %v2593, %v2637
      %v2691 = vadd.f32 %v2594, %v2640
      %v2692 = vadd.f32 %v2595, %v2642
      %v2693 = vadd.f32 %v2596, %v2645
      %v2694 = vadd.f32 %v2597, %v2647
      %v2695 = vadd.f32 %v2598, %v2650
      %v2696 = vadd.f32 %v2599, %v2652
      %v2697 = vadd.f32 %v2600, %v2655
      %v2698 = vadd.f32 %v2601, %v2657
      %v2699 = vadd.f32 %v2602, %v2660
      %v2700 = vadd.f32 %v2603, %v2662
      %v2701 = vadd.f32 %v2604, %v2665
      %v2702 = vadd.f32 %v2605, %v2667
      %v2703 = vadd.f32 %v2606, %v2670
      %v2704 = vadd.f32 %v2607, %v2672
      %v2705 = vld [vmem:[%s4] sm:$0x1]
      %v2707 = vlaneseq
      %v2708 = vshrl.u32 %v2707, 7
      %v2709 = vsub.s32 0, %v2708
      %v2710 = vrot.slane %v2705, %v2709
      %v2712 = vadd.f32 %v2689, %v2710
      %v2713 = vadd.f32 %v2690, %v2710
      %v2714 = vadd.f32 %v2691, %v2710
      %v2715 = vadd.f32 %v2692, %v2710
      %v2716 = vadd.f32 %v2693, %v2710
      %v2717 = vadd.f32 %v2694, %v2710
      %v2718 = vadd.f32 %v2695, %v2710
      %v2719 = vadd.f32 %v2696, %v2710
      %v2720 = vadd.f32 %v2697, %v2710
      %v2721 = vadd.f32 %v2698, %v2710
      %v2722 = vadd.f32 %v2699, %v2710
      %v2723 = vadd.f32 %v2700, %v2710
      %v2724 = vadd.f32 %v2701, %v2710
      %v2725 = vadd.f32 %v2702, %v2710
      %v2726 = vadd.f32 %v2703, %v2710
      %v2727 = vadd.f32 %v2704, %v2710
      %vm2728 = vcmp.ge.f32.partialorder %v2712, 0.0
      %vm2729 = vcmp.ge.f32.partialorder %v2713, 0.0
      %vm2730 = vcmp.ge.f32.partialorder %v2714, 0.0
      %vm2731 = vcmp.ge.f32.partialorder %v2715, 0.0
      %vm2732 = vcmp.ge.f32.partialorder %v2716, 0.0
      %vm2733 = vcmp.ge.f32.partialorder %v2717, 0.0
      %vm2734 = vcmp.ge.f32.partialorder %v2718, 0.0
      %vm2735 = vcmp.ge.f32.partialorder %v2719, 0.0
      %vm2736 = vcmp.ge.f32.partialorder %v2720, 0.0
      %vm2737 = vcmp.ge.f32.partialorder %v2721, 0.0
      %vm2738 = vcmp.ge.f32.partialorder %v2722, 0.0
      %vm2739 = vcmp.ge.f32.partialorder %v2723, 0.0
      %vm2740 = vcmp.ge.f32.partialorder %v2724, 0.0
      %vm2741 = vcmp.ge.f32.partialorder %v2725, 0.0
      %vm2742 = vcmp.ge.f32.partialorder %v2726, 0.0
      %vm2743 = vcmp.ge.f32.partialorder %v2727, 0.0
      %v2744 = vmul.f32 %v2712, 0.2
      %v2745 = vmul.f32 %v2713, 0.2
      %v2746 = vmul.f32 %v2714, 0.2
      %v2747 = vmul.f32 %v2715, 0.2
      %v2748 = vmul.f32 %v2716, 0.2
      %v2749 = vmul.f32 %v2717, 0.2
      %v2750 = vmul.f32 %v2718, 0.2
      %v2751 = vmul.f32 %v2719, 0.2
      %v2752 = vmul.f32 %v2720, 0.2
      %v2753 = vmul.f32 %v2721, 0.2
      %v2754 = vmul.f32 %v2722, 0.2
      %v2755 = vmul.f32 %v2723, 0.2
      %v2756 = vmul.f32 %v2724, 0.2
      %v2757 = vmul.f32 %v2725, 0.2
      %v2758 = vmul.f32 %v2726, 0.2
      %v2759 = vmul.f32 %v2727, 0.2
      %v2760 = vsel %vm2728, %v2712, %v2744
      %v2761 = vsel %vm2729, %v2713, %v2745
      %v2762 = vsel %vm2730, %v2714, %v2746
      %v2763 = vsel %vm2731, %v2715, %v2747
      %v2764 = vsel %vm2732, %v2716, %v2748
      %v2765 = vsel %vm2733, %v2717, %v2749
      %v2766 = vsel %vm2734, %v2718, %v2750
      %v2767 = vsel %vm2735, %v2719, %v2751
      %v2768 = vsel %vm2736, %v2720, %v2752
      %v2769 = vsel %vm2737, %v2721, %v2753
      %v2770 = vsel %vm2738, %v2722, %v2754
      %v2771 = vsel %vm2739, %v2723, %v2755
      %v2772 = vsel %vm2740, %v2724, %v2756
      %v2773 = vsel %vm2741, %v2725, %v2757
      %v2774 = vsel %vm2742, %v2726, %v2758
      %v2775 = vsel %vm2743, %v2727, %v2759
      %v2776 = vmul.f32 %v2760, 1.4142135
      %v2777 = vmul.f32 %v2761, 1.4142135
      %v2778 = vmul.f32 %v2762, 1.4142135
      %v2779 = vmul.f32 %v2763, 1.4142135
      %v2780 = vmul.f32 %v2764, 1.4142135
      %v2781 = vmul.f32 %v2765, 1.4142135
      %v2782 = vmul.f32 %v2766, 1.4142135
      %v2783 = vmul.f32 %v2767, 1.4142135
      %v2784 = vmul.f32 %v2768, 1.4142135
      %v2785 = vmul.f32 %v2769, 1.4142135
      %v2786 = vmul.f32 %v2770, 1.4142135
      %v2787 = vmul.f32 %v2771, 1.4142135
      %v2788 = vmul.f32 %v2772, 1.4142135
      %v2789 = vmul.f32 %v2773, 1.4142135
      %v2790 = vmul.f32 %v2774, 1.4142135
      %v2791 = vmul.f32 %v2775, 1.4142135
      %vm2792 = vcmask 64512
      %2793 = vst.msk [vmem:[%s391] sm:$0xff] %vm2792, %v2776
      %2794 = vst.msk [vmem:[%s391 + $0x8] sm:$0xff] %vm2792, %v2777
      %2795 = vst.msk [vmem:[%s391 + $0x10] sm:$0xff] %vm2792, %v2778
      %2796 = vst.msk [vmem:[%s391 + $0x18] sm:$0xff] %vm2792, %v2779
      %2797 = vst.msk [vmem:[%s391 + $0x20] sm:$0xff] %vm2792, %v2780
      %2798 = vst.msk [vmem:[%s391 + $0x28] sm:$0xff] %vm2792, %v2781
      %2799 = vst.msk [vmem:[%s391 + $0x30] sm:$0xff] %vm2792, %v2782
      %2800 = vst.msk [vmem:[%s391 + $0x38] sm:$0xff] %vm2792, %v2783
      %2801 = vst.msk [vmem:[%s391 + $0x40] sm:$0xff] %vm2792, %v2784
      %2802 = vst.msk [vmem:[%s391 + $0x48] sm:$0xff] %vm2792, %v2785
      %2803 = vst.msk [vmem:[%s391 + $0x50] sm:$0xff] %vm2792, %v2786
      %2804 = vst.msk [vmem:[%s391 + $0x58] sm:$0xff] %vm2792, %v2787
      %2805 = vst.msk [vmem:[%s391 + $0x60] sm:$0xff] %vm2792, %v2788
      %2806 = vst.msk [vmem:[%s391 + $0x68] sm:$0xff] %vm2792, %v2789
      %2807 = vst.msk [vmem:[%s391 + $0x70] sm:$0xff] %vm2792, %v2790
      %2808 = vst.msk [vmem:[%s391 + $0x78] sm:$0xff] %vm2792, %v2791
      %s2809 = smul.u32 8, %s21
      %p2810 = scmp.lt.s32.totalorder %s20, 1
      %s2811 = scalar_select %p2810, %s20, 1
      %p2812 = scmp.lt.s32.totalorder %s2809, 15
      %s2813 = scalar_select %p2812, %s2809, 15
      %s2814 = smul.addr %s2813, 2
      %s2815 = smul.addr %s2811, 32
      %s2816 = sadd.s32 %s2814, %s2815
      %s2817 = smul.addr %s2816, 8
      %s2818 = scalar_lea.vmem %s5, %s2817
      // Predicated region
      $region49: #{tpu_custom_call.1} parent=39 // pred_check
        %p2819 = pneg %p190
      $region50: #{tpu_custom_call.1} parent=39 // pred_check_branch
        %2821 = sbr.rel (%p2819) target = $region52
      $region51: #{tpu_custom_call.1} parent=39 // pred_region
        %s2822 = smul.u32 8, %s21
      $region52: #{tpu_custom_call.1} parent=39 // pred_fallthru
        _
    $region40: #{tpu_custom_call.1} parent=5 // pred_fallthru
      _
    %p2823 = scmp.le.s32.totalorder 2, %s11
    // Predicated region
    $region53: #{tpu_custom_call.1} parent=5 // pred_check
      %p2824 = pneg %p2823
    $region54: #{tpu_custom_call.1} parent=5 // pred_check_branch
      %2826 = sbr.rel (%p2824) target = $region56
    $region55: #{tpu_custom_call.1} parent=5 // pred_region
      %s2827 = ssub.s32 %s11, 2
      // Predicated region
      $region57: #{tpu_custom_call.1} parent=55 // pred_check
        %p2828 = pneg %p196
      $region58: #{tpu_custom_call.1} parent=55 // pred_check_branch
        %2830 = sbr.rel (%p2828) target = $region60
      $region59: #{tpu_custom_call.1} parent=55 // pred_region
        %s2831 = smul.u32 8, %s23
        %p2832 = scmp.lt.s32.totalorder %s22, 1
        %s2833 = scalar_select %p2832, %s22, 1
        %p2834 = scmp.lt.s32.totalorder %s2831, 15
        %s2835 = scalar_select %p2834, %s2831, 15
        %s2836 = smul.addr %s2835, 2
        %s2837 = smul.addr %s2833, 32
        %s2838 = sadd.s32 %s2836, %s2837
        %s2839 = smul.addr %s2838, 8
        %s2840 = scalar_lea.vmem %s5, %s2839
      $region60: #{tpu_custom_call.1} parent=55 // pred_fallthru
        _
    $region56: #{tpu_custom_call.1} parent=5 // pred_fallthru
      _
  $region6: #{tpu_custom_call.1} parent=0 // loop_footer
    %s15 = sadd.s32 1, %s11
  $region7: #{tpu_custom_call.1} parent=0 // loop_footer_branch
    %10 = sbr.rel target = $region3
  $region8: #{tpu_custom_call.1} parent=0 // loop_exit
    _

</llo_original>
